<compile_context>
chip_gen: v7x
topology: tpu7x:2x2x1
jax: 0.10.0
libtpu: 0.0.40
codegen_flags: <defaults>
</compile_context>

<pallas_src>
import functools

import jax
import jax.numpy as jnp
from jax.experimental import pallas as pl
from jax.experimental.pallas import tpu as pltpu

LATENT_DIM = 20
IN_DIM = 28 * 28   # 784
HID_DIM = 400
MULV_PAD = 128     # lane-dense width for the packed [mu || log_var] output slab


def _round_up(x, m):
    return (x + m - 1) // m * m


def vae_kernel(x_ref, eps_ref,
               w1_ref, b1_ref,
               w2c_ref, b2c_ref,
               w3_ref, b3_ref,
               w4_ref, b4_ref,
               recon_ref, mulv_ref):
    # encode: h1 = relu(x @ W1 + b1)  (bf16 operands, f32 accumulate, f32 bias/relu)
    h1 = jnp.dot(x_ref[...], w1_ref[...],
                 preferred_element_type=jnp.float32) + b1_ref[...]
    h1 = jnp.maximum(h1, 0.0)                                   # (TB, 400) f32

    # fused latent heads (columns zero-padded to 128 lanes):
    #   mulv = h1 @ [W21 || W22 || 0] + [b21 || b22 || 0]
    mulv = jnp.dot(h1.astype(jnp.bfloat16), w2c_ref[...],
                   preferred_element_type=jnp.float32) + b2c_ref[...]   # (TB, 128)
    mu = mulv[:, :LATENT_DIM]
    log_var = mulv[:, LATENT_DIM:2 * LATENT_DIM]

    # reparameterize (f32): z = mu + eps * exp(0.5 * log_var)
    z = mu + eps_ref[...] * jnp.exp(0.5 * log_var)              # (TB, 20)

    # decode
    h3 = jnp.dot(z.astype(jnp.bfloat16), w3_ref[...],
                 preferred_element_type=jnp.float32) + b3_ref[...]
    h3 = jnp.maximum(h3, 0.0)                                   # (TB, 400)
    logits = jnp.dot(h3.astype(jnp.bfloat16), w4_ref[...],
                     preferred_element_type=jnp.float32) + b4_ref[...]  # (TB, 784)

    recon_ref[...] = jax.nn.sigmoid(logits)
    mulv_ref[...] = mulv


@functools.partial(jax.jit, static_argnames=("block_b",))
def vae_forward(x_img, eps, params, *, block_b=128):
    """x_img: (B, 1, 28, 28) f32 (NCHW, like PyTorch); eps: (B, latent) f32."""
    B = x_img.shape[0]
    x = x_img.reshape(B, IN_DIM)                                # x.view(-1, 784)

    TB = min(block_b, _round_up(B, 8))
    B_pad = _round_up(B, TB)
    if B_pad != B:
        x = jnp.pad(x, ((0, B_pad - B), (0, 0)))
        eps = jnp.pad(eps, ((0, B_pad - B), (0, 0)))

    # bf16 matmul operands (halves weight DMA, MXU-native on v6e/v7x).
    x_bf = x.astype(jnp.bfloat16)
    w1 = params["w1"].astype(jnp.bfloat16)
    w2c = jnp.concatenate([params["w21"], params["w22"]], axis=1)        # (400, 40)
    w2c = jnp.pad(w2c, ((0, 0), (0, MULV_PAD - 2 * LATENT_DIM))).astype(jnp.bfloat16)
    b2c = jnp.concatenate([params["b21"], params["b22"]], axis=1)        # f32 (1, 40)
    b2c = jnp.pad(b2c, ((0, 0), (0, MULV_PAD - 2 * LATENT_DIM)))
    w3 = params["w3"].astype(jnp.bfloat16)
    w4 = params["w4"].astype(jnp.bfloat16)

    grid = (B_pad // TB,)

    def batch_tiled(n):                       # activations: stream per batch tile
        return pl.BlockSpec((TB, n), lambda i: (i, 0))

    def resident(shape):                      # weights/biases: constant index_map
        return pl.BlockSpec(shape, lambda i: (0, 0))

    k_flops = (IN_DIM * HID_DIM + HID_DIM * 2 * LATENT_DIM
               + LATENT_DIM * HID_DIM + HID_DIM * IN_DIM)
    cost = pl.CostEstimate(
        flops=2 * B_pad * k_flops,
        transcendentals=B_pad * (LATENT_DIM + IN_DIM),          # exp + sigmoid
        bytes_accessed=(B_pad * IN_DIM * 2 + B_pad * LATENT_DIM * 4      # x, eps
                        + k_flops * 2                                     # bf16 weights
                        + (2 * HID_DIM + MULV_PAD + IN_DIM) * 4           # biases
                        + B_pad * IN_DIM * 4 + B_pad * MULV_PAD * 4))     # outputs

    recon, mulv = pl.pallas_call(
        vae_kernel,
        grid=grid,
        out_shape=(
            jax.ShapeDtypeStruct((B_pad, IN_DIM), jnp.float32),
            jax.ShapeDtypeStruct((B_pad, MULV_PAD), jnp.float32),
        ),
        in_specs=[
            batch_tiled(IN_DIM),                                  # x
            batch_tiled(LATENT_DIM),                              # eps
            resident((IN_DIM, HID_DIM)),  resident((1, HID_DIM)),          # fc1
            resident((HID_DIM, MULV_PAD)), resident((1, MULV_PAD)),        # fc21||fc22
            resident((LATENT_DIM, HID_DIM)), resident((1, HID_DIM)),       # fc3
            resident((HID_DIM, IN_DIM)),  resident((1, IN_DIM)),           # fc4
        ],
        out_specs=(
            pl.BlockSpec((TB, IN_DIM), lambda i: (i, 0)),
            pl.BlockSpec((TB, MULV_PAD), lambda i: (i, 0)),
        ),
        compiler_params=pltpu.CompilerParams(
            dimension_semantics=("parallel",)),
        cost_estimate=cost,
    )(x_bf, eps, w1, params["b1"], w2c, b2c, w3, params["b3"], w4, params["b4"])

    recon = recon[:B]
    mu = mulv[:B, :LATENT_DIM]
    log_var = mulv[:B, LATENT_DIM:2 * LATENT_DIM]
    return recon, mu, log_var


def init_params(key):
    """Deterministic init. Weights stored as (in, out) = PyTorch weight.T."""
    ks = jax.random.split(key, 10)

    def linear(kw, kb, fan_in, fan_out):
        bound = 1.0 / jnp.sqrt(fan_in)     # torch.nn.Linear default init
        w = jax.random.uniform(kw, (fan_in, fan_out), jnp.float32, -bound, bound)
        b = jax.random.uniform(kb, (1, fan_out), jnp.float32, -bound, bound)
        return w, b

    w1, b1 = linear(ks[0], ks[1], IN_DIM, HID_DIM)
    w21, b21 = linear(ks[2], ks[3], HID_DIM, LATENT_DIM)
    w22, b22 = linear(ks[4], ks[5], HID_DIM, LATENT_DIM)
    w3, b3 = linear(ks[6], ks[7], LATENT_DIM, HID_DIM)
    w4, b4 = linear(ks[8], ks[9], HID_DIM, IN_DIM)
    return dict(w1=w1, b1=b1, w21=w21, b21=b21, w22=w22, b22=b22,
                w3=w3, b3=b3, w4=w4, b4=b4)


def vae_ref(x_img, eps, params, matmul_dtype=jnp.float32):
    """Pure-JAX reference (optionally emulating bf16 matmul operands)."""
    B = x_img.shape[0]
    x = x_img.reshape(B, IN_DIM)

    def mm(a, w):
        return jnp.dot(a.astype(matmul_dtype), w.astype(matmul_dtype),
                       preferred_element_type=jnp.float32)

    h1 = jnp.maximum(mm(x, params["w1"]) + params["b1"], 0.0)
    mu = mm(h1, params["w21"]) + params["b21"]
    log_var = mm(h1, params["w22"]) + params["b22"]
    z = mu + eps * jnp.exp(0.5 * log_var)
    h3 = jnp.maximum(mm(z, params["w3"]) + params["b3"], 0.0)
    recon = jax.nn.sigmoid(mm(h3, params["w4"]) + params["b4"])
    return recon, mu, log_var


if __name__ == "__main__":
    key = jax.random.PRNGKey(0)
    k_param, k_x, k_eps = jax.random.split(key, 3)

    # Small batch, deliberately not a multiple of the batch tile so padding and
    # a multi-step grid are both exercised (B=40, TB=16 -> B_pad=48, grid=(3,)).
    B = 40
    params = init_params(k_param)
    x_img = jax.random.uniform(k_x, (B, 1, 28, 28), jnp.float32)   # MNIST-like NCHW
    eps = jax.random.normal(k_eps, (B, LATENT_DIM), jnp.float32)   # reparam noise

    recon, mu, log_var = jax.block_until_ready(
        vae_forward(x_img, eps, params, block_b=16))

    # Reference applying the same bf16 rounding to matmul operands (f32 accum).
    r_ref, mu_ref, lv_ref = vae_ref(x_img, eps, params, matmul_dtype=jnp.bfloat16)
    assert recon.shape == (B, IN_DIM)
    assert mu.shape == (B, LATENT_DIM) and log_var.shape == (B, LATENT_DIM)
    assert jnp.allclose(recon, r_ref, atol=5e-3, rtol=5e-3)
    assert jnp.allclose(mu, mu_ref, atol=5e-3, rtol=5e-3)
    assert jnp.allclose(log_var, lv_ref, atol=5e-3, rtol=5e-3)

    # Sanity vs pure-f32 math (bf16 operand rounding only, loose tolerance).
    r32, mu32, lv32 = vae_ref(x_img, eps, params, matmul_dtype=jnp.float32)
    assert jnp.max(jnp.abs(recon - r32)) < 0.05

    print("KERNEL_OK")
</pallas_src>

<mosaic_0001>
module attributes {stable_mosaic.version = 11 : i64} {
  func.func @vae_kernel(%arg0: i32, %arg1: memref<16x784xbf16, #tpu.memory_space<vmem>>, %arg2: memref<16x20xf32, #tpu.memory_space<vmem>>, %arg3: memref<784x400xbf16, #tpu.memory_space<vmem>>, %arg4: memref<1x400xf32, #tpu.memory_space<vmem>>, %arg5: memref<400x128xbf16, #tpu.memory_space<vmem>>, %arg6: memref<1x128xf32, #tpu.memory_space<vmem>>, %arg7: memref<20x400xbf16, #tpu.memory_space<vmem>>, %arg8: memref<1x400xf32, #tpu.memory_space<vmem>>, %arg9: memref<400x784xbf16, #tpu.memory_space<vmem>>, %arg10: memref<1x784xf32, #tpu.memory_space<vmem>>, %arg11: memref<16x784xf32, #tpu.memory_space<vmem>>, %arg12: memref<16x128xf32, #tpu.memory_space<vmem>>) attributes {dimension_semantics = [#tpu.dimension_semantics<parallel>], iteration_bounds = array<i64: 3>, scalar_prefetch = 0 : i64, scratch_operands = 0 : i64, tpu.core_type = #tpu.core_type<tc>, window_params = [{transform_indices = @transform_0, window_bounds = array<i64: 16, 784>}, {transform_indices = @transform_1, window_bounds = array<i64: 16, 20>}, {pipeline_mode = #tpu.pipeline_mode<synchronous>, transform_indices = @transform_2, window_bounds = array<i64: 784, 400>}, {pipeline_mode = #tpu.pipeline_mode<synchronous>, transform_indices = @transform_3, window_bounds = array<i64: 1, 400>}, {pipeline_mode = #tpu.pipeline_mode<synchronous>, transform_indices = @transform_4, window_bounds = array<i64: 400, 128>}, {pipeline_mode = #tpu.pipeline_mode<synchronous>, transform_indices = @transform_5, window_bounds = array<i64: 1, 128>}, {pipeline_mode = #tpu.pipeline_mode<synchronous>, transform_indices = @transform_6, window_bounds = array<i64: 20, 400>}, {pipeline_mode = #tpu.pipeline_mode<synchronous>, transform_indices = @transform_7, window_bounds = array<i64: 1, 400>}, {pipeline_mode = #tpu.pipeline_mode<synchronous>, transform_indices = @transform_8, window_bounds = array<i64: 400, 784>}, {pipeline_mode = #tpu.pipeline_mode<synchronous>, transform_indices = @transform_9, window_bounds = array<i64: 1, 784>}, {transform_indices = @transform_10, window_bounds = array<i64: 16, 784>}, {transform_indices = @transform_11, window_bounds = array<i64: 16, 128>}]} {
    %c0 = arith.constant 0 : index
    %c0_0 = arith.constant 0 : index
    %0 = vector.load %arg1[%c0, %c0_0] : memref<16x784xbf16, #tpu.memory_space<vmem>>, vector<16x784xbf16>
    %c0_1 = arith.constant 0 : index
    %c0_2 = arith.constant 0 : index
    %1 = vector.load %arg3[%c0_1, %c0_2] : memref<784x400xbf16, #tpu.memory_space<vmem>>, vector<784x400xbf16>
    %cst = arith.constant dense<0.000000e+00> : vector<16x400xf32>
    %2 = tpu.matmul %0, %1, %cst {dimension_numbers = #tpu.dot_dimension_numbers<[1], [0], [0], [1], [0, 0, 1, 1], [], []>} : vector<16x784xbf16>, vector<784x400xbf16>, vector<16x400xf32> -> vector<16x400xf32>
    %c0_3 = arith.constant 0 : index
    %c0_4 = arith.constant 0 : index
    %3 = vector.load %arg4[%c0_3, %c0_4] : memref<1x400xf32, #tpu.memory_space<vmem>>, vector<1x400xf32>
    %4 = vector.broadcast %3 : vector<1x400xf32> to vector<16x400xf32>
    %5 = arith.addf %2, %4 : vector<16x400xf32>
    %cst_5 = arith.constant 0.000000e+00 : f32
    %6 = vector.broadcast %cst_5 : f32 to vector<16x400xf32>
    %7 = arith.maximumf %5, %6 : vector<16x400xf32>
    %8 = arith.truncf %7 : vector<16x400xf32> to vector<16x400xbf16>
    %c0_6 = arith.constant 0 : index
    %c0_7 = arith.constant 0 : index
    %9 = vector.load %arg5[%c0_6, %c0_7] : memref<400x128xbf16, #tpu.memory_space<vmem>>, vector<400x128xbf16>
    %cst_8 = arith.constant dense<0.000000e+00> : vector<16x128xf32>
    %10 = tpu.matmul %8, %9, %cst_8 {dimension_numbers = #tpu.dot_dimension_numbers<[1], [0], [0], [1], [0, 0, 1, 1], [], []>} : vector<16x400xbf16>, vector<400x128xbf16>, vector<16x128xf32> -> vector<16x128xf32>
    %c0_9 = arith.constant 0 : index
    %c0_10 = arith.constant 0 : index
    %11 = vector.load %arg6[%c0_9, %c0_10] : memref<1x128xf32, #tpu.memory_space<vmem>>, vector<1x128xf32>
    %12 = vector.broadcast %11 : vector<1x128xf32> to vector<16x128xf32>
    %13 = arith.addf %10, %12 : vector<16x128xf32>
    %14 = vector.extract_strided_slice %13 {offsets = [0, 0], sizes = [16, 20], strides = [1, 1]} : vector<16x128xf32> to vector<16x20xf32>
    %15 = vector.extract_strided_slice %13 {offsets = [0, 20], sizes = [16, 20], strides = [1, 1]} : vector<16x128xf32> to vector<16x20xf32>
    %c0_11 = arith.constant 0 : index
    %c0_12 = arith.constant 0 : index
    %16 = vector.load %arg2[%c0_11, %c0_12] : memref<16x20xf32, #tpu.memory_space<vmem>>, vector<16x20xf32>
    %cst_13 = arith.constant 5.000000e-01 : f32
    %17 = vector.broadcast %cst_13 : f32 to vector<16x20xf32>
    %18 = arith.mulf %17, %15 : vector<16x20xf32>
    %19 = math.exp %18 : vector<16x20xf32>
    %20 = arith.mulf %16, %19 : vector<16x20xf32>
    %21 = arith.addf %14, %20 : vector<16x20xf32>
    %22 = arith.truncf %21 : vector<16x20xf32> to vector<16x20xbf16>
    %c0_14 = arith.constant 0 : index
    %c0_15 = arith.constant 0 : index
    %23 = vector.load %arg7[%c0_14, %c0_15] : memref<20x400xbf16, #tpu.memory_space<vmem>>, vector<20x400xbf16>
    %cst_16 = arith.constant dense<0.000000e+00> : vector<16x400xf32>
    %24 = tpu.matmul %22, %23, %cst_16 {dimension_numbers = #tpu.dot_dimension_numbers<[1], [0], [0], [1], [0, 0, 1, 1], [], []>} : vector<16x20xbf16>, vector<20x400xbf16>, vector<16x400xf32> -> vector<16x400xf32>
    %c0_17 = arith.constant 0 : index
    %c0_18 = arith.constant 0 : index
    %25 = vector.load %arg8[%c0_17, %c0_18] : memref<1x400xf32, #tpu.memory_space<vmem>>, vector<1x400xf32>
    %26 = vector.broadcast %25 : vector<1x400xf32> to vector<16x400xf32>
    %27 = arith.addf %24, %26 : vector<16x400xf32>
    %cst_19 = arith.constant 0.000000e+00 : f32
    %28 = vector.broadcast %cst_19 : f32 to vector<16x400xf32>
    %29 = arith.maximumf %27, %28 : vector<16x400xf32>
    %30 = arith.truncf %29 : vector<16x400xf32> to vector<16x400xbf16>
    %c0_20 = arith.constant 0 : index
    %c0_21 = arith.constant 0 : index
    %31 = vector.load %arg9[%c0_20, %c0_21] : memref<400x784xbf16, #tpu.memory_space<vmem>>, vector<400x784xbf16>
    %cst_22 = arith.constant dense<0.000000e+00> : vector<16x784xf32>
    %32 = tpu.matmul %30, %31, %cst_22 {dimension_numbers = #tpu.dot_dimension_numbers<[1], [0], [0], [1], [0, 0, 1, 1], [], []>} : vector<16x400xbf16>, vector<400x784xbf16>, vector<16x784xf32> -> vector<16x784xf32>
    %c0_23 = arith.constant 0 : index
    %c0_24 = arith.constant 0 : index
    %33 = vector.load %arg10[%c0_23, %c0_24] : memref<1x784xf32, #tpu.memory_space<vmem>>, vector<1x784xf32>
    %34 = vector.broadcast %33 : vector<1x784xf32> to vector<16x784xf32>
    %35 = arith.addf %32, %34 : vector<16x784xf32>
    %36 = arith.negf %35 : vector<16x784xf32>
    %37 = math.exp %36 : vector<16x784xf32>
    %cst_25 = arith.constant 1.000000e+00 : f32
    %38 = vector.broadcast %cst_25 : f32 to vector<16x784xf32>
    %39 = arith.addf %38, %37 : vector<16x784xf32>
    %40 = arith.divf %38, %39 : vector<16x784xf32>
    %c0_26 = arith.constant 0 : index
    %c0_27 = arith.constant 0 : index
    %41 = vector.load %arg11[%c0_26, %c0_27] : memref<16x784xf32, #tpu.memory_space<vmem>>, vector<16x784xf32>
    tpu.vector_store %arg11[%c0_26, %c0_27], %40 {strides = array<i32>} : memref<16x784xf32, #tpu.memory_space<vmem>>, vector<16x784xf32>,
    %c0_28 = arith.constant 0 : index
    %c0_29 = arith.constant 0 : index
    %42 = vector.load %arg12[%c0_28, %c0_29] : memref<16x128xf32, #tpu.memory_space<vmem>>, vector<16x128xf32>
    tpu.vector_store %arg12[%c0_28, %c0_29], %13 {strides = array<i32>} : memref<16x128xf32, #tpu.memory_space<vmem>>, vector<16x128xf32>,
    return
  }
  func.func @transform_0(%arg0: i32) -> (i32, i32) {
    %c0_i32 = arith.constant 0 : i32
    %c0_i32_0 = arith.constant 0 : i32
    return %arg0, %c0_i32 : i32, i32
  }
  func.func @transform_1(%arg0: i32) -> (i32, i32) {
    %c0_i32 = arith.constant 0 : i32
    %c0_i32_0 = arith.constant 0 : i32
    return %arg0, %c0_i32 : i32, i32
  }
  func.func @transform_2(%arg0: i32) -> (i32, i32) {
    %c0_i32 = arith.constant 0 : i32
    %c0_i32_0 = arith.constant 0 : i32
    %c0_i32_1 = arith.constant 0 : i32
    return %c0_i32, %c0_i32_0 : i32, i32
  }
  func.func @transform_3(%arg0: i32) -> (i32, i32) {
    %c0_i32 = arith.constant 0 : i32
    %c0_i32_0 = arith.constant 0 : i32
    %c0_i32_1 = arith.constant 0 : i32
    return %c0_i32, %c0_i32_0 : i32, i32
  }
  func.func @transform_4(%arg0: i32) -> (i32, i32) {
    %c0_i32 = arith.constant 0 : i32
    %c0_i32_0 = arith.constant 0 : i32
    %c0_i32_1 = arith.constant 0 : i32
    return %c0_i32, %c0_i32_0 : i32, i32
  }
  func.func @transform_5(%arg0: i32) -> (i32, i32) {
    %c0_i32 = arith.constant 0 : i32
    %c0_i32_0 = arith.constant 0 : i32
    %c0_i32_1 = arith.constant 0 : i32
    return %c0_i32, %c0_i32_0 : i32, i32
  }
  func.func @transform_6(%arg0: i32) -> (i32, i32) {
    %c0_i32 = arith.constant 0 : i32
    %c0_i32_0 = arith.constant 0 : i32
    %c0_i32_1 = arith.constant 0 : i32
    return %c0_i32, %c0_i32_0 : i32, i32
  }
  func.func @transform_7(%arg0: i32) -> (i32, i32) {
    %c0_i32 = arith.constant 0 : i32
    %c0_i32_0 = arith.constant 0 : i32
    %c0_i32_1 = arith.constant 0 : i32
    return %c0_i32, %c0_i32_0 : i32, i32
  }
  func.func @transform_8(%arg0: i32) -> (i32, i32) {
    %c0_i32 = arith.constant 0 : i32
    %c0_i32_0 = arith.constant 0 : i32
    %c0_i32_1 = arith.constant 0 : i32
    return %c0_i32, %c0_i32_0 : i32, i32
  }
  func.func @transform_9(%arg0: i32) -> (i32, i32) {
    %c0_i32 = arith.constant 0 : i32
    %c0_i32_0 = arith.constant 0 : i32
    %c0_i32_1 = arith.constant 0 : i32
    return %c0_i32, %c0_i32_0 : i32, i32
  }
  func.func @transform_10(%arg0: i32) -> (i32, i32) {
    %c0_i32 = arith.constant 0 : i32
    %c0_i32_0 = arith.constant 0 : i32
    return %arg0, %c0_i32 : i32, i32
  }
  func.func @transform_11(%arg0: i32) -> (i32, i32) {
    %c0_i32 = arith.constant 0 : i32
    %c0_i32_0 = arith.constant 0 : i32
    return %arg0, %c0_i32 : i32, i32
  }
}

</mosaic_0001>

<llo_original>
// kernel: vae_forward.1
$region0: #{vae_forward.1}
  #allocation0 [shape = 'u32[]', space=smem, size = 0x4, offset = 0x4, fixed_abs, tag = 'smem constant byte address 0x4 - core index']
  #allocation1 [shape = 'u32[144,128]{1,0:T(1,128)}', space=vmem, size = 0x12000, scoped, tag = 'internal scratch']
  %s0 = inlined_call_operand.vmem [shape: bf16[48,784], index: 0, kind: input, shape index: {}]
  %s1 = inlined_call_operand.vmem [shape: f32[48,20], index: 1, kind: input, shape index: {}]
  %s2 = inlined_call_operand.vmem [shape: bf16[784,400], index: 2, kind: input, shape index: {}]
  %s3 = inlined_call_operand.vmem [shape: f32[1,400], index: 3, kind: input, shape index: {}]
  %s4 = inlined_call_operand.vmem [shape: bf16[400,128], index: 4, kind: input, shape index: {}]
  %s5 = inlined_call_operand.vmem [shape: f32[1,128], index: 5, kind: input, shape index: {}]
  %s6 = inlined_call_operand.vmem [shape: bf16[20,400], index: 6, kind: input, shape index: {}]
  %s7 = inlined_call_operand.vmem [shape: f32[1,400], index: 7, kind: input, shape index: {}]
  %s8 = inlined_call_operand.vmem [shape: bf16[400,784], index: 8, kind: input, shape index: {}]
  %s9 = inlined_call_operand.vmem [shape: f32[1,784], index: 9, kind: input, shape index: {}]
  %s10 = inlined_call_operand.vmem [shape: f32[48,784], index: 10, kind: output, shape index: {0}]
  %s11 = inlined_call_operand.vmem [shape: f32[48,128], index: 11, kind: output, shape index: {1}]
  %12 = xla_tuple %s10, %s11
  %s13 = sld [smem:[#allocation0]]
  $region81: #{vae_forward.1} parent=0
    _
  %s15 = ssub.s32 1, %s13
  %s16 = scalar_select 0, %s15, %s13
  loop: start=0, step=1, limit=5
  $region2: #{vae_forward.1} parent=0 // loop_pre_header
    _
  $region3: #{vae_forward.1} parent=0 // loop_header
    %s18 = sphi 0, %s22
    %p19 = scmp.ge.s32.totalorder %s18, 5
    %s28 = sphi 0, %s30
    %s31 = sphi 0, %s28
    %s32 = sphi 0, %s31
    %s48 = sphi 0, %s32
    %s54 = sphi 0, %s56
    %s57 = sphi 0, %s54
    %s58 = sphi 0, %s57
    %s74 = sphi 0, %s58
    %s78 = sphi 0, %s78
    %s80 = sphi 0, %s78
    %s81 = sphi 0, %s80
    %s95 = sphi 0, %s81
    %s99 = sphi 0, %s99
    %s101 = sphi 0, %s99
    %s102 = sphi 0, %s101
    %s116 = sphi 0, %s102
    %s120 = sphi 0, %s120
    %s122 = sphi 0, %s120
    %s123 = sphi 0, %s122
    %s137 = sphi 0, %s123
    %s141 = sphi 0, %s141
    %s143 = sphi 0, %s141
    %s144 = sphi 0, %s143
    %s158 = sphi 0, %s144
    %s162 = sphi 0, %s162
    %s164 = sphi 0, %s162
    %s165 = sphi 0, %s164
    %s179 = sphi 0, %s165
    %s183 = sphi 0, %s183
    %s185 = sphi 0, %s183
    %s186 = sphi 0, %s185
    %s200 = sphi 0, %s186
    %s204 = sphi 0, %s204
    %s206 = sphi 0, %s204
    %s207 = sphi 0, %s206
    %s221 = sphi 0, %s207
    %s225 = sphi 0, %s225
    %s227 = sphi 0, %s225
    %s228 = sphi 0, %s227
    %s242 = sphi 0, %s228
    %s248 = sphi 0, %s250
    %s251 = sphi 0, %s248
    %s252 = sphi 0, %s251
    %s268 = sphi 0, %s252
    %s274 = sphi 0, %s276
    %s277 = sphi 0, %s274
    %s278 = sphi 0, %s277
    %s294 = sphi 0, %s278
  $region4: #{vae_forward.1} parent=0 // loop_header_branch
    %21 = sbr.rel (%p19) target = $region8
  $region5: #{vae_forward.1} parent=0 // loop_body
    %s23 = ssub.s32 %s18, 1
    %s24 = ssub.s32 %s18, 2
    %s25 = sadd.s32 %s18, 1
    %s26 = ssub.s32 %s18, %s25
    %p27 = scmp.eq.s32.totalorder %s26, 0
    %s29 = sadd.s32 %s28, 1
    %s30 = scalar_select %p27, %s28, %s29
    %p33 = pneg %p27
    %p34 = scmp.eq.s32.totalorder %s18, 2
    %p35 = por %p33, %p34
    %p36 = scmp.ne.s32.totalorder %s28, %s31
    %p37 = scmp.eq.s32.totalorder %s18, 0
    %p38 = por %p36, %p37
    %p39 = scmp.ne.s32.totalorder %s28, %s31
    %p40 = scmp.eq.s32.totalorder %s23, 2
    %p41 = por %p39, %p40
    %p42 = scmp.ne.s32.totalorder %s31, %s32
    %p43 = scmp.eq.s32.totalorder %s23, 0
    %p44 = por %p42, %p43
    %p45 = scmp.ne.s32.totalorder %s31, %s32
    %p46 = scmp.eq.s32.totalorder %s24, 2
    %p47 = por %p45, %p46
    %p49 = scmp.ne.s32.totalorder %s32, %s48
    %p50 = scmp.eq.s32.totalorder %s24, 0
    %p51 = por %p49, %p50
    %s52 = ssub.s32 %s18, %s25
    %p53 = scmp.eq.s32.totalorder %s52, 0
    %s55 = sadd.s32 %s54, 1
    %s56 = scalar_select %p53, %s54, %s55
    %p59 = pneg %p53
    %p60 = scmp.eq.s32.totalorder %s18, 2
    %p61 = por %p59, %p60
    %p62 = scmp.ne.s32.totalorder %s54, %s57
    %p63 = scmp.eq.s32.totalorder %s18, 0
    %p64 = por %p62, %p63
    %p65 = scmp.ne.s32.totalorder %s54, %s57
    %p66 = scmp.eq.s32.totalorder %s23, 2
    %p67 = por %p65, %p66
    %p68 = scmp.ne.s32.totalorder %s57, %s58
    %p69 = scmp.eq.s32.totalorder %s23, 0
    %p70 = por %p68, %p69
    %p71 = scmp.ne.s32.totalorder %s57, %s58
    %p72 = scmp.eq.s32.totalorder %s24, 2
    %p73 = por %p71, %p72
    %p75 = scmp.ne.s32.totalorder %s58, %s74
    %p76 = scmp.eq.s32.totalorder %s24, 0
    %p77 = por %p75, %p76
    %s79 = sadd.s32 %s78, 1
    %p82 = scmp.eq.s32.totalorder %s18, 2
    %p83 = scmp.ne.s32.totalorder %s78, %s80
    %p84 = scmp.eq.s32.totalorder %s18, 0
    %p85 = por %p83, %p84
    %p86 = scmp.ne.s32.totalorder %s78, %s80
    %p87 = scmp.eq.s32.totalorder %s23, 2
    %p88 = por %p86, %p87
    %p89 = scmp.ne.s32.totalorder %s80, %s81
    %p90 = scmp.eq.s32.totalorder %s23, 0
    %p91 = por %p89, %p90
    %p92 = scmp.ne.s32.totalorder %s80, %s81
    %p93 = scmp.eq.s32.totalorder %s24, 2
    %p94 = por %p92, %p93
    %p96 = scmp.ne.s32.totalorder %s81, %s95
    %p97 = scmp.eq.s32.totalorder %s24, 0
    %p98 = por %p96, %p97
    %s100 = sadd.s32 %s99, 1
    %p103 = scmp.eq.s32.totalorder %s18, 2
    %p104 = scmp.ne.s32.totalorder %s99, %s101
    %p105 = scmp.eq.s32.totalorder %s18, 0
    %p106 = por %p104, %p105
    %p107 = scmp.ne.s32.totalorder %s99, %s101
    %p108 = scmp.eq.s32.totalorder %s23, 2
    %p109 = por %p107, %p108
    %p110 = scmp.ne.s32.totalorder %s101, %s102
    %p111 = scmp.eq.s32.totalorder %s23, 0
    %p112 = por %p110, %p111
    %p113 = scmp.ne.s32.totalorder %s101, %s102
    %p114 = scmp.eq.s32.totalorder %s24, 2
    %p115 = por %p113, %p114
    %p117 = scmp.ne.s32.totalorder %s102, %s116
    %p118 = scmp.eq.s32.totalorder %s24, 0
    %p119 = por %p117, %p118
    %s121 = sadd.s32 %s120, 1
    %p124 = scmp.eq.s32.totalorder %s18, 2
    %p125 = scmp.ne.s32.totalorder %s120, %s122
    %p126 = scmp.eq.s32.totalorder %s18, 0
    %p127 = por %p125, %p126
    %p128 = scmp.ne.s32.totalorder %s120, %s122
    %p129 = scmp.eq.s32.totalorder %s23, 2
    %p130 = por %p128, %p129
    %p131 = scmp.ne.s32.totalorder %s122, %s123
    %p132 = scmp.eq.s32.totalorder %s23, 0
    %p133 = por %p131, %p132
    %p134 = scmp.ne.s32.totalorder %s122, %s123
    %p135 = scmp.eq.s32.totalorder %s24, 2
    %p136 = por %p134, %p135
    %p138 = scmp.ne.s32.totalorder %s123, %s137
    %p139 = scmp.eq.s32.totalorder %s24, 0
    %p140 = por %p138, %p139
    %s142 = sadd.s32 %s141, 1
    %p145 = scmp.eq.s32.totalorder %s18, 2
    %p146 = scmp.ne.s32.totalorder %s141, %s143
    %p147 = scmp.eq.s32.totalorder %s18, 0
    %p148 = por %p146, %p147
    %p149 = scmp.ne.s32.totalorder %s141, %s143
    %p150 = scmp.eq.s32.totalorder %s23, 2
    %p151 = por %p149, %p150
    %p152 = scmp.ne.s32.totalorder %s143, %s144
    %p153 = scmp.eq.s32.totalorder %s23, 0
    %p154 = por %p152, %p153
    %p155 = scmp.ne.s32.totalorder %s143, %s144
    %p156 = scmp.eq.s32.totalorder %s24, 2
    %p157 = por %p155, %p156
    %p159 = scmp.ne.s32.totalorder %s144, %s158
    %p160 = scmp.eq.s32.totalorder %s24, 0
    %p161 = por %p159, %p160
    %s163 = sadd.s32 %s162, 1
    %p166 = scmp.eq.s32.totalorder %s18, 2
    %p167 = scmp.ne.s32.totalorder %s162, %s164
    %p168 = scmp.eq.s32.totalorder %s18, 0
    %p169 = por %p167, %p168
    %p170 = scmp.ne.s32.totalorder %s162, %s164
    %p171 = scmp.eq.s32.totalorder %s23, 2
    %p172 = por %p170, %p171
    %p173 = scmp.ne.s32.totalorder %s164, %s165
    %p174 = scmp.eq.s32.totalorder %s23, 0
    %p175 = por %p173, %p174
    %p176 = scmp.ne.s32.totalorder %s164, %s165
    %p177 = scmp.eq.s32.totalorder %s24, 2
    %p178 = por %p176, %p177
    %p180 = scmp.ne.s32.totalorder %s165, %s179
    %p181 = scmp.eq.s32.totalorder %s24, 0
    %p182 = por %p180, %p181
    %s184 = sadd.s32 %s183, 1
    %p187 = scmp.eq.s32.totalorder %s18, 2
    %p188 = scmp.ne.s32.totalorder %s183, %s185
    %p189 = scmp.eq.s32.totalorder %s18, 0
    %p190 = por %p188, %p189
    %p191 = scmp.ne.s32.totalorder %s183, %s185
    %p192 = scmp.eq.s32.totalorder %s23, 2
    %p193 = por %p191, %p192
    %p194 = scmp.ne.s32.totalorder %s185, %s186
    %p195 = scmp.eq.s32.totalorder %s23, 0
    %p196 = por %p194, %p195
    %p197 = scmp.ne.s32.totalorder %s185, %s186
    %p198 = scmp.eq.s32.totalorder %s24, 2
    %p199 = por %p197, %p198
    %p201 = scmp.ne.s32.totalorder %s186, %s200
    %p202 = scmp.eq.s32.totalorder %s24, 0
    %p203 = por %p201, %p202
    %s205 = sadd.s32 %s204, 1
    %p208 = scmp.eq.s32.totalorder %s18, 2
    %p209 = scmp.ne.s32.totalorder %s204, %s206
    %p210 = scmp.eq.s32.totalorder %s18, 0
    %p211 = por %p209, %p210
    %p212 = scmp.ne.s32.totalorder %s204, %s206
    %p213 = scmp.eq.s32.totalorder %s23, 2
    %p214 = por %p212, %p213
    %p215 = scmp.ne.s32.totalorder %s206, %s207
    %p216 = scmp.eq.s32.totalorder %s23, 0
    %p217 = por %p215, %p216
    %p218 = scmp.ne.s32.totalorder %s206, %s207
    %p219 = scmp.eq.s32.totalorder %s24, 2
    %p220 = por %p218, %p219
    %p222 = scmp.ne.s32.totalorder %s207, %s221
    %p223 = scmp.eq.s32.totalorder %s24, 0
    %p224 = por %p222, %p223
    %s226 = sadd.s32 %s225, 1
    %p229 = scmp.eq.s32.totalorder %s18, 2
    %p230 = scmp.ne.s32.totalorder %s225, %s227
    %p231 = scmp.eq.s32.totalorder %s18, 0
    %p232 = por %p230, %p231
    %p233 = scmp.ne.s32.totalorder %s225, %s227
    %p234 = scmp.eq.s32.totalorder %s23, 2
    %p235 = por %p233, %p234
    %p236 = scmp.ne.s32.totalorder %s227, %s228
    %p237 = scmp.eq.s32.totalorder %s23, 0
    %p238 = por %p236, %p237
    %p239 = scmp.ne.s32.totalorder %s227, %s228
    %p240 = scmp.eq.s32.totalorder %s24, 2
    %p241 = por %p239, %p240
    %p243 = scmp.ne.s32.totalorder %s228, %s242
    %p244 = scmp.eq.s32.totalorder %s24, 0
    %p245 = por %p243, %p244
    %s246 = ssub.s32 %s18, %s25
    %p247 = scmp.eq.s32.totalorder %s246, 0
    %s249 = sadd.s32 %s248, 1
    %s250 = scalar_select %p247, %s248, %s249
    %p253 = pneg %p247
    %p254 = scmp.eq.s32.totalorder %s18, 2
    %p255 = por %p253, %p254
    %p256 = scmp.ne.s32.totalorder %s248, %s251
    %p257 = scmp.eq.s32.totalorder %s18, 0
    %p258 = por %p256, %p257
    %p259 = scmp.ne.s32.totalorder %s248, %s251
    %p260 = scmp.eq.s32.totalorder %s23, 2
    %p261 = por %p259, %p260
    %p262 = scmp.ne.s32.totalorder %s251, %s252
    %p263 = scmp.eq.s32.totalorder %s23, 0
    %p264 = por %p262, %p263
    %p265 = scmp.ne.s32.totalorder %s251, %s252
    %p266 = scmp.eq.s32.totalorder %s24, 2
    %p267 = por %p265, %p266
    %p269 = scmp.ne.s32.totalorder %s252, %s268
    %p270 = scmp.eq.s32.totalorder %s24, 0
    %p271 = por %p269, %p270
    %s272 = ssub.s32 %s18, %s25
    %p273 = scmp.eq.s32.totalorder %s272, 0
    %s275 = sadd.s32 %s274, 1
    %s276 = scalar_select %p273, %s274, %s275
    %p279 = pneg %p273
    %p280 = scmp.eq.s32.totalorder %s18, 2
    %p281 = por %p279, %p280
    %p282 = scmp.ne.s32.totalorder %s274, %s277
    %p283 = scmp.eq.s32.totalorder %s18, 0
    %p284 = por %p282, %p283
    %p285 = scmp.ne.s32.totalorder %s274, %s277
    %p286 = scmp.eq.s32.totalorder %s23, 2
    %p287 = por %p285, %p286
    %p288 = scmp.ne.s32.totalorder %s277, %s278
    %p289 = scmp.eq.s32.totalorder %s23, 0
    %p290 = por %p288, %p289
    %p291 = scmp.ne.s32.totalorder %s277, %s278
    %p292 = scmp.eq.s32.totalorder %s24, 2
    %p293 = por %p291, %p292
    %p295 = scmp.ne.s32.totalorder %s278, %s294
    %p296 = scmp.eq.s32.totalorder %s24, 0
    %p297 = por %p295, %p296
    %p298 = scmp.le.s32.totalorder 1, %s18
    %p299 = scmp.lt.s32.totalorder %s18, 4
    %p300 = pnand %p298, %p299
    %p301 = pneg %p300
    // Predicated region
    $region9: #{vae_forward.1} parent=5 // pred_check
      _
    $region10: #{vae_forward.1} parent=5 // pred_check_branch
      %303 = sbr.rel (%p300) target = $region12
    $region11: #{vae_forward.1} parent=5 // pred_region
      %s304 = ssub.s32 %s18, 1
      // Predicated region
      $region13: #{vae_forward.1} parent=11 // pred_check
        %p305 = pneg %p91
      $region14: #{vae_forward.1} parent=11 // pred_check_branch
        %307 = sbr.rel (%p305) target = $region16
      $region15: #{vae_forward.1} parent=11 // pred_region
        _
      $region16: #{vae_forward.1} parent=11 // pred_fallthru
        _
      // Predicated region
      $region17: #{vae_forward.1} parent=11 // pred_check
        %p308 = pneg %p112
      $region18: #{vae_forward.1} parent=11 // pred_check_branch
        %310 = sbr.rel (%p308) target = $region20
      $region19: #{vae_forward.1} parent=11 // pred_region
        _
      $region20: #{vae_forward.1} parent=11 // pred_fallthru
        _
      // Predicated region
      $region21: #{vae_forward.1} parent=11 // pred_check
        %p311 = pneg %p133
      $region22: #{vae_forward.1} parent=11 // pred_check_branch
        %313 = sbr.rel (%p311) target = $region24
      $region23: #{vae_forward.1} parent=11 // pred_region
        _
      $region24: #{vae_forward.1} parent=11 // pred_fallthru
        _
      // Predicated region
      $region25: #{vae_forward.1} parent=11 // pred_check
        %p314 = pneg %p154
      $region26: #{vae_forward.1} parent=11 // pred_check_branch
        %316 = sbr.rel (%p314) target = $region28
      $region27: #{vae_forward.1} parent=11 // pred_region
        _
      $region28: #{vae_forward.1} parent=11 // pred_fallthru
        _
      // Predicated region
      $region29: #{vae_forward.1} parent=11 // pred_check
        %p317 = pneg %p175
      $region30: #{vae_forward.1} parent=11 // pred_check_branch
        %319 = sbr.rel (%p317) target = $region32
      $region31: #{vae_forward.1} parent=11 // pred_region
        _
      $region32: #{vae_forward.1} parent=11 // pred_fallthru
        _
      // Predicated region
      $region33: #{vae_forward.1} parent=11 // pred_check
        %p320 = pneg %p196
      $region34: #{vae_forward.1} parent=11 // pred_check_branch
        %322 = sbr.rel (%p320) target = $region36
      $region35: #{vae_forward.1} parent=11 // pred_region
        _
      $region36: #{vae_forward.1} parent=11 // pred_fallthru
        _
      // Predicated region
      $region37: #{vae_forward.1} parent=11 // pred_check
        %p323 = pneg %p217
      $region38: #{vae_forward.1} parent=11 // pred_check_branch
        %325 = sbr.rel (%p323) target = $region40
      $region39: #{vae_forward.1} parent=11 // pred_region
        _
      $region40: #{vae_forward.1} parent=11 // pred_fallthru
        _
      // Predicated region
      $region41: #{vae_forward.1} parent=11 // pred_check
        %p326 = pneg %p238
      $region42: #{vae_forward.1} parent=11 // pred_check_branch
        %328 = sbr.rel (%p326) target = $region44
      $region43: #{vae_forward.1} parent=11 // pred_region
        _
      $region44: #{vae_forward.1} parent=11 // pred_fallthru
        _
    $region12: #{vae_forward.1} parent=5 // pred_fallthru
      _
    %p329 = scmp.lt.s32.totalorder %s18, 3
    // Predicated region
    $region45: #{vae_forward.1} parent=5 // pred_check
      %p330 = pneg %p329
    $region46: #{vae_forward.1} parent=5 // pred_check_branch
      %332 = sbr.rel (%p330) target = $region48
    $region47: #{vae_forward.1} parent=5 // pred_region
      // Predicated region
      $region49: #{vae_forward.1} parent=47 // pred_check
        %p333 = pneg %p38
      $region50: #{vae_forward.1} parent=47 // pred_check_branch
        %335 = sbr.rel (%p333) target = $region52
      $region51: #{vae_forward.1} parent=47 // pred_region
        %s336 = smul.u32 2, %s18
        %p337 = scmp.lt.s32.totalorder %s336, 5
        %s338 = scalar_select %p337, %s336, 5
        %s339 = smul.addr %s338, 7
        %s340 = smul.addr %s339, 4
        %s341 = scalar_lea.vmem %s0, %s340
        %s342 = smul.u32 2, %s18
      $region52: #{vae_forward.1} parent=47 // pred_fallthru
        _
      // Predicated region
      $region53: #{vae_forward.1} parent=47 // pred_check
        %p343 = pneg %p64
      $region54: #{vae_forward.1} parent=47 // pred_check_branch
        %345 = sbr.rel (%p343) target = $region56
      $region55: #{vae_forward.1} parent=47 // pred_region
        %s346 = smul.u32 2, %s18
        %p347 = scmp.lt.s32.totalorder %s346, 5
        %s348 = scalar_select %p347, %s346, 5
        %s349 = smul.addr %s348, 8
        %s350 = scalar_lea.vmem %s1, %s349
        %s351 = smul.u32 2, %s18
      $region56: #{vae_forward.1} parent=47 // pred_fallthru
        _
    $region48: #{vae_forward.1} parent=5 // pred_fallthru
      _
    %p352 = scmp.le.s32.totalorder 1, %s18
    %p353 = scmp.lt.s32.totalorder %s18, 4
    %p354 = pnand %p352, %p353
    %p355 = pneg %p354
    // Predicated region
    $region57: #{vae_forward.1} parent=5 // pred_check
      _
    $region58: #{vae_forward.1} parent=5 // pred_check_branch
      %357 = sbr.rel (%p354) target = $region60
    $region59: #{vae_forward.1} parent=5 // pred_region
      %s358 = ssub.s32 %s18, 1
      %s359 = smul.u32 2, %s23
      %p360 = scmp.lt.s32.totalorder %s359, 5
      %s361 = scalar_select %p360, %s359, 5
      %s362 = smul.addr %s361, 7
      %s363 = smul.addr %s362, 4
      %s364 = scalar_lea.vmem %s0, %s363
      %p365 = pneg %p44
      %p366 = pneg %p41
      %s367 = smul.u32 2, %s23
      %p368 = scmp.lt.s32.totalorder %s367, 5
      %s369 = scalar_select %p368, %s367, 5
      %s370 = smul.addr %s369, 8
      %s371 = scalar_lea.vmem %s1, %s370
      %p372 = pneg %p70
      %p373 = pneg %p67
      %p374 = pneg %p91
      %p375 = pneg %p88
      %p376 = pneg %p112
      %p377 = pneg %p109
      %p378 = pneg %p133
      %p379 = pneg %p130
      %p380 = pneg %p154
      %p381 = pneg %p151
      %p382 = pneg %p175
      %p383 = pneg %p172
      %p384 = pneg %p196
      %p385 = pneg %p193
      %p386 = pneg %p217
      %p387 = pneg %p214
      %p388 = pneg %p238
      %p389 = pneg %p235
      %p390 = pneg %p264
      %p391 = pneg %p261
      %s392 = smul.u32 2, %s23
      %p393 = scmp.lt.s32.totalorder %s392, 5
      %s394 = scalar_select %p393, %s392, 5
      %s395 = smul.addr %s394, 7
      %s396 = smul.addr %s395, 8
      %s397 = scalar_lea.vmem %s10, %s396
      %p398 = pneg %p290
      %p399 = pneg %p287
      %s400 = smul.u32 2, %s23
      %p401 = scmp.lt.s32.totalorder %s400, 5
      %s402 = scalar_select %p401, %s400, 5
      %s403 = smul.addr %s402, 8
      %s404 = scalar_lea.vmem %s11, %s403
      %s405 = smul.u32 2, %s23
      %p406 = scmp.lt.s32.totalorder %s405, 5
      %s407 = scalar_select %p406, %s405, 5
      %s408 = smul.addr %s407, 7
      %s409 = smul.addr %s408, 4
      %s410 = scalar_lea.vmem %s0, %s409
      %s411 = smul.u32 2, %s23
      %s412 = smul.u32 2, %s23
      %p413 = scmp.lt.s32.totalorder %s412, 5
      %s414 = scalar_select %p413, %s412, 5
      %s415 = smul.addr %s414, 8
      %s416 = scalar_lea.vmem %s1, %s415
      %s417 = smul.u32 2, %s23
      %s418 = smul.u32 2, %s23
      %p419 = scmp.lt.s32.totalorder %s418, 5
      %s420 = scalar_select %p419, %s418, 5
      %s421 = smul.addr %s420, 7
      %s422 = smul.addr %s421, 8
      %s423 = scalar_lea.vmem %s10, %s422
      %s424 = smul.u32 2, %s23
      %s425 = smul.u32 2, %s23
      %p426 = scmp.lt.s32.totalorder %s425, 5
      %s427 = scalar_select %p426, %s425, 5
      %s428 = smul.addr %s427, 8
      %s429 = scalar_lea.vmem %s11, %s428
      %s430 = smul.u32 2, %s23
      %v432 = vld [vmem:[%s410] sm:$0xff]
      %v433 = vld [vmem:[%s410 + $0x8] sm:$0xff]
      %v434 = vld [vmem:[%s410 + $0x10] sm:$0xff]
      %v435 = vld [vmem:[%s410 + $0x18] sm:$0xf]
      %v436 = vld [vmem:[%s410 + $0x1c] sm:$0xff]
      %v437 = vld [vmem:[%s410 + $0x24] sm:$0xff]
      %v438 = vld [vmem:[%s410 + $0x2c] sm:$0xff]
      %v439 = vld [vmem:[%s410 + $0x34] sm:$0xf]
      %v440 = vld [vmem:[%s2] sm:$0xff]
      %v441 = vld [vmem:[%s2 + $0x8] sm:$0xff]
      %v442 = vld [vmem:[%s2 + $0x10] sm:$0xff]
      %v443 = vld [vmem:[%s2 + $0x18] sm:$0xff]
      %v444 = vld [vmem:[%s2 + $0x20] sm:$0xff]
      %v445 = vld [vmem:[%s2 + $0x28] sm:$0xff]
      %v446 = vld [vmem:[%s2 + $0x30] sm:$0xff]
      %v447 = vld [vmem:[%s2 + $0x38] sm:$0xff]
      %v448 = vld [vmem:[%s2 + $0x40] sm:$0xff]
      %v449 = vld [vmem:[%s2 + $0x48] sm:$0xff]
      %v450 = vld [vmem:[%s2 + $0x50] sm:$0xff]
      %v451 = vld [vmem:[%s2 + $0x58] sm:$0xff]
      %v452 = vld [vmem:[%s2 + $0x60] sm:$0xff]
      %v453 = vld [vmem:[%s2 + $0x68] sm:$0xff]
      %v454 = vld [vmem:[%s2 + $0x70] sm:$0xff]
      %v455 = vld [vmem:[%s2 + $0x78] sm:$0xff]
      %v456 = vld [vmem:[%s2 + $0x80] sm:$0xff]
      %v457 = vld [vmem:[%s2 + $0x88] sm:$0xff]
      %v458 = vld [vmem:[%s2 + $0x90] sm:$0xff]
      %v459 = vld [vmem:[%s2 + $0x98] sm:$0xff]
      %v460 = vld [vmem:[%s2 + $0xa0] sm:$0xff]
      %v461 = vld [vmem:[%s2 + $0xa8] sm:$0xff]
      %v462 = vld [vmem:[%s2 + $0xb0] sm:$0xff]
      %v463 = vld [vmem:[%s2 + $0xb8] sm:$0xff]
      %v464 = vld [vmem:[%s2 + $0xc0] sm:$0xff]
      %v465 = vld [vmem:[%s2 + $0xc8] sm:$0xff]
      %v466 = vld [vmem:[%s2 + $0xd0] sm:$0xff]
      %v467 = vld [vmem:[%s2 + $0xd8] sm:$0xff]
      %v468 = vld [vmem:[%s2 + $0xe0] sm:$0xff]
      %v469 = vld [vmem:[%s2 + $0xe8] sm:$0xff]
      %v470 = vld [vmem:[%s2 + $0xf0] sm:$0xff]
      %v471 = vld [vmem:[%s2 + $0xf8] sm:$0xff]
      %v472 = vld [vmem:[%s2 + $0x100] sm:$0xff]
      %v473 = vld [vmem:[%s2 + $0x108] sm:$0xff]
      %v474 = vld [vmem:[%s2 + $0x110] sm:$0xff]
      %v475 = vld [vmem:[%s2 + $0x118] sm:$0xff]
      %v476 = vld [vmem:[%s2 + $0x120] sm:$0xff]
      %v477 = vld [vmem:[%s2 + $0x128] sm:$0xff]
      %v478 = vld [vmem:[%s2 + $0x130] sm:$0xff]
      %v479 = vld [vmem:[%s2 + $0x138] sm:$0xff]
      %v480 = vld [vmem:[%s2 + $0x140] sm:$0xff]
      %v481 = vld [vmem:[%s2 + $0x148] sm:$0xff]
      %v482 = vld [vmem:[%s2 + $0x150] sm:$0xff]
      %v483 = vld [vmem:[%s2 + $0x158] sm:$0xff]
      %v484 = vld [vmem:[%s2 + $0x160] sm:$0xff]
      %v485 = vld [vmem:[%s2 + $0x168] sm:$0xff]
      %v486 = vld [vmem:[%s2 + $0x170] sm:$0xff]
      %v487 = vld [vmem:[%s2 + $0x178] sm:$0xff]
      %v488 = vld [vmem:[%s2 + $0x180] sm:$0xff]
      %v489 = vld [vmem:[%s2 + $0x188] sm:$0xff]
      %v490 = vld [vmem:[%s2 + $0x190] sm:$0xff]
      %v491 = vld [vmem:[%s2 + $0x198] sm:$0xff]
      %v492 = vld [vmem:[%s2 + $0x1a0] sm:$0xff]
      %v493 = vld [vmem:[%s2 + $0x1a8] sm:$0xff]
      %v494 = vld [vmem:[%s2 + $0x1b0] sm:$0xff]
      %v495 = vld [vmem:[%s2 + $0x1b8] sm:$0xff]
      %v496 = vld [vmem:[%s2 + $0x1c0] sm:$0xff]
      %v497 = vld [vmem:[%s2 + $0x1c8] sm:$0xff]
      %v498 = vld [vmem:[%s2 + $0x1d0] sm:$0xff]
      %v499 = vld [vmem:[%s2 + $0x1d8] sm:$0xff]
      %v500 = vld [vmem:[%s2 + $0x1e0] sm:$0xff]
      %v501 = vld [vmem:[%s2 + $0x1e8] sm:$0xff]
      %v502 = vld [vmem:[%s2 + $0x1f0] sm:$0xff]
      %v503 = vld [vmem:[%s2 + $0x1f8] sm:$0xff]
      %v504 = vld [vmem:[%s2 + $0x200] sm:$0xff]
      %v505 = vld [vmem:[%s2 + $0x208] sm:$0xff]
      %v506 = vld [vmem:[%s2 + $0x210] sm:$0xff]
      %v507 = vld [vmem:[%s2 + $0x218] sm:$0xff]
      %v508 = vld [vmem:[%s2 + $0x220] sm:$0xff]
      %v509 = vld [vmem:[%s2 + $0x228] sm:$0xff]
      %v510 = vld [vmem:[%s2 + $0x230] sm:$0xff]
      %v511 = vld [vmem:[%s2 + $0x238] sm:$0xff]
      %v512 = vld [vmem:[%s2 + $0x240] sm:$0xff]
      %v513 = vld [vmem:[%s2 + $0x248] sm:$0xff]
      %v514 = vld [vmem:[%s2 + $0x250] sm:$0xff]
      %v515 = vld [vmem:[%s2 + $0x258] sm:$0xff]
      %v516 = vld [vmem:[%s2 + $0x260] sm:$0xff]
      %v517 = vld [vmem:[%s2 + $0x268] sm:$0xff]
      %v518 = vld [vmem:[%s2 + $0x270] sm:$0xff]
      %v519 = vld [vmem:[%s2 + $0x278] sm:$0xff]
      %v520 = vld [vmem:[%s2 + $0x280] sm:$0xff]
      %v521 = vld [vmem:[%s2 + $0x288] sm:$0xff]
      %v522 = vld [vmem:[%s2 + $0x290] sm:$0xff]
      %v523 = vld [vmem:[%s2 + $0x298] sm:$0xff]
      %v524 = vld [vmem:[%s2 + $0x2a0] sm:$0xff]
      %v525 = vld [vmem:[%s2 + $0x2a8] sm:$0xff]
      %v526 = vld [vmem:[%s2 + $0x2b0] sm:$0xff]
      %v527 = vld [vmem:[%s2 + $0x2b8] sm:$0xff]
      %v528 = vld [vmem:[%s2 + $0x2c0] sm:$0xff]
      %v529 = vld [vmem:[%s2 + $0x2c8] sm:$0xff]
      %v530 = vld [vmem:[%s2 + $0x2d0] sm:$0xff]
      %v531 = vld [vmem:[%s2 + $0x2d8] sm:$0xff]
      %v532 = vld [vmem:[%s2 + $0x2e0] sm:$0xff]
      %v533 = vld [vmem:[%s2 + $0x2e8] sm:$0xff]
      %v534 = vld [vmem:[%s2 + $0x2f0] sm:$0xff]
      %v535 = vld [vmem:[%s2 + $0x2f8] sm:$0xff]
      %v536 = vld [vmem:[%s2 + $0x300] sm:$0xff]
      %v537 = vld [vmem:[%s2 + $0x308] sm:$0xff]
      %v538 = vld [vmem:[%s2 + $0x310] sm:$0xff]
      %v539 = vld [vmem:[%s2 + $0x318] sm:$0xff]
      %v540 = vld [vmem:[%s2 + $0x320] sm:$0xff]
      %v541 = vld [vmem:[%s2 + $0x328] sm:$0xff]
      %v542 = vld [vmem:[%s2 + $0x330] sm:$0xff]
      %v543 = vld [vmem:[%s2 + $0x338] sm:$0xff]
      %v544 = vld [vmem:[%s2 + $0x340] sm:$0xff]
      %v545 = vld [vmem:[%s2 + $0x348] sm:$0xff]
      %v546 = vld [vmem:[%s2 + $0x350] sm:$0xff]
      %v547 = vld [vmem:[%s2 + $0x358] sm:$0xff]
      %v548 = vld [vmem:[%s2 + $0x360] sm:$0xff]
      %v549 = vld [vmem:[%s2 + $0x368] sm:$0xff]
      %v550 = vld [vmem:[%s2 + $0x370] sm:$0xff]
      %v551 = vld [vmem:[%s2 + $0x378] sm:$0xff]
      %v552 = vld [vmem:[%s2 + $0x380] sm:$0xff]
      %v553 = vld [vmem:[%s2 + $0x388] sm:$0xff]
      %v554 = vld [vmem:[%s2 + $0x390] sm:$0xff]
      %v555 = vld [vmem:[%s2 + $0x398] sm:$0xff]
      %v556 = vld [vmem:[%s2 + $0x3a0] sm:$0xff]
      %v557 = vld [vmem:[%s2 + $0x3a8] sm:$0xff]
      %v558 = vld [vmem:[%s2 + $0x3b0] sm:$0xff]
      %v559 = vld [vmem:[%s2 + $0x3b8] sm:$0xff]
      %v560 = vld [vmem:[%s2 + $0x3c0] sm:$0xff]
      %v561 = vld [vmem:[%s2 + $0x3c8] sm:$0xff]
      %v562 = vld [vmem:[%s2 + $0x3d0] sm:$0xff]
      %v563 = vld [vmem:[%s2 + $0x3d8] sm:$0xff]
      %v564 = vld [vmem:[%s2 + $0x3e0] sm:$0xff]
      %v565 = vld [vmem:[%s2 + $0x3e8] sm:$0xff]
      %v566 = vld [vmem:[%s2 + $0x3f0] sm:$0xff]
      %v567 = vld [vmem:[%s2 + $0x3f8] sm:$0xff]
      %v568 = vld [vmem:[%s2 + $0x400] sm:$0xff]
      %v569 = vld [vmem:[%s2 + $0x408] sm:$0xff]
      %v570 = vld [vmem:[%s2 + $0x410] sm:$0xff]
      %v571 = vld [vmem:[%s2 + $0x418] sm:$0xff]
      %v572 = vld [vmem:[%s2 + $0x420] sm:$0xff]
      %v573 = vld [vmem:[%s2 + $0x428] sm:$0xff]
      %v574 = vld [vmem:[%s2 + $0x430] sm:$0xff]
      %v575 = vld [vmem:[%s2 + $0x438] sm:$0xff]
      %v576 = vld [vmem:[%s2 + $0x440] sm:$0xff]
      %v577 = vld [vmem:[%s2 + $0x448] sm:$0xff]
      %v578 = vld [vmem:[%s2 + $0x450] sm:$0xff]
      %v579 = vld [vmem:[%s2 + $0x458] sm:$0xff]
      %v580 = vld [vmem:[%s2 + $0x460] sm:$0xff]
      %v581 = vld [vmem:[%s2 + $0x468] sm:$0xff]
      %v582 = vld [vmem:[%s2 + $0x470] sm:$0xff]
      %v583 = vld [vmem:[%s2 + $0x478] sm:$0xff]
      %v584 = vld [vmem:[%s2 + $0x480] sm:$0xff]
      %v585 = vld [vmem:[%s2 + $0x488] sm:$0xff]
      %v586 = vld [vmem:[%s2 + $0x490] sm:$0xff]
      %v587 = vld [vmem:[%s2 + $0x498] sm:$0xff]
      %v588 = vld [vmem:[%s2 + $0x4a0] sm:$0xff]
      %v589 = vld [vmem:[%s2 + $0x4a8] sm:$0xff]
      %v590 = vld [vmem:[%s2 + $0x4b0] sm:$0xff]
      %v591 = vld [vmem:[%s2 + $0x4b8] sm:$0xff]
      %v592 = vld [vmem:[%s2 + $0x4c0] sm:$0xff]
      %v593 = vld [vmem:[%s2 + $0x4c8] sm:$0xff]
      %v594 = vld [vmem:[%s2 + $0x4d0] sm:$0xff]
      %v595 = vld [vmem:[%s2 + $0x4d8] sm:$0xff]
      %v596 = vld [vmem:[%s2 + $0x4e0] sm:$0xff]
      %v597 = vld [vmem:[%s2 + $0x4e8] sm:$0xff]
      %v598 = vld [vmem:[%s2 + $0x4f0] sm:$0xff]
      %v599 = vld [vmem:[%s2 + $0x4f8] sm:$0xff]
      %v600 = vld [vmem:[%s2 + $0x500] sm:$0xff]
      %v601 = vld [vmem:[%s2 + $0x508] sm:$0xff]
      %v602 = vld [vmem:[%s2 + $0x510] sm:$0xff]
      %v603 = vld [vmem:[%s2 + $0x518] sm:$0xff]
      %v604 = vld [vmem:[%s2 + $0x520] sm:$0xff]
      %v605 = vld [vmem:[%s2 + $0x528] sm:$0xff]
      %v606 = vld [vmem:[%s2 + $0x530] sm:$0xff]
      %v607 = vld [vmem:[%s2 + $0x538] sm:$0xff]
      %v608 = vld [vmem:[%s2 + $0x540] sm:$0xff]
      %v609 = vld [vmem:[%s2 + $0x548] sm:$0xff]
      %v610 = vld [vmem:[%s2 + $0x550] sm:$0xff]
      %v611 = vld [vmem:[%s2 + $0x558] sm:$0xff]
      %v612 = vld [vmem:[%s2 + $0x560] sm:$0xff]
      %v613 = vld [vmem:[%s2 + $0x568] sm:$0xff]
      %v614 = vld [vmem:[%s2 + $0x570] sm:$0xff]
      %v615 = vld [vmem:[%s2 + $0x578] sm:$0xff]
      %v616 = vld [vmem:[%s2 + $0x580] sm:$0xff]
      %v617 = vld [vmem:[%s2 + $0x588] sm:$0xff]
      %v618 = vld [vmem:[%s2 + $0x590] sm:$0xff]
      %v619 = vld [vmem:[%s2 + $0x598] sm:$0xff]
      %v620 = vld [vmem:[%s2 + $0x5a0] sm:$0xff]
      %v621 = vld [vmem:[%s2 + $0x5a8] sm:$0xff]
      %v622 = vld [vmem:[%s2 + $0x5b0] sm:$0xff]
      %v623 = vld [vmem:[%s2 + $0x5b8] sm:$0xff]
      %v624 = vld [vmem:[%s2 + $0x5c0] sm:$0xff]
      %v625 = vld [vmem:[%s2 + $0x5c8] sm:$0xff]
      %v626 = vld [vmem:[%s2 + $0x5d0] sm:$0xff]
      %v627 = vld [vmem:[%s2 + $0x5d8] sm:$0xff]
      %v628 = vld [vmem:[%s2 + $0x5e0] sm:$0xff]
      %v629 = vld [vmem:[%s2 + $0x5e8] sm:$0xff]
      %v630 = vld [vmem:[%s2 + $0x5f0] sm:$0xff]
      %v631 = vld [vmem:[%s2 + $0x5f8] sm:$0xff]
      %v632 = vld [vmem:[%s2 + $0x600] sm:$0xff]
      %v633 = vld [vmem:[%s2 + $0x608] sm:$0xff]
      %v634 = vld [vmem:[%s2 + $0x610] sm:$0xff]
      %v635 = vld [vmem:[%s2 + $0x618] sm:$0xff]
      %v636 = vld [vmem:[%s3] sm:$0xf]
      %v638 = vlaneseq
      %v639 = vshrl.u32 %v638, 7
      %v640 = vsub.s32 0, %v639
      %v641 = vrot.slane %v636, %v640
      %v642 = vlaneseq
      %v643 = vshrl.u32 %v642, 7
      %v644 = vsub.s32 1, %v643
      %v645 = vrot.slane %v636, %v644
      %v646 = vlaneseq
      %v647 = vshrl.u32 %v646, 7
      %v648 = vsub.s32 2, %v647
      %v649 = vrot.slane %v636, %v648
      %v650 = vlaneseq
      %v651 = vshrl.u32 %v650, 7
      %v652 = vsub.s32 3, %v651
      %v653 = vrot.slane %v636, %v652
      %v666 = vunpack.c.l.b16 %v432
      %v667 = vunpack.c.h.b16 %v432
      %v668 = vunpack.c.l.b16 %v433
      %v669 = vunpack.c.h.b16 %v433
      %v670 = vunpack.c.l.b16 %v434
      %v671 = vunpack.c.h.b16 %v434
      %v672 = vunpack.c.l.b16 %v435
      %v673 = vunpack.c.l.b16 %v436
      %v674 = vunpack.c.h.b16 %v436
      %v675 = vunpack.c.l.b16 %v437
      %v676 = vunpack.c.h.b16 %v437
      %v677 = vunpack.c.l.b16 %v438
      %v678 = vunpack.c.h.b16 %v438
      %v679 = vunpack.c.l.b16 %v439
      %v680 = vpack.c.b16 %v673, %v666
      %v681 = vpack.c.b16 %v674, %v667
      %v682 = vpack.c.b16 %v675, %v668
      %v683 = vpack.c.b16 %v676, %v669
      %v684 = vpack.c.b16 %v677, %v670
      %v685 = vpack.c.b16 %v678, %v671
      %v686 = vpack.c.b16 %v679, %v672
      %v889 = vunpack.c.l.b16 %v440
      %v890 = vunpack.c.h.b16 %v440
      %v891 = vunpack.c.l.b16 %v441
      %v892 = vunpack.c.h.b16 %v441
      %v893 = vunpack.c.l.b16 %v442
      %v894 = vunpack.c.h.b16 %v442
      %v895 = vunpack.c.l.b16 %v443
      %v896 = vunpack.c.h.b16 %v443
      %v897 = vunpack.c.l.b16 %v444
      %v898 = vunpack.c.h.b16 %v444
      %v899 = vunpack.c.l.b16 %v445
      %v900 = vunpack.c.h.b16 %v445
      %v901 = vunpack.c.l.b16 %v446
      %v902 = vunpack.c.h.b16 %v446
      %v903 = vunpack.c.l.b16 %v447
      %v904 = vunpack.c.h.b16 %v447
      %v905 = vunpack.c.l.b16 %v448
      %v906 = vunpack.c.h.b16 %v448
      %v907 = vunpack.c.l.b16 %v449
      %v908 = vunpack.c.h.b16 %v449
      %v909 = vunpack.c.l.b16 %v450
      %v910 = vunpack.c.h.b16 %v450
      %v911 = vunpack.c.l.b16 %v451
      %v912 = vunpack.c.h.b16 %v451
      %v913 = vunpack.c.l.b16 %v452
      %v914 = vunpack.c.h.b16 %v452
      %v915 = vunpack.c.l.b16 %v453
      %v916 = vunpack.c.h.b16 %v453
      %v917 = vunpack.c.l.b16 %v454
      %v918 = vunpack.c.h.b16 %v454
      %v919 = vunpack.c.l.b16 %v455
      %v920 = vunpack.c.h.b16 %v455
      %v921 = vunpack.c.l.b16 %v456
      %v922 = vunpack.c.h.b16 %v456
      %v923 = vunpack.c.l.b16 %v457
      %v924 = vunpack.c.h.b16 %v457
      %v925 = vunpack.c.l.b16 %v458
      %v926 = vunpack.c.h.b16 %v458
      %v927 = vunpack.c.l.b16 %v459
      %v928 = vunpack.c.h.b16 %v459
      %v929 = vunpack.c.l.b16 %v460
      %v930 = vunpack.c.h.b16 %v460
      %v931 = vunpack.c.l.b16 %v461
      %v932 = vunpack.c.h.b16 %v461
      %v933 = vunpack.c.l.b16 %v462
      %v934 = vunpack.c.h.b16 %v462
      %v935 = vunpack.c.l.b16 %v463
      %v936 = vunpack.c.h.b16 %v463
      %v937 = vunpack.c.l.b16 %v464
      %v938 = vunpack.c.h.b16 %v464
      %v939 = vunpack.c.l.b16 %v465
      %v940 = vunpack.c.h.b16 %v465
      %v941 = vunpack.c.l.b16 %v466
      %v942 = vunpack.c.h.b16 %v466
      %v943 = vunpack.c.l.b16 %v467
      %v944 = vunpack.c.h.b16 %v467
      %v945 = vunpack.c.l.b16 %v468
      %v946 = vunpack.c.h.b16 %v468
      %v947 = vunpack.c.l.b16 %v469
      %v948 = vunpack.c.h.b16 %v469
      %v949 = vunpack.c.l.b16 %v470
      %v950 = vunpack.c.h.b16 %v470
      %v951 = vunpack.c.l.b16 %v471
      %v952 = vunpack.c.h.b16 %v471
      %v953 = vunpack.c.l.b16 %v472
      %v954 = vunpack.c.h.b16 %v472
      %v955 = vunpack.c.l.b16 %v473
      %v956 = vunpack.c.h.b16 %v473
      %v957 = vunpack.c.l.b16 %v474
      %v958 = vunpack.c.h.b16 %v474
      %v959 = vunpack.c.l.b16 %v475
      %v960 = vunpack.c.h.b16 %v475
      %v961 = vunpack.c.l.b16 %v476
      %v962 = vunpack.c.h.b16 %v476
      %v963 = vunpack.c.l.b16 %v477
      %v964 = vunpack.c.h.b16 %v477
      %v965 = vunpack.c.l.b16 %v478
      %v966 = vunpack.c.h.b16 %v478
      %v967 = vunpack.c.l.b16 %v479
      %v968 = vunpack.c.h.b16 %v479
      %v969 = vunpack.c.l.b16 %v480
      %v970 = vunpack.c.h.b16 %v480
      %v971 = vunpack.c.l.b16 %v481
      %v972 = vunpack.c.h.b16 %v481
      %v973 = vunpack.c.l.b16 %v482
      %v974 = vunpack.c.h.b16 %v482
      %v975 = vunpack.c.l.b16 %v483
      %v976 = vunpack.c.h.b16 %v483
      %v977 = vunpack.c.l.b16 %v484
      %v978 = vunpack.c.h.b16 %v484
      %v979 = vunpack.c.l.b16 %v485
      %v980 = vunpack.c.h.b16 %v485
      %v981 = vunpack.c.l.b16 %v486
      %v982 = vunpack.c.h.b16 %v486
      %v983 = vunpack.c.l.b16 %v487
      %v984 = vunpack.c.h.b16 %v487
      %v985 = vunpack.c.l.b16 %v488
      %v986 = vunpack.c.h.b16 %v488
      %v987 = vunpack.c.l.b16 %v489
      %v988 = vunpack.c.h.b16 %v489
      %v989 = vunpack.c.l.b16 %v490
      %v990 = vunpack.c.h.b16 %v490
      %v991 = vunpack.c.l.b16 %v491
      %v992 = vunpack.c.h.b16 %v491
      %v993 = vunpack.c.l.b16 %v492
      %v994 = vunpack.c.h.b16 %v492
      %v995 = vunpack.c.l.b16 %v493
      %v996 = vunpack.c.h.b16 %v493
      %v997 = vunpack.c.l.b16 %v494
      %v998 = vunpack.c.h.b16 %v494
      %v999 = vunpack.c.l.b16 %v495
      %v1000 = vunpack.c.h.b16 %v495
      %v1001 = vunpack.c.l.b16 %v496
      %v1002 = vunpack.c.h.b16 %v496
      %v1003 = vunpack.c.l.b16 %v497
      %v1004 = vunpack.c.h.b16 %v497
      %v1005 = vunpack.c.l.b16 %v498
      %v1006 = vunpack.c.h.b16 %v498
      %v1007 = vunpack.c.l.b16 %v499
      %v1008 = vunpack.c.h.b16 %v499
      %v1009 = vunpack.c.l.b16 %v500
      %v1010 = vunpack.c.h.b16 %v500
      %v1011 = vunpack.c.l.b16 %v501
      %v1012 = vunpack.c.h.b16 %v501
      %v1013 = vunpack.c.l.b16 %v502
      %v1014 = vunpack.c.h.b16 %v502
      %v1015 = vunpack.c.l.b16 %v503
      %v1016 = vunpack.c.h.b16 %v503
      %v1017 = vunpack.c.l.b16 %v504
      %v1018 = vunpack.c.h.b16 %v504
      %v1019 = vunpack.c.l.b16 %v505
      %v1020 = vunpack.c.h.b16 %v505
      %v1021 = vunpack.c.l.b16 %v506
      %v1022 = vunpack.c.h.b16 %v506
      %v1023 = vunpack.c.l.b16 %v507
      %v1024 = vunpack.c.h.b16 %v507
      %v1025 = vunpack.c.l.b16 %v508
      %v1026 = vunpack.c.h.b16 %v508
      %v1027 = vunpack.c.l.b16 %v509
      %v1028 = vunpack.c.h.b16 %v509
      %v1029 = vunpack.c.l.b16 %v510
      %v1030 = vunpack.c.h.b16 %v510
      %v1031 = vunpack.c.l.b16 %v511
      %v1032 = vunpack.c.h.b16 %v511
      %v1033 = vunpack.c.l.b16 %v512
      %v1034 = vunpack.c.h.b16 %v512
      %v1035 = vunpack.c.l.b16 %v513
      %v1036 = vunpack.c.h.b16 %v513
      %v1037 = vunpack.c.l.b16 %v514
      %v1038 = vunpack.c.h.b16 %v514
      %v1039 = vunpack.c.l.b16 %v515
      %v1040 = vunpack.c.h.b16 %v515
      %v1041 = vunpack.c.l.b16 %v516
      %v1042 = vunpack.c.h.b16 %v516
      %v1043 = vunpack.c.l.b16 %v517
      %v1044 = vunpack.c.h.b16 %v517
      %v1045 = vunpack.c.l.b16 %v518
      %v1046 = vunpack.c.h.b16 %v518
      %v1047 = vunpack.c.l.b16 %v519
      %v1048 = vunpack.c.h.b16 %v519
      %v1049 = vunpack.c.l.b16 %v520
      %v1050 = vunpack.c.h.b16 %v520
      %v1051 = vunpack.c.l.b16 %v521
      %v1052 = vunpack.c.h.b16 %v521
      %v1053 = vunpack.c.l.b16 %v522
      %v1054 = vunpack.c.h.b16 %v522
      %v1055 = vunpack.c.l.b16 %v523
      %v1056 = vunpack.c.h.b16 %v523
      %v1057 = vunpack.c.l.b16 %v524
      %v1058 = vunpack.c.h.b16 %v524
      %v1059 = vunpack.c.l.b16 %v525
      %v1060 = vunpack.c.h.b16 %v525
      %v1061 = vunpack.c.l.b16 %v526
      %v1062 = vunpack.c.h.b16 %v526
      %v1063 = vunpack.c.l.b16 %v527
      %v1064 = vunpack.c.h.b16 %v527
      %v1065 = vunpack.c.l.b16 %v528
      %v1066 = vunpack.c.h.b16 %v528
      %v1067 = vunpack.c.l.b16 %v529
      %v1068 = vunpack.c.h.b16 %v529
      %v1069 = vunpack.c.l.b16 %v530
      %v1070 = vunpack.c.h.b16 %v530
      %v1071 = vunpack.c.l.b16 %v531
      %v1072 = vunpack.c.h.b16 %v531
      %v1073 = vunpack.c.l.b16 %v532
      %v1074 = vunpack.c.h.b16 %v532
      %v1075 = vunpack.c.l.b16 %v533
      %v1076 = vunpack.c.h.b16 %v533
      %v1077 = vunpack.c.l.b16 %v534
      %v1078 = vunpack.c.h.b16 %v534
      %v1079 = vunpack.c.l.b16 %v535
      %v1080 = vunpack.c.h.b16 %v535
      %v1081 = vunpack.c.l.b16 %v536
      %v1082 = vunpack.c.h.b16 %v536
      %v1083 = vunpack.c.l.b16 %v537
      %v1084 = vunpack.c.h.b16 %v537
      %v1085 = vunpack.c.l.b16 %v538
      %v1086 = vunpack.c.h.b16 %v538
      %v1087 = vunpack.c.l.b16 %v539
      %v1088 = vunpack.c.h.b16 %v539
      %v1089 = vunpack.c.l.b16 %v540
      %v1090 = vunpack.c.h.b16 %v540
      %v1091 = vunpack.c.l.b16 %v541
      %v1092 = vunpack.c.h.b16 %v541
      %v1093 = vunpack.c.l.b16 %v542
      %v1094 = vunpack.c.h.b16 %v542
      %v1095 = vunpack.c.l.b16 %v543
      %v1096 = vunpack.c.h.b16 %v543
      %v1097 = vunpack.c.l.b16 %v544
      %v1098 = vunpack.c.h.b16 %v544
      %v1099 = vunpack.c.l.b16 %v545
      %v1100 = vunpack.c.h.b16 %v545
      %v1101 = vunpack.c.l.b16 %v546
      %v1102 = vunpack.c.h.b16 %v546
      %v1103 = vunpack.c.l.b16 %v547
      %v1104 = vunpack.c.h.b16 %v547
      %v1105 = vunpack.c.l.b16 %v548
      %v1106 = vunpack.c.h.b16 %v548
      %v1107 = vunpack.c.l.b16 %v549
      %v1108 = vunpack.c.h.b16 %v549
      %v1109 = vunpack.c.l.b16 %v550
      %v1110 = vunpack.c.h.b16 %v550
      %v1111 = vunpack.c.l.b16 %v551
      %v1112 = vunpack.c.h.b16 %v551
      %v1113 = vunpack.c.l.b16 %v552
      %v1114 = vunpack.c.h.b16 %v552
      %v1115 = vunpack.c.l.b16 %v553
      %v1116 = vunpack.c.h.b16 %v553
      %v1117 = vunpack.c.l.b16 %v554
      %v1118 = vunpack.c.h.b16 %v554
      %v1119 = vunpack.c.l.b16 %v555
      %v1120 = vunpack.c.h.b16 %v555
      %v1121 = vunpack.c.l.b16 %v556
      %v1122 = vunpack.c.h.b16 %v556
      %v1123 = vunpack.c.l.b16 %v557
      %v1124 = vunpack.c.h.b16 %v557
      %v1125 = vunpack.c.l.b16 %v558
      %v1126 = vunpack.c.h.b16 %v558
      %v1127 = vunpack.c.l.b16 %v559
      %v1128 = vunpack.c.h.b16 %v559
      %v1129 = vunpack.c.l.b16 %v560
      %v1130 = vunpack.c.h.b16 %v560
      %v1131 = vunpack.c.l.b16 %v561
      %v1132 = vunpack.c.h.b16 %v561
      %v1133 = vunpack.c.l.b16 %v562
      %v1134 = vunpack.c.h.b16 %v562
      %v1135 = vunpack.c.l.b16 %v563
      %v1136 = vunpack.c.h.b16 %v563
      %v1137 = vunpack.c.l.b16 %v564
      %v1138 = vunpack.c.h.b16 %v564
      %v1139 = vunpack.c.l.b16 %v565
      %v1140 = vunpack.c.h.b16 %v565
      %v1141 = vunpack.c.l.b16 %v566
      %v1142 = vunpack.c.h.b16 %v566
      %v1143 = vunpack.c.l.b16 %v567
      %v1144 = vunpack.c.h.b16 %v567
      %v1145 = vunpack.c.l.b16 %v568
      %v1146 = vunpack.c.h.b16 %v568
      %v1147 = vunpack.c.l.b16 %v569
      %v1148 = vunpack.c.h.b16 %v569
      %v1149 = vunpack.c.l.b16 %v570
      %v1150 = vunpack.c.h.b16 %v570
      %v1151 = vunpack.c.l.b16 %v571
      %v1152 = vunpack.c.h.b16 %v571
      %v1153 = vunpack.c.l.b16 %v572
      %v1154 = vunpack.c.h.b16 %v572
      %v1155 = vunpack.c.l.b16 %v573
      %v1156 = vunpack.c.h.b16 %v573
      %v1157 = vunpack.c.l.b16 %v574
      %v1158 = vunpack.c.h.b16 %v574
      %v1159 = vunpack.c.l.b16 %v575
      %v1160 = vunpack.c.h.b16 %v575
      %v1161 = vunpack.c.l.b16 %v576
      %v1162 = vunpack.c.h.b16 %v576
      %v1163 = vunpack.c.l.b16 %v577
      %v1164 = vunpack.c.h.b16 %v577
      %v1165 = vunpack.c.l.b16 %v578
      %v1166 = vunpack.c.h.b16 %v578
      %v1167 = vunpack.c.l.b16 %v579
      %v1168 = vunpack.c.h.b16 %v579
      %v1169 = vunpack.c.l.b16 %v580
      %v1170 = vunpack.c.h.b16 %v580
      %v1171 = vunpack.c.l.b16 %v581
      %v1172 = vunpack.c.h.b16 %v581
      %v1173 = vunpack.c.l.b16 %v582
      %v1174 = vunpack.c.h.b16 %v582
      %v1175 = vunpack.c.l.b16 %v583
      %v1176 = vunpack.c.h.b16 %v583
      %v1177 = vunpack.c.l.b16 %v584
      %v1178 = vunpack.c.h.b16 %v584
      %v1179 = vunpack.c.l.b16 %v585
      %v1180 = vunpack.c.h.b16 %v585
      %v1181 = vunpack.c.l.b16 %v586
      %v1182 = vunpack.c.h.b16 %v586
      %v1183 = vunpack.c.l.b16 %v587
      %v1184 = vunpack.c.h.b16 %v587
      %v1185 = vunpack.c.l.b16 %v588
      %v1186 = vunpack.c.h.b16 %v588
      %v1187 = vunpack.c.l.b16 %v589
      %v1188 = vunpack.c.h.b16 %v589
      %v1189 = vunpack.c.l.b16 %v590
      %v1190 = vunpack.c.h.b16 %v590
      %v1191 = vunpack.c.l.b16 %v591
      %v1192 = vunpack.c.h.b16 %v591
      %v1193 = vunpack.c.l.b16 %v592
      %v1194 = vunpack.c.h.b16 %v592
      %v1195 = vunpack.c.l.b16 %v593
      %v1196 = vunpack.c.h.b16 %v593
      %v1197 = vunpack.c.l.b16 %v594
      %v1198 = vunpack.c.h.b16 %v594
      %v1199 = vunpack.c.l.b16 %v595
      %v1200 = vunpack.c.h.b16 %v595
      %v1201 = vunpack.c.l.b16 %v596
      %v1202 = vunpack.c.h.b16 %v596
      %v1203 = vunpack.c.l.b16 %v597
      %v1204 = vunpack.c.h.b16 %v597
      %v1205 = vunpack.c.l.b16 %v598
      %v1206 = vunpack.c.h.b16 %v598
      %v1207 = vunpack.c.l.b16 %v599
      %v1208 = vunpack.c.h.b16 %v599
      %v1209 = vunpack.c.l.b16 %v600
      %v1210 = vunpack.c.h.b16 %v600
      %v1211 = vunpack.c.l.b16 %v601
      %v1212 = vunpack.c.h.b16 %v601
      %v1213 = vunpack.c.l.b16 %v602
      %v1214 = vunpack.c.h.b16 %v602
      %v1215 = vunpack.c.l.b16 %v603
      %v1216 = vunpack.c.h.b16 %v603
      %v1217 = vunpack.c.l.b16 %v604
      %v1218 = vunpack.c.h.b16 %v604
      %v1219 = vunpack.c.l.b16 %v605
      %v1220 = vunpack.c.h.b16 %v605
      %v1221 = vunpack.c.l.b16 %v606
      %v1222 = vunpack.c.h.b16 %v606
      %v1223 = vunpack.c.l.b16 %v607
      %v1224 = vunpack.c.h.b16 %v607
      %v1225 = vunpack.c.l.b16 %v608
      %v1226 = vunpack.c.h.b16 %v608
      %v1227 = vunpack.c.l.b16 %v609
      %v1228 = vunpack.c.h.b16 %v609
      %v1229 = vunpack.c.l.b16 %v610
      %v1230 = vunpack.c.h.b16 %v610
      %v1231 = vunpack.c.l.b16 %v611
      %v1232 = vunpack.c.h.b16 %v611
      %v1233 = vunpack.c.l.b16 %v612
      %v1234 = vunpack.c.h.b16 %v612
      %v1235 = vunpack.c.l.b16 %v613
      %v1236 = vunpack.c.h.b16 %v613
      %v1237 = vunpack.c.l.b16 %v614
      %v1238 = vunpack.c.h.b16 %v614
      %v1239 = vunpack.c.l.b16 %v615
      %v1240 = vunpack.c.h.b16 %v615
      %v1241 = vunpack.c.l.b16 %v616
      %v1242 = vunpack.c.h.b16 %v616
      %v1243 = vunpack.c.l.b16 %v617
      %v1244 = vunpack.c.h.b16 %v617
      %v1245 = vunpack.c.l.b16 %v618
      %v1246 = vunpack.c.h.b16 %v618
      %v1247 = vunpack.c.l.b16 %v619
      %v1248 = vunpack.c.h.b16 %v619
      %v1249 = vunpack.c.l.b16 %v620
      %v1250 = vunpack.c.h.b16 %v620
      %v1251 = vunpack.c.l.b16 %v621
      %v1252 = vunpack.c.h.b16 %v621
      %v1253 = vunpack.c.l.b16 %v622
      %v1254 = vunpack.c.h.b16 %v622
      %v1255 = vunpack.c.l.b16 %v623
      %v1256 = vunpack.c.h.b16 %v623
      %v1257 = vunpack.c.l.b16 %v624
      %v1258 = vunpack.c.h.b16 %v624
      %v1259 = vunpack.c.l.b16 %v625
      %v1260 = vunpack.c.h.b16 %v625
      %v1261 = vunpack.c.l.b16 %v626
      %v1262 = vunpack.c.h.b16 %v626
      %v1263 = vunpack.c.l.b16 %v627
      %v1264 = vunpack.c.h.b16 %v627
      %v1265 = vunpack.c.l.b16 %v628
      %v1266 = vunpack.c.h.b16 %v628
      %v1267 = vunpack.c.l.b16 %v629
      %v1268 = vunpack.c.h.b16 %v629
      %v1269 = vunpack.c.l.b16 %v630
      %v1270 = vunpack.c.h.b16 %v630
      %v1271 = vunpack.c.l.b16 %v631
      %v1272 = vunpack.c.h.b16 %v631
      %v1273 = vunpack.c.l.b16 %v632
      %v1274 = vunpack.c.h.b16 %v632
      %v1275 = vunpack.c.l.b16 %v633
      %v1276 = vunpack.c.h.b16 %v633
      %v1277 = vunpack.c.l.b16 %v634
      %v1278 = vunpack.c.h.b16 %v634
      %v1279 = vunpack.c.l.b16 %v635
      %v1280 = vunpack.c.h.b16 %v635
      %v1281 = vpack.c.b16 %v893, %v889
      %v1282 = vpack.c.b16 %v894, %v890
      %v1283 = vpack.c.b16 %v895, %v891
      %v1284 = vpack.c.b16 %v896, %v892
      %v1285 = vpack.c.b16 %v901, %v897
      %v1286 = vpack.c.b16 %v902, %v898
      %v1287 = vpack.c.b16 %v903, %v899
      %v1288 = vpack.c.b16 %v904, %v900
      %v1289 = vpack.c.b16 %v909, %v905
      %v1290 = vpack.c.b16 %v910, %v906
      %v1291 = vpack.c.b16 %v911, %v907
      %v1292 = vpack.c.b16 %v912, %v908
      %v1293 = vpack.c.b16 %v917, %v913
      %v1294 = vpack.c.b16 %v918, %v914
      %v1295 = vpack.c.b16 %v919, %v915
      %v1296 = vpack.c.b16 %v920, %v916
      %v1297 = vpack.c.b16 %v925, %v921
      %v1298 = vpack.c.b16 %v926, %v922
      %v1299 = vpack.c.b16 %v927, %v923
      %v1300 = vpack.c.b16 %v928, %v924
      %v1301 = vpack.c.b16 %v933, %v929
      %v1302 = vpack.c.b16 %v934, %v930
      %v1303 = vpack.c.b16 %v935, %v931
      %v1304 = vpack.c.b16 %v936, %v932
      %v1305 = vpack.c.b16 %v941, %v937
      %v1306 = vpack.c.b16 %v942, %v938
      %v1307 = vpack.c.b16 %v943, %v939
      %v1308 = vpack.c.b16 %v944, %v940
      %v1309 = vpack.c.b16 %v949, %v945
      %v1310 = vpack.c.b16 %v950, %v946
      %v1311 = vpack.c.b16 %v951, %v947
      %v1312 = vpack.c.b16 %v952, %v948
      %v1313 = vpack.c.b16 %v957, %v953
      %v1314 = vpack.c.b16 %v958, %v954
      %v1315 = vpack.c.b16 %v959, %v955
      %v1316 = vpack.c.b16 %v960, %v956
      %v1317 = vpack.c.b16 %v965, %v961
      %v1318 = vpack.c.b16 %v966, %v962
      %v1319 = vpack.c.b16 %v967, %v963
      %v1320 = vpack.c.b16 %v968, %v964
      %v1321 = vpack.c.b16 %v973, %v969
      %v1322 = vpack.c.b16 %v974, %v970
      %v1323 = vpack.c.b16 %v975, %v971
      %v1324 = vpack.c.b16 %v976, %v972
      %v1325 = vpack.c.b16 %v981, %v977
      %v1326 = vpack.c.b16 %v982, %v978
      %v1327 = vpack.c.b16 %v983, %v979
      %v1328 = vpack.c.b16 %v984, %v980
      %v1329 = vpack.c.b16 %v989, %v985
      %v1330 = vpack.c.b16 %v990, %v986
      %v1331 = vpack.c.b16 %v991, %v987
      %v1332 = vpack.c.b16 %v992, %v988
      %v1333 = vpack.c.b16 %v997, %v993
      %v1334 = vpack.c.b16 %v998, %v994
      %v1335 = vpack.c.b16 %v999, %v995
      %v1336 = vpack.c.b16 %v1000, %v996
      %v1337 = vpack.c.b16 %v1005, %v1001
      %v1338 = vpack.c.b16 %v1006, %v1002
      %v1339 = vpack.c.b16 %v1007, %v1003
      %v1340 = vpack.c.b16 %v1008, %v1004
      %v1341 = vpack.c.b16 %v1013, %v1009
      %v1342 = vpack.c.b16 %v1014, %v1010
      %v1343 = vpack.c.b16 %v1015, %v1011
      %v1344 = vpack.c.b16 %v1016, %v1012
      %v1345 = vpack.c.b16 %v1021, %v1017
      %v1346 = vpack.c.b16 %v1022, %v1018
      %v1347 = vpack.c.b16 %v1023, %v1019
      %v1348 = vpack.c.b16 %v1024, %v1020
      %v1349 = vpack.c.b16 %v1029, %v1025
      %v1350 = vpack.c.b16 %v1030, %v1026
      %v1351 = vpack.c.b16 %v1031, %v1027
      %v1352 = vpack.c.b16 %v1032, %v1028
      %v1353 = vpack.c.b16 %v1037, %v1033
      %v1354 = vpack.c.b16 %v1038, %v1034
      %v1355 = vpack.c.b16 %v1039, %v1035
      %v1356 = vpack.c.b16 %v1040, %v1036
      %v1357 = vpack.c.b16 %v1045, %v1041
      %v1358 = vpack.c.b16 %v1046, %v1042
      %v1359 = vpack.c.b16 %v1047, %v1043
      %v1360 = vpack.c.b16 %v1048, %v1044
      %v1361 = vpack.c.b16 %v1053, %v1049
      %v1362 = vpack.c.b16 %v1054, %v1050
      %v1363 = vpack.c.b16 %v1055, %v1051
      %v1364 = vpack.c.b16 %v1056, %v1052
      %v1365 = vpack.c.b16 %v1061, %v1057
      %v1366 = vpack.c.b16 %v1062, %v1058
      %v1367 = vpack.c.b16 %v1063, %v1059
      %v1368 = vpack.c.b16 %v1064, %v1060
      %v1369 = vpack.c.b16 %v1069, %v1065
      %v1370 = vpack.c.b16 %v1070, %v1066
      %v1371 = vpack.c.b16 %v1071, %v1067
      %v1372 = vpack.c.b16 %v1072, %v1068
      %v1373 = vpack.c.b16 %v1077, %v1073
      %v1374 = vpack.c.b16 %v1078, %v1074
      %v1375 = vpack.c.b16 %v1079, %v1075
      %v1376 = vpack.c.b16 %v1080, %v1076
      %v1377 = vpack.c.b16 %v1085, %v1081
      %v1378 = vpack.c.b16 %v1086, %v1082
      %v1379 = vpack.c.b16 %v1087, %v1083
      %v1380 = vpack.c.b16 %v1088, %v1084
      %v1381 = vpack.c.b16 %v1093, %v1089
      %v1382 = vpack.c.b16 %v1094, %v1090
      %v1383 = vpack.c.b16 %v1095, %v1091
      %v1384 = vpack.c.b16 %v1096, %v1092
      %v1385 = vpack.c.b16 %v1101, %v1097
      %v1386 = vpack.c.b16 %v1102, %v1098
      %v1387 = vpack.c.b16 %v1103, %v1099
      %v1388 = vpack.c.b16 %v1104, %v1100
      %v1389 = vpack.c.b16 %v1109, %v1105
      %v1390 = vpack.c.b16 %v1110, %v1106
      %v1391 = vpack.c.b16 %v1111, %v1107
      %v1392 = vpack.c.b16 %v1112, %v1108
      %v1393 = vpack.c.b16 %v1117, %v1113
      %v1394 = vpack.c.b16 %v1118, %v1114
      %v1395 = vpack.c.b16 %v1119, %v1115
      %v1396 = vpack.c.b16 %v1120, %v1116
      %v1397 = vpack.c.b16 %v1125, %v1121
      %v1398 = vpack.c.b16 %v1126, %v1122
      %v1399 = vpack.c.b16 %v1127, %v1123
      %v1400 = vpack.c.b16 %v1128, %v1124
      %v1401 = vpack.c.b16 %v1133, %v1129
      %v1402 = vpack.c.b16 %v1134, %v1130
      %v1403 = vpack.c.b16 %v1135, %v1131
      %v1404 = vpack.c.b16 %v1136, %v1132
      %v1405 = vpack.c.b16 %v1141, %v1137
      %v1406 = vpack.c.b16 %v1142, %v1138
      %v1407 = vpack.c.b16 %v1143, %v1139
      %v1408 = vpack.c.b16 %v1144, %v1140
      %v1409 = vpack.c.b16 %v1149, %v1145
      %v1410 = vpack.c.b16 %v1150, %v1146
      %v1411 = vpack.c.b16 %v1151, %v1147
      %v1412 = vpack.c.b16 %v1152, %v1148
      %v1413 = vpack.c.b16 %v1157, %v1153
      %v1414 = vpack.c.b16 %v1158, %v1154
      %v1415 = vpack.c.b16 %v1159, %v1155
      %v1416 = vpack.c.b16 %v1160, %v1156
      %v1417 = vpack.c.b16 %v1165, %v1161
      %v1418 = vpack.c.b16 %v1166, %v1162
      %v1419 = vpack.c.b16 %v1167, %v1163
      %v1420 = vpack.c.b16 %v1168, %v1164
      %v1421 = vpack.c.b16 %v1173, %v1169
      %v1422 = vpack.c.b16 %v1174, %v1170
      %v1423 = vpack.c.b16 %v1175, %v1171
      %v1424 = vpack.c.b16 %v1176, %v1172
      %v1425 = vpack.c.b16 %v1181, %v1177
      %v1426 = vpack.c.b16 %v1182, %v1178
      %v1427 = vpack.c.b16 %v1183, %v1179
      %v1428 = vpack.c.b16 %v1184, %v1180
      %v1429 = vpack.c.b16 %v1189, %v1185
      %v1430 = vpack.c.b16 %v1190, %v1186
      %v1431 = vpack.c.b16 %v1191, %v1187
      %v1432 = vpack.c.b16 %v1192, %v1188
      %v1433 = vpack.c.b16 %v1197, %v1193
      %v1434 = vpack.c.b16 %v1198, %v1194
      %v1435 = vpack.c.b16 %v1199, %v1195
      %v1436 = vpack.c.b16 %v1200, %v1196
      %v1437 = vpack.c.b16 %v1205, %v1201
      %v1438 = vpack.c.b16 %v1206, %v1202
      %v1439 = vpack.c.b16 %v1207, %v1203
      %v1440 = vpack.c.b16 %v1208, %v1204
      %v1441 = vpack.c.b16 %v1213, %v1209
      %v1442 = vpack.c.b16 %v1214, %v1210
      %v1443 = vpack.c.b16 %v1215, %v1211
      %v1444 = vpack.c.b16 %v1216, %v1212
      %v1445 = vpack.c.b16 %v1221, %v1217
      %v1446 = vpack.c.b16 %v1222, %v1218
      %v1447 = vpack.c.b16 %v1223, %v1219
      %v1448 = vpack.c.b16 %v1224, %v1220
      %v1449 = vpack.c.b16 %v1229, %v1225
      %v1450 = vpack.c.b16 %v1230, %v1226
      %v1451 = vpack.c.b16 %v1231, %v1227
      %v1452 = vpack.c.b16 %v1232, %v1228
      %v1453 = vpack.c.b16 %v1237, %v1233
      %v1454 = vpack.c.b16 %v1238, %v1234
      %v1455 = vpack.c.b16 %v1239, %v1235
      %v1456 = vpack.c.b16 %v1240, %v1236
      %v1457 = vpack.c.b16 %v1245, %v1241
      %v1458 = vpack.c.b16 %v1246, %v1242
      %v1459 = vpack.c.b16 %v1247, %v1243
      %v1460 = vpack.c.b16 %v1248, %v1244
      %v1461 = vpack.c.b16 %v1253, %v1249
      %v1462 = vpack.c.b16 %v1254, %v1250
      %v1463 = vpack.c.b16 %v1255, %v1251
      %v1464 = vpack.c.b16 %v1256, %v1252
      %v1465 = vpack.c.b16 %v1261, %v1257
      %v1466 = vpack.c.b16 %v1262, %v1258
      %v1467 = vpack.c.b16 %v1263, %v1259
      %v1468 = vpack.c.b16 %v1264, %v1260
      %v1469 = vpack.c.b16 %v1269, %v1265
      %v1470 = vpack.c.b16 %v1270, %v1266
      %v1471 = vpack.c.b16 %v1271, %v1267
      %v1472 = vpack.c.b16 %v1272, %v1268
      %v1473 = vpack.c.b16 %v1277, %v1273
      %v1474 = vpack.c.b16 %v1278, %v1274
      %v1475 = vpack.c.b16 %v1279, %v1275
      %v1476 = vpack.c.b16 %v1280, %v1276
      %vm1673 = vcmask 130048
      %v1675 = vsel %vm1673, %v686, 0
      %1677 = vmatprep.subr.bf16.mxu0 %v1282
      %1678 = vmatpush1.bf16.msra.mxu0 %v1281
      %1679 = vmatprep.subr.bf16.mxu0 %v1286
      %1680 = vmatpush1.bf16.msra.mxu0 %v1285
      %1681 = vmatprep.subr.bf16.mxu0 %v1290
      %1682 = vmatpush1.bf16.msra.mxu0 %v1289
      %1683 = vmatprep.subr.bf16.mxu0 %v1294
      %1684 = vmatpush1.bf16.msra.mxu0 %v1293
      %1685 = vmatprep.subr.bf16.mxu0 %v1298
      %1686 = vmatpush1.bf16.msra.mxu0 %v1297
      %1687 = vmatprep.subr.bf16.mxu0 %v1302
      %1688 = vmatpush1.bf16.msra.mxu0 %v1301
      %1689 = vmatprep.subr.bf16.mxu0 %v1306
      %1690 = vmatpush1.bf16.msra.mxu0 %v1305
      %1691 = vmatprep.subr.bf16.mxu0 %v1310
      %1692 = vmatpush1.bf16.msra.mxu0 %v1309
      %1693 = vmatprep.subr.bf16.mxu0 %v1314
      %1694 = vmatpush1.bf16.msra.mxu0 %v1313
      %1695 = vmatprep.subr.bf16.mxu0 %v1318
      %1696 = vmatpush1.bf16.msra.mxu0 %v1317
      %1697 = vmatprep.subr.bf16.mxu0 %v1322
      %1698 = vmatpush1.bf16.msra.mxu0 %v1321
      %1699 = vmatprep.subr.bf16.mxu0 %v1326
      %1700 = vmatpush1.bf16.msra.mxu0 %v1325
      %1701 = vmatprep.subr.bf16.mxu0 %v1330
      %1702 = vmatpush1.bf16.msra.mxu0 %v1329
      %1703 = vmatprep.subr.bf16.mxu0 %v1334
      %1704 = vmatpush1.bf16.msra.mxu0 %v1333
      %1705 = vmatprep.subr.bf16.mxu0 %v1338
      %1706 = vmatpush1.bf16.msra.mxu0 %v1337
      %1707 = vmatprep.subr.bf16.mxu0 %v1342
      %1708 = vmatpush1.bf16.msra.mxu0 %v1341
      %1709 = vmatprep.mubr.bf16.mxu0 %v681
      %1710 = vmatmul.mubr.bf16.gmra.mrb[0].mxu0 %v680
      %v1711 = vpop.f32.mrb[0].mxu0
      %v1712 = vadd.f32 %v641, %v1711
      %v1713 = vpop.f32.mrb[0].mxu0
      %v1714 = vadd.f32 %v645, %v1713
      %v1715 = vpop.f32.mrb[0].mxu0
      %v1716 = vadd.f32 %v641, %v1715
      %v1717 = vpop.f32.mrb[0].mxu0
      %v1718 = vadd.f32 %v645, %v1717
      %1719 = vdwg.mxu0
      %1720 = vmatprep.subr.bf16.mxu0 %v1346
      %1721 = vmatpush1.bf16.msra.mxu0 %v1345
      %1722 = vmatprep.subr.bf16.mxu0 %v1350
      %1723 = vmatpush1.bf16.msra.mxu0 %v1349
      %1724 = vmatprep.subr.bf16.mxu0 %v1354
      %1725 = vmatpush1.bf16.msra.mxu0 %v1353
      %1726 = vmatprep.subr.bf16.mxu0 %v1358
      %1727 = vmatpush1.bf16.msra.mxu0 %v1357
      %1728 = vmatprep.subr.bf16.mxu0 %v1362
      %1729 = vmatpush1.bf16.msra.mxu0 %v1361
      %1730 = vmatprep.subr.bf16.mxu0 %v1366
      %1731 = vmatpush1.bf16.msra.mxu0 %v1365
      %1732 = vmatprep.subr.bf16.mxu0 %v1370
      %1733 = vmatpush1.bf16.msra.mxu0 %v1369
      %1734 = vmatprep.subr.bf16.mxu0 %v1374
      %1735 = vmatpush1.bf16.msra.mxu0 %v1373
      %1736 = vmatprep.subr.bf16.mxu0 %v1378
      %1737 = vmatpush1.bf16.msra.mxu0 %v1377
      %1738 = vmatprep.subr.bf16.mxu0 %v1382
      %1739 = vmatpush1.bf16.msra.mxu0 %v1381
      %1740 = vmatprep.subr.bf16.mxu0 %v1386
      %1741 = vmatpush1.bf16.msra.mxu0 %v1385
      %1742 = vmatprep.subr.bf16.mxu0 %v1390
      %1743 = vmatpush1.bf16.msra.mxu0 %v1389
      %1744 = vmatprep.subr.bf16.mxu0 %v1394
      %1745 = vmatpush1.bf16.msra.mxu0 %v1393
      %1746 = vmatprep.subr.bf16.mxu0 %v1398
      %1747 = vmatpush1.bf16.msra.mxu0 %v1397
      %1748 = vmatprep.subr.bf16.mxu0 %v1402
      %1749 = vmatpush1.bf16.msra.mxu0 %v1401
      %1750 = vmatprep.subr.bf16.mxu0 %v1406
      %1751 = vmatpush1.bf16.msra.mxu0 %v1405
      %1752 = vmatprep.mubr.bf16.mxu0 %v683
      %1753 = vmatmul.mubr.bf16.gmra.mrb[0].mxu0 %v682
      %v1754 = vpop.f32.mrb[0].mxu0
      %v1755 = vadd.f32 %v1712, %v1754
      %v1756 = vpop.f32.mrb[0].mxu0
      %v1757 = vadd.f32 %v1714, %v1756
      %v1758 = vpop.f32.mrb[0].mxu0
      %v1759 = vadd.f32 %v1716, %v1758
      %v1760 = vpop.f32.mrb[0].mxu0
      %v1761 = vadd.f32 %v1718, %v1760
      %1762 = vdwg.mxu0
      %1763 = vmatprep.subr.bf16.mxu0 %v1410
      %1764 = vmatpush1.bf16.msra.mxu0 %v1409
      %1765 = vmatprep.subr.bf16.mxu0 %v1414
      %1766 = vmatpush1.bf16.msra.mxu0 %v1413
      %1767 = vmatprep.subr.bf16.mxu0 %v1418
      %1768 = vmatpush1.bf16.msra.mxu0 %v1417
      %1769 = vmatprep.subr.bf16.mxu0 %v1422
      %1770 = vmatpush1.bf16.msra.mxu0 %v1421
      %1771 = vmatprep.subr.bf16.mxu0 %v1426
      %1772 = vmatpush1.bf16.msra.mxu0 %v1425
      %1773 = vmatprep.subr.bf16.mxu0 %v1430
      %1774 = vmatpush1.bf16.msra.mxu0 %v1429
      %1775 = vmatprep.subr.bf16.mxu0 %v1434
      %1776 = vmatpush1.bf16.msra.mxu0 %v1433
      %1777 = vmatprep.subr.bf16.mxu0 %v1438
      %1778 = vmatpush1.bf16.msra.mxu0 %v1437
      %1779 = vmatprep.subr.bf16.mxu0 %v1442
      %1780 = vmatpush1.bf16.msra.mxu0 %v1441
      %1781 = vmatprep.subr.bf16.mxu0 %v1446
      %1782 = vmatpush1.bf16.msra.mxu0 %v1445
      %1783 = vmatprep.subr.bf16.mxu0 %v1450
      %1784 = vmatpush1.bf16.msra.mxu0 %v1449
      %1785 = vmatprep.subr.bf16.mxu0 %v1454
      %1786 = vmatpush1.bf16.msra.mxu0 %v1453
      %1787 = vmatprep.subr.bf16.mxu0 %v1458
      %1788 = vmatpush1.bf16.msra.mxu0 %v1457
      %1789 = vmatprep.subr.bf16.mxu0 %v1462
      %1790 = vmatpush1.bf16.msra.mxu0 %v1461
      %1791 = vmatprep.subr.bf16.mxu0 %v1466
      %1792 = vmatpush1.bf16.msra.mxu0 %v1465
      %1793 = vmatprep.subr.bf16.mxu0 %v1470
      %1794 = vmatpush1.bf16.msra.mxu0 %v1469
      %1795 = vmatprep.mubr.bf16.mxu0 %v685
      %1796 = vmatmul.mubr.bf16.gmra.mrb[0].mxu0 %v684
      %v1797 = vpop.f32.mrb[0].mxu0
      %v1798 = vadd.f32 %v1755, %v1797
      %v1799 = vpop.f32.mrb[0].mxu0
      %v1800 = vadd.f32 %v1757, %v1799
      %v1801 = vpop.f32.mrb[0].mxu0
      %v1802 = vadd.f32 %v1759, %v1801
      %v1803 = vpop.f32.mrb[0].mxu0
      %v1804 = vadd.f32 %v1761, %v1803
      %1805 = vdwg.mxu0
      %1806 = vmatprep.subr.bf16.mxu0 %v1474
      %1807 = vmatpush1.bf16.msra.mxu0 %v1473
      %1808 = vmatprep.subr.bf16.mxu0 0
      %1809 = vmatpush1.bf16.msra.mxu0 0
      %1810 = vmatprep.subr.bf16.mxu0 0
      %1811 = vmatpush1.bf16.msra.mxu0 0
      %1812 = vmatprep.subr.bf16.mxu0 0
      %1813 = vmatpush1.bf16.msra.mxu0 0
      %1814 = vmatprep.subr.bf16.mxu0 0
      %1815 = vmatpush1.bf16.msra.mxu0 0
      %1816 = vmatprep.subr.bf16.mxu0 0
      %1817 = vmatpush1.bf16.msra.mxu0 0
      %1818 = vmatprep.subr.bf16.mxu0 0
      %1819 = vmatpush1.bf16.msra.mxu0 0
      %1820 = vmatprep.subr.bf16.mxu0 0
      %1821 = vmatpush1.bf16.msra.mxu0 0
      %1822 = vmatprep.subr.bf16.mxu0 0
      %1823 = vmatpush1.bf16.msra.mxu0 0
      %1824 = vmatprep.subr.bf16.mxu0 0
      %1825 = vmatpush1.bf16.msra.mxu0 0
      %1826 = vmatprep.subr.bf16.mxu0 0
      %1827 = vmatpush1.bf16.msra.mxu0 0
      %1828 = vmatprep.subr.bf16.mxu0 0
      %1829 = vmatpush1.bf16.msra.mxu0 0
      %1830 = vmatprep.subr.bf16.mxu0 0
      %1831 = vmatpush1.bf16.msra.mxu0 0
      %1832 = vmatprep.subr.bf16.mxu0 0
      %1833 = vmatpush1.bf16.msra.mxu0 0
      %1834 = vmatprep.subr.bf16.mxu0 0
      %1835 = vmatpush1.bf16.msra.mxu0 0
      %1836 = vmatprep.subr.bf16.mxu0 0
      %1837 = vmatpush1.bf16.msra.mxu0 0
      %1838 = vmatprep.mubr.bf16.mxu0 0
      %1839 = vmatmul.mubr.bf16.gmra.mrb[0].mxu0 %v1675
      %v1840 = vpop.f32.mrb[0].mxu0
      %v1841 = vadd.f32 %v1798, %v1840
      %v1842 = vpop.f32.mrb[0].mxu0
      %v1843 = vadd.f32 %v1800, %v1842
      %v1844 = vpop.f32.mrb[0].mxu0
      %v1845 = vadd.f32 %v1802, %v1844
      %v1846 = vpop.f32.mrb[0].mxu0
      %v1847 = vadd.f32 %v1804, %v1846
      %1848 = vdwg.mxu0
      %1849 = vmatprep.subr.bf16.mxu0 %v1284
      %1850 = vmatpush1.bf16.msra.mxu0 %v1283
      %1851 = vmatprep.subr.bf16.mxu0 %v1288
      %1852 = vmatpush1.bf16.msra.mxu0 %v1287
      %1853 = vmatprep.subr.bf16.mxu0 %v1292
      %1854 = vmatpush1.bf16.msra.mxu0 %v1291
      %1855 = vmatprep.subr.bf16.mxu0 %v1296
      %1856 = vmatpush1.bf16.msra.mxu0 %v1295
      %1857 = vmatprep.subr.bf16.mxu0 %v1300
      %1858 = vmatpush1.bf16.msra.mxu0 %v1299
      %1859 = vmatprep.subr.bf16.mxu0 %v1304
      %1860 = vmatpush1.bf16.msra.mxu0 %v1303
      %1861 = vmatprep.subr.bf16.mxu0 %v1308
      %1862 = vmatpush1.bf16.msra.mxu0 %v1307
      %1863 = vmatprep.subr.bf16.mxu0 %v1312
      %1864 = vmatpush1.bf16.msra.mxu0 %v1311
      %1865 = vmatprep.subr.bf16.mxu0 %v1316
      %1866 = vmatpush1.bf16.msra.mxu0 %v1315
      %1867 = vmatprep.subr.bf16.mxu0 %v1320
      %1868 = vmatpush1.bf16.msra.mxu0 %v1319
      %1869 = vmatprep.subr.bf16.mxu0 %v1324
      %1870 = vmatpush1.bf16.msra.mxu0 %v1323
      %1871 = vmatprep.subr.bf16.mxu0 %v1328
      %1872 = vmatpush1.bf16.msra.mxu0 %v1327
      %1873 = vmatprep.subr.bf16.mxu0 %v1332
      %1874 = vmatpush1.bf16.msra.mxu0 %v1331
      %1875 = vmatprep.subr.bf16.mxu0 %v1336
      %1876 = vmatpush1.bf16.msra.mxu0 %v1335
      %1877 = vmatprep.subr.bf16.mxu0 %v1340
      %1878 = vmatpush1.bf16.msra.mxu0 %v1339
      %1879 = vmatprep.subr.bf16.mxu0 %v1344
      %1880 = vmatpush1.bf16.msra.mxu0 %v1343
      %1881 = vmatprep.mubr.bf16.mxu0 %v681
      %1882 = vmatmul.mubr.bf16.gmra.mrb[0].mxu0 %v680
      %v1883 = vpop.f32.mrb[0].mxu0
      %v1884 = vadd.f32 %v649, %v1883
      %v1885 = vpop.f32.mrb[0].mxu0
      %v1886 = vadd.f32 %v653, %v1885
      %v1887 = vpop.f32.mrb[0].mxu0
      %v1888 = vadd.f32 %v649, %v1887
      %v1889 = vpop.f32.mrb[0].mxu0
      %v1890 = vadd.f32 %v653, %v1889
      %1891 = vdwg.mxu0
      %1892 = vmatprep.subr.bf16.mxu0 %v1348
      %1893 = vmatpush1.bf16.msra.mxu0 %v1347
      %1894 = vmatprep.subr.bf16.mxu0 %v1352
      %1895 = vmatpush1.bf16.msra.mxu0 %v1351
      %1896 = vmatprep.subr.bf16.mxu0 %v1356
      %1897 = vmatpush1.bf16.msra.mxu0 %v1355
      %1898 = vmatprep.subr.bf16.mxu0 %v1360
      %1899 = vmatpush1.bf16.msra.mxu0 %v1359
      %1900 = vmatprep.subr.bf16.mxu0 %v1364
      %1901 = vmatpush1.bf16.msra.mxu0 %v1363
      %1902 = vmatprep.subr.bf16.mxu0 %v1368
      %1903 = vmatpush1.bf16.msra.mxu0 %v1367
      %1904 = vmatprep.subr.bf16.mxu0 %v1372
      %1905 = vmatpush1.bf16.msra.mxu0 %v1371
      %1906 = vmatprep.subr.bf16.mxu0 %v1376
      %1907 = vmatpush1.bf16.msra.mxu0 %v1375
      %1908 = vmatprep.subr.bf16.mxu0 %v1380
      %1909 = vmatpush1.bf16.msra.mxu0 %v1379
      %1910 = vmatprep.subr.bf16.mxu0 %v1384
      %1911 = vmatpush1.bf16.msra.mxu0 %v1383
      %1912 = vmatprep.subr.bf16.mxu0 %v1388
      %1913 = vmatpush1.bf16.msra.mxu0 %v1387
      %1914 = vmatprep.subr.bf16.mxu0 %v1392
      %1915 = vmatpush1.bf16.msra.mxu0 %v1391
      %1916 = vmatprep.subr.bf16.mxu0 %v1396
      %1917 = vmatpush1.bf16.msra.mxu0 %v1395
      %1918 = vmatprep.subr.bf16.mxu0 %v1400
      %1919 = vmatpush1.bf16.msra.mxu0 %v1399
      %1920 = vmatprep.subr.bf16.mxu0 %v1404
      %1921 = vmatpush1.bf16.msra.mxu0 %v1403
      %1922 = vmatprep.subr.bf16.mxu0 %v1408
      %1923 = vmatpush1.bf16.msra.mxu0 %v1407
      %1924 = vmatprep.mubr.bf16.mxu0 %v683
      %1925 = vmatmul.mubr.bf16.gmra.mrb[0].mxu0 %v682
      %v1926 = vpop.f32.mrb[0].mxu0
      %v1927 = vadd.f32 %v1884, %v1926
      %v1928 = vpop.f32.mrb[0].mxu0
      %v1929 = vadd.f32 %v1886, %v1928
      %v1930 = vpop.f32.mrb[0].mxu0
      %v1931 = vadd.f32 %v1888, %v1930
      %v1932 = vpop.f32.mrb[0].mxu0
      %v1933 = vadd.f32 %v1890, %v1932
      %1934 = vdwg.mxu0
      %1935 = vmatprep.subr.bf16.mxu0 %v1412
      %1936 = vmatpush1.bf16.msra.mxu0 %v1411
      %1937 = vmatprep.subr.bf16.mxu0 %v1416
      %1938 = vmatpush1.bf16.msra.mxu0 %v1415
      %1939 = vmatprep.subr.bf16.mxu0 %v1420
      %1940 = vmatpush1.bf16.msra.mxu0 %v1419
      %1941 = vmatprep.subr.bf16.mxu0 %v1424
      %1942 = vmatpush1.bf16.msra.mxu0 %v1423
      %1943 = vmatprep.subr.bf16.mxu0 %v1428
      %1944 = vmatpush1.bf16.msra.mxu0 %v1427
      %1945 = vmatprep.subr.bf16.mxu0 %v1432
      %1946 = vmatpush1.bf16.msra.mxu0 %v1431
      %1947 = vmatprep.subr.bf16.mxu0 %v1436
      %1948 = vmatpush1.bf16.msra.mxu0 %v1435
      %1949 = vmatprep.subr.bf16.mxu0 %v1440
      %1950 = vmatpush1.bf16.msra.mxu0 %v1439
      %1951 = vmatprep.subr.bf16.mxu0 %v1444
      %1952 = vmatpush1.bf16.msra.mxu0 %v1443
      %1953 = vmatprep.subr.bf16.mxu0 %v1448
      %1954 = vmatpush1.bf16.msra.mxu0 %v1447
      %1955 = vmatprep.subr.bf16.mxu0 %v1452
      %1956 = vmatpush1.bf16.msra.mxu0 %v1451
      %1957 = vmatprep.subr.bf16.mxu0 %v1456
      %1958 = vmatpush1.bf16.msra.mxu0 %v1455
      %1959 = vmatprep.subr.bf16.mxu0 %v1460
      %1960 = vmatpush1.bf16.msra.mxu0 %v1459
      %1961 = vmatprep.subr.bf16.mxu0 %v1464
      %1962 = vmatpush1.bf16.msra.mxu0 %v1463
      %1963 = vmatprep.subr.bf16.mxu0 %v1468
      %1964 = vmatpush1.bf16.msra.mxu0 %v1467
      %1965 = vmatprep.subr.bf16.mxu0 %v1472
      %1966 = vmatpush1.bf16.msra.mxu0 %v1471
      %1967 = vmatprep.mubr.bf16.mxu0 %v685
      %1968 = vmatmul.mubr.bf16.gmra.mrb[0].mxu0 %v684
      %v1969 = vpop.f32.mrb[0].mxu0
      %v1970 = vadd.f32 %v1927, %v1969
      %v1971 = vpop.f32.mrb[0].mxu0
      %v1972 = vadd.f32 %v1929, %v1971
      %v1973 = vpop.f32.mrb[0].mxu0
      %v1974 = vadd.f32 %v1931, %v1973
      %v1975 = vpop.f32.mrb[0].mxu0
      %v1976 = vadd.f32 %v1933, %v1975
      %1977 = vdwg.mxu0
      %1978 = vmatprep.subr.bf16.mxu0 %v1476
      %1979 = vmatpush1.bf16.msra.mxu0 %v1475
      %1980 = vmatprep.subr.bf16.mxu0 0
      %1981 = vmatpush1.bf16.msra.mxu0 0
      %1982 = vmatprep.subr.bf16.mxu0 0
      %1983 = vmatpush1.bf16.msra.mxu0 0
      %1984 = vmatprep.subr.bf16.mxu0 0
      %1985 = vmatpush1.bf16.msra.mxu0 0
      %1986 = vmatprep.subr.bf16.mxu0 0
      %1987 = vmatpush1.bf16.msra.mxu0 0
      %1988 = vmatprep.subr.bf16.mxu0 0
      %1989 = vmatpush1.bf16.msra.mxu0 0
      %1990 = vmatprep.subr.bf16.mxu0 0
      %1991 = vmatpush1.bf16.msra.mxu0 0
      %1992 = vmatprep.subr.bf16.mxu0 0
      %1993 = vmatpush1.bf16.msra.mxu0 0
      %1994 = vmatprep.subr.bf16.mxu0 0
      %1995 = vmatpush1.bf16.msra.mxu0 0
      %1996 = vmatprep.subr.bf16.mxu0 0
      %1997 = vmatpush1.bf16.msra.mxu0 0
      %1998 = vmatprep.subr.bf16.mxu0 0
      %1999 = vmatpush1.bf16.msra.mxu0 0
      %2000 = vmatprep.subr.bf16.mxu0 0
      %2001 = vmatpush1.bf16.msra.mxu0 0
      %2002 = vmatprep.subr.bf16.mxu0 0
      %2003 = vmatpush1.bf16.msra.mxu0 0
      %2004 = vmatprep.subr.bf16.mxu0 0
      %2005 = vmatpush1.bf16.msra.mxu0 0
      %2006 = vmatprep.subr.bf16.mxu0 0
      %2007 = vmatpush1.bf16.msra.mxu0 0
      %2008 = vmatprep.subr.bf16.mxu0 0
      %2009 = vmatpush1.bf16.msra.mxu0 0
      %2010 = vmatprep.mubr.bf16.mxu0 0
      %2011 = vmatmul.mubr.bf16.gmra.mrb[0].mxu0 %v1675
      %v2012 = vpop.f32.mrb[0].mxu0
      %v2013 = vadd.f32 %v1970, %v2012
      %v2014 = vpop.f32.mrb[0].mxu0
      %v2015 = vadd.f32 %v1972, %v2014
      %v2016 = vpop.f32.mrb[0].mxu0
      %v2017 = vadd.f32 %v1974, %v2016
      %v2018 = vpop.f32.mrb[0].mxu0
      %v2019 = vadd.f32 %v1976, %v2018
      %2020 = vdwg.mxu0
      %v2021 = vmax.f32 %v1841, 0.0
      %v2022 = vmax.f32 %v1843, 0.0
      %v2023 = vmax.f32 %v2013, 0.0
      %v2024 = vmax.f32 %v2015, 0.0
      %v2025 = vmax.f32 %v1845, 0.0
      %v2026 = vmax.f32 %v1847, 0.0
      %v2027 = vmax.f32 %v2017, 0.0
      %v2028 = vmax.f32 %v2019, 0.0
      %v2029 = vpack.c.bf16 %v2025, %v2021
      %v2030 = vpack.c.bf16 %v2026, %v2022
      %v2031 = vpack.c.bf16 %v2027, %v2023
      %v2032 = vpack.c.bf16 %v2028, %v2024
      %v2033 = vld [vmem:[%s4] sm:$0xf]
      %v2034 = vld [vmem:[%s4 + $0x4] sm:$0xf]
      %v2035 = vld [vmem:[%s4 + $0x8] sm:$0xf]
      %v2036 = vld [vmem:[%s4 + $0xc] sm:$0xf]
      %v2037 = vld [vmem:[%s4 + $0x10] sm:$0xf]
      %v2038 = vld [vmem:[%s4 + $0x14] sm:$0xf]
      %v2039 = vld [vmem:[%s4 + $0x18] sm:$0xf]
      %v2040 = vld [vmem:[%s4 + $0x1c] sm:$0xf]
      %v2041 = vld [vmem:[%s4 + $0x20] sm:$0xf]
      %v2042 = vld [vmem:[%s4 + $0x24] sm:$0xf]
      %v2043 = vld [vmem:[%s4 + $0x28] sm:$0xf]
      %v2044 = vld [vmem:[%s4 + $0x2c] sm:$0xf]
      %v2045 = vld [vmem:[%s4 + $0x30] sm:$0xf]
      %v2046 = vld [vmem:[%s4 + $0x34] sm:$0xf]
      %v2047 = vld [vmem:[%s4 + $0x38] sm:$0xf]
      %v2048 = vld [vmem:[%s4 + $0x3c] sm:$0xf]
      %v2049 = vld [vmem:[%s4 + $0x40] sm:$0xf]
      %v2050 = vld [vmem:[%s4 + $0x44] sm:$0xf]
      %v2051 = vld [vmem:[%s4 + $0x48] sm:$0xf]
      %v2052 = vld [vmem:[%s4 + $0x4c] sm:$0xf]
      %v2053 = vld [vmem:[%s4 + $0x50] sm:$0xf]
      %v2054 = vld [vmem:[%s4 + $0x54] sm:$0xf]
      %v2055 = vld [vmem:[%s4 + $0x58] sm:$0xf]
      %v2056 = vld [vmem:[%s4 + $0x5c] sm:$0xf]
      %v2057 = vld [vmem:[%s4 + $0x60] sm:$0xf]
      %v2058 = vld [vmem:[%s4 + $0x64] sm:$0xf]
      %v2059 = vld [vmem:[%s4 + $0x68] sm:$0xf]
      %v2060 = vld [vmem:[%s4 + $0x6c] sm:$0xf]
      %v2061 = vld [vmem:[%s4 + $0x70] sm:$0xf]
      %v2062 = vld [vmem:[%s4 + $0x74] sm:$0xf]
      %v2063 = vld [vmem:[%s4 + $0x78] sm:$0xf]
      %v2064 = vld [vmem:[%s4 + $0x7c] sm:$0xf]
      %v2065 = vld [vmem:[%s4 + $0x80] sm:$0xf]
      %v2066 = vld [vmem:[%s4 + $0x84] sm:$0xf]
      %v2067 = vld [vmem:[%s4 + $0x88] sm:$0xf]
      %v2068 = vld [vmem:[%s4 + $0x8c] sm:$0xf]
      %v2069 = vld [vmem:[%s4 + $0x90] sm:$0xf]
      %v2070 = vld [vmem:[%s4 + $0x94] sm:$0xf]
      %v2071 = vld [vmem:[%s4 + $0x98] sm:$0xf]
      %v2072 = vld [vmem:[%s4 + $0x9c] sm:$0xf]
      %v2073 = vld [vmem:[%s4 + $0xa0] sm:$0xf]
      %v2074 = vld [vmem:[%s4 + $0xa4] sm:$0xf]
      %v2075 = vld [vmem:[%s4 + $0xa8] sm:$0xf]
      %v2076 = vld [vmem:[%s4 + $0xac] sm:$0xf]
      %v2077 = vld [vmem:[%s4 + $0xb0] sm:$0xf]
      %v2078 = vld [vmem:[%s4 + $0xb4] sm:$0xf]
      %v2079 = vld [vmem:[%s4 + $0xb8] sm:$0xf]
      %v2080 = vld [vmem:[%s4 + $0xbc] sm:$0xf]
      %v2081 = vld [vmem:[%s4 + $0xc0] sm:$0xf]
      %v2082 = vld [vmem:[%s4 + $0xc4] sm:$0xf]
      %v2083 = vld [vmem:[%s5] sm:$0x1]
      %v2085 = vlaneseq
      %v2086 = vshrl.u32 %v2085, 7
      %v2087 = vsub.s32 0, %v2086
      %v2088 = vrot.slane %v2083, %v2087
      %v2140 = vunpack.c.l.b16 %v2033
      %v2141 = vunpack.c.l.b16 %v2034
      %v2142 = vunpack.c.l.b16 %v2035
      %v2143 = vunpack.c.l.b16 %v2036
      %v2144 = vunpack.c.l.b16 %v2037
      %v2145 = vunpack.c.l.b16 %v2038
      %v2146 = vunpack.c.l.b16 %v2039
      %v2147 = vunpack.c.l.b16 %v2040
      %v2148 = vunpack.c.l.b16 %v2041
      %v2149 = vunpack.c.l.b16 %v2042
      %v2150 = vunpack.c.l.b16 %v2043
      %v2151 = vunpack.c.l.b16 %v2044
      %v2152 = vunpack.c.l.b16 %v2045
      %v2153 = vunpack.c.l.b16 %v2046
      %v2154 = vunpack.c.l.b16 %v2047
      %v2155 = vunpack.c.l.b16 %v2048
      %v2156 = vunpack.c.l.b16 %v2049
      %v2157 = vunpack.c.l.b16 %v2050
      %v2158 = vunpack.c.l.b16 %v2051
      %v2159 = vunpack.c.l.b16 %v2052
      %v2160 = vunpack.c.l.b16 %v2053
      %v2161 = vunpack.c.l.b16 %v2054
      %v2162 = vunpack.c.l.b16 %v2055
      %v2163 = vunpack.c.l.b16 %v2056
      %v2164 = vunpack.c.l.b16 %v2057
      %v2165 = vunpack.c.l.b16 %v2058
      %v2166 = vunpack.c.l.b16 %v2059
      %v2167 = vunpack.c.l.b16 %v2060
      %v2168 = vunpack.c.l.b16 %v2061
      %v2169 = vunpack.c.l.b16 %v2062
      %v2170 = vunpack.c.l.b16 %v2063
      %v2171 = vunpack.c.l.b16 %v2064
      %v2172 = vunpack.c.l.b16 %v2065
      %v2173 = vunpack.c.l.b16 %v2066
      %v2174 = vunpack.c.l.b16 %v2067
      %v2175 = vunpack.c.l.b16 %v2068
      %v2176 = vunpack.c.l.b16 %v2069
      %v2177 = vunpack.c.l.b16 %v2070
      %v2178 = vunpack.c.l.b16 %v2071
      %v2179 = vunpack.c.l.b16 %v2072
      %v2180 = vunpack.c.l.b16 %v2073
      %v2181 = vunpack.c.l.b16 %v2074
      %v2182 = vunpack.c.l.b16 %v2075
      %v2183 = vunpack.c.l.b16 %v2076
      %v2184 = vunpack.c.l.b16 %v2077
      %v2185 = vunpack.c.l.b16 %v2078
      %v2186 = vunpack.c.l.b16 %v2079
      %v2187 = vunpack.c.l.b16 %v2080
      %v2188 = vunpack.c.l.b16 %v2081
      %v2189 = vunpack.c.l.b16 %v2082
      %v2190 = vpack.c.b16 %v2141, %v2140
      %v2191 = vpack.c.b16 %v2143, %v2142
      %v2192 = vpack.c.b16 %v2145, %v2144
      %v2193 = vpack.c.b16 %v2147, %v2146
      %v2194 = vpack.c.b16 %v2149, %v2148
      %v2195 = vpack.c.b16 %v2151, %v2150
      %v2196 = vpack.c.b16 %v2153, %v2152
      %v2197 = vpack.c.b16 %v2155, %v2154
      %v2198 = vpack.c.b16 %v2157, %v2156
      %v2199 = vpack.c.b16 %v2159, %v2158
      %v2200 = vpack.c.b16 %v2161, %v2160
      %v2201 = vpack.c.b16 %v2163, %v2162
      %v2202 = vpack.c.b16 %v2165, %v2164
      %v2203 = vpack.c.b16 %v2167, %v2166
      %v2204 = vpack.c.b16 %v2169, %v2168
      %v2205 = vpack.c.b16 %v2171, %v2170
      %v2206 = vpack.c.b16 %v2173, %v2172
      %v2207 = vpack.c.b16 %v2175, %v2174
      %v2208 = vpack.c.b16 %v2177, %v2176
      %v2209 = vpack.c.b16 %v2179, %v2178
      %v2210 = vpack.c.b16 %v2181, %v2180
      %v2211 = vpack.c.b16 %v2183, %v2182
      %v2212 = vpack.c.b16 %v2185, %v2184
      %v2213 = vpack.c.b16 %v2187, %v2186
      %v2214 = vpack.c.b16 %v2189, %v2188
      %v2241 = vsel %vm1673, %v2032, 0
      %2243 = vmatprep.subr.bf16.mxu0 0
      %2244 = vmatpush1.bf16.msra.mxu0 %v2190
      %2245 = vmatprep.subr.bf16.mxu0 0
      %2246 = vmatpush1.bf16.msra.mxu0 %v2191
      %2247 = vmatprep.subr.bf16.mxu0 0
      %2248 = vmatpush1.bf16.msra.mxu0 %v2192
      %2249 = vmatprep.subr.bf16.mxu0 0
      %2250 = vmatpush1.bf16.msra.mxu0 %v2193
      %2251 = vmatprep.subr.bf16.mxu0 0
      %2252 = vmatpush1.bf16.msra.mxu0 %v2194
      %2253 = vmatprep.subr.bf16.mxu0 0
      %2254 = vmatpush1.bf16.msra.mxu0 %v2195
      %2255 = vmatprep.subr.bf16.mxu0 0
      %2256 = vmatpush1.bf16.msra.mxu0 %v2196
      %2257 = vmatprep.subr.bf16.mxu0 0
      %2258 = vmatpush1.bf16.msra.mxu0 %v2197
      %2259 = vmatprep.subr.bf16.mxu0 0
      %2260 = vmatpush1.bf16.msra.mxu0 %v2198
      %2261 = vmatprep.subr.bf16.mxu0 0
      %2262 = vmatpush1.bf16.msra.mxu0 %v2199
      %2263 = vmatprep.subr.bf16.mxu0 0
      %2264 = vmatpush1.bf16.msra.mxu0 %v2200
      %2265 = vmatprep.subr.bf16.mxu0 0
      %2266 = vmatpush1.bf16.msra.mxu0 %v2201
      %2267 = vmatprep.subr.bf16.mxu0 0
      %2268 = vmatpush1.bf16.msra.mxu0 %v2202
      %2269 = vmatprep.subr.bf16.mxu0 0
      %2270 = vmatpush1.bf16.msra.mxu0 %v2203
      %2271 = vmatprep.subr.bf16.mxu0 0
      %2272 = vmatpush1.bf16.msra.mxu0 %v2204
      %2273 = vmatprep.subr.bf16.mxu0 0
      %2274 = vmatpush1.bf16.msra.mxu0 %v2205
      %2275 = vmatprep.mubr.bf16.mxu0 %v2030
      %2276 = vmatmul.mubr.bf16.gmra.mrb[0].mxu0 %v2029
      %v2277 = vpop.f32.mrb[0].mxu0
      %v2278 = vadd.f32 %v2088, %v2277
      %v2279 = vpop.f32.mrb[0].mxu0
      %v2280 = vpop.f32.mrb[0].mxu0
      %v2281 = vadd.f32 %v2088, %v2280
      %v2282 = vpop.f32.mrb[0].mxu0
      %2283 = vdwg.mxu0
      %2284 = vmatprep.subr.bf16.mxu0 0
      %2285 = vmatpush1.bf16.msra.mxu0 %v2206
      %2286 = vmatprep.subr.bf16.mxu0 0
      %2287 = vmatpush1.bf16.msra.mxu0 %v2207
      %2288 = vmatprep.subr.bf16.mxu0 0
      %2289 = vmatpush1.bf16.msra.mxu0 %v2208
      %2290 = vmatprep.subr.bf16.mxu0 0
      %2291 = vmatpush1.bf16.msra.mxu0 %v2209
      %2292 = vmatprep.subr.bf16.mxu0 0
      %2293 = vmatpush1.bf16.msra.mxu0 %v2210
      %2294 = vmatprep.subr.bf16.mxu0 0
      %2295 = vmatpush1.bf16.msra.mxu0 %v2211
      %2296 = vmatprep.subr.bf16.mxu0 0
      %2297 = vmatpush1.bf16.msra.mxu0 %v2212
      %2298 = vmatprep.subr.bf16.mxu0 0
      %2299 = vmatpush1.bf16.msra.mxu0 %v2213
      %2300 = vmatprep.subr.bf16.mxu0 0
      %2301 = vmatpush1.bf16.msra.mxu0 %v2214
      %2302 = vmatprep.subr.bf16.mxu0 0
      %2303 = vmatpush1.bf16.msra.mxu0 0
      %2304 = vmatprep.subr.bf16.mxu0 0
      %2305 = vmatpush1.bf16.msra.mxu0 0
      %2306 = vmatprep.subr.bf16.mxu0 0
      %2307 = vmatpush1.bf16.msra.mxu0 0
      %2308 = vmatprep.subr.bf16.mxu0 0
      %2309 = vmatpush1.bf16.msra.mxu0 0
      %2310 = vmatprep.subr.bf16.mxu0 0
      %2311 = vmatpush1.bf16.msra.mxu0 0
      %2312 = vmatprep.subr.bf16.mxu0 0
      %2313 = vmatpush1.bf16.msra.mxu0 0
      %2314 = vmatprep.subr.bf16.mxu0 0
      %2315 = vmatpush1.bf16.msra.mxu0 0
      %2316 = vmatprep.mubr.bf16.mxu0 %v2241
      %2317 = vmatmul.mubr.bf16.gmra.mrb[0].mxu0 %v2031
      %v2318 = vpop.f32.mrb[0].mxu0
      %v2319 = vadd.f32 %v2278, %v2318
      %v2320 = vpop.f32.mrb[0].mxu0
      %v2321 = vpop.f32.mrb[0].mxu0
      %v2322 = vadd.f32 %v2281, %v2321
      %v2323 = vpop.f32.mrb[0].mxu0
      %2324 = vdwg.mxu0
      %v2325 = vld [vmem:[%s416] sm:$0xff]
      %v2326 = vld [vmem:[%s416 + $0x8] sm:$0xff]
      %v2327 = vmul.f32 %v2319, 0.5
      %v2328 = vmul.f32 %v2322, 0.5
      %v2329 = vmul.f32 %v2327, 1.442695
      %v2330 = vpow.pop %v2329
      %v2331 = vmul.f32 %v2328, 1.442695
      %v2332 = vpow.pop %v2331
      %2335 = vrot.lane.b32.xlu0 %v2330, 108
      %v2336 = vpop.permute.xlu0 %2335
      %2337 = vrot.lane.b32.xlu0 %v2332, 108
      %v2338 = vpop.permute.xlu0 %2337
      %v2341 = vmul.f32 %v2325, %v2336
      %v2342 = vmul.f32 %v2326, %v2338
      %v2343 = vadd.f32 %v2319, %v2341
      %v2344 = vadd.f32 %v2322, %v2342
      %v2345 = vpack.c.bf16 %v2344, %v2343
      %v2346 = vld [vmem:[%s6] sm:$0xff]
      %v2347 = vld [vmem:[%s6 + $0x8] sm:$0xff]
      %v2348 = vld [vmem:[%s6 + $0x10] sm:$0xff]
      %v2349 = vld [vmem:[%s6 + $0x18] sm:$0xff]
      %v2350 = vld [vmem:[%s6 + $0x20] sm:$0x33]
      %v2351 = vld [vmem:[%s6 + $0x28] sm:$0x33]
      %v2352 = vld [vmem:[%s7] sm:$0xf]
      %v2354 = vlaneseq
      %v2355 = vshrl.u32 %v2354, 7
      %v2356 = vsub.s32 0, %v2355
      %v2357 = vrot.slane %v2352, %v2356
      %v2358 = vlaneseq
      %v2359 = vshrl.u32 %v2358, 7
      %v2360 = vsub.s32 1, %v2359
      %v2361 = vrot.slane %v2352, %v2360
      %v2362 = vlaneseq
      %v2363 = vshrl.u32 %v2362, 7
      %v2364 = vsub.s32 2, %v2363
      %v2365 = vrot.slane %v2352, %v2364
      %v2366 = vlaneseq
      %v2367 = vshrl.u32 %v2366, 7
      %v2368 = vsub.s32 3, %v2367
      %v2369 = vrot.slane %v2352, %v2368
      %v2380 = vunpack.c.l.b16 %v2346
      %v2381 = vunpack.c.h.b16 %v2346
      %v2382 = vunpack.c.l.b16 %v2347
      %v2383 = vunpack.c.h.b16 %v2347
      %v2384 = vunpack.c.l.b16 %v2348
      %v2385 = vunpack.c.h.b16 %v2348
      %v2386 = vunpack.c.l.b16 %v2349
      %v2387 = vunpack.c.h.b16 %v2349
      %v2388 = vunpack.c.l.b16 %v2350
      %v2389 = vunpack.c.h.b16 %v2350
      %v2390 = vunpack.c.l.b16 %v2351
      %v2391 = vunpack.c.h.b16 %v2351
      %v2392 = vpack.c.b16 %v2384, %v2380
      %v2393 = vpack.c.b16 %v2385, %v2381
      %v2394 = vpack.c.b16 %v2386, %v2382
      %v2395 = vpack.c.b16 %v2387, %v2383
      %v2396 = vpack.c.b16 %v2388, %v2388
      %v2397 = vpack.c.b16 %v2389, %v2389
      %v2398 = vpack.c.b16 %v2390, %v2390
      %v2399 = vpack.c.b16 %v2391, %v2391
      %vm2404 = vcmask 162816
      %v2406 = vsel %vm2404, %v2345, 0
      %vm2408 = vcmask 1041408
      %v2410 = vsel %vm2408, %v2396, 0
      %v2413 = vsel %vm2408, %v2397, 0
      %v2416 = vsel %vm2408, %v2398, 0
      %v2419 = vsel %vm2408, %v2399, 0
      %2421 = vmatprep.subr.bf16.mxu0 %v2393
      %2422 = vmatpush1.bf16.msra.mxu0 %v2392
      %2423 = vmatprep.subr.bf16.mxu0 %v2413
      %2424 = vmatpush1.bf16.msra.mxu0 %v2410
      %2425 = vmatprep.subr.bf16.mxu0 0
      %2426 = vmatpush1.bf16.msra.mxu0 0
      %2427 = vmatprep.subr.bf16.mxu0 0
      %2428 = vmatpush1.bf16.msra.mxu0 0
      %2429 = vmatprep.subr.bf16.mxu0 0
      %2430 = vmatpush1.bf16.msra.mxu0 0
      %2431 = vmatprep.subr.bf16.mxu0 0
      %2432 = vmatpush1.bf16.msra.mxu0 0
      %2433 = vmatprep.subr.bf16.mxu0 0
      %2434 = vmatpush1.bf16.msra.mxu0 0
      %2435 = vmatprep.subr.bf16.mxu0 0
      %2436 = vmatpush1.bf16.msra.mxu0 0
      %2437 = vmatprep.subr.bf16.mxu0 0
      %2438 = vmatpush1.bf16.msra.mxu0 0
      %2439 = vmatprep.subr.bf16.mxu0 0
      %2440 = vmatpush1.bf16.msra.mxu0 0
      %2441 = vmatprep.subr.bf16.mxu0 0
      %2442 = vmatpush1.bf16.msra.mxu0 0
      %2443 = vmatprep.subr.bf16.mxu0 0
      %2444 = vmatpush1.bf16.msra.mxu0 0
      %2445 = vmatprep.subr.bf16.mxu0 0
      %2446 = vmatpush1.bf16.msra.mxu0 0
      %2447 = vmatprep.subr.bf16.mxu0 0
      %2448 = vmatpush1.bf16.msra.mxu0 0
      %2449 = vmatprep.subr.bf16.mxu0 0
      %2450 = vmatpush1.bf16.msra.mxu0 0
      %2451 = vmatprep.subr.bf16.mxu0 0
      %2452 = vmatpush1.bf16.msra.mxu0 0
      %2453 = vmatprep.mubr.bf16.mxu0 0
      %2454 = vmatmul.mubr.bf16.gmra.mrb[0].mxu0 %v2406
      %v2455 = vpop.f32.mrb[0].mxu0
      %v2456 = vadd.f32 %v2357, %v2455
      %v2457 = vpop.f32.mrb[0].mxu0
      %v2458 = vadd.f32 %v2361, %v2457
      %v2459 = vpop.f32.mrb[0].mxu0
      %v2460 = vadd.f32 %v2357, %v2459
      %v2461 = vpop.f32.mrb[0].mxu0
      %v2462 = vadd.f32 %v2361, %v2461
      %2463 = vdwg.mxu0
      %2464 = vmatprep.subr.bf16.mxu0 %v2395
      %2465 = vmatpush1.bf16.msra.mxu0 %v2394
      %2466 = vmatprep.subr.bf16.mxu0 %v2419
      %2467 = vmatpush1.bf16.msra.mxu0 %v2416
      %2468 = vmatprep.subr.bf16.mxu0 0
      %2469 = vmatpush1.bf16.msra.mxu0 0
      %2470 = vmatprep.subr.bf16.mxu0 0
      %2471 = vmatpush1.bf16.msra.mxu0 0
      %2472 = vmatprep.subr.bf16.mxu0 0
      %2473 = vmatpush1.bf16.msra.mxu0 0
      %2474 = vmatprep.subr.bf16.mxu0 0
      %2475 = vmatpush1.bf16.msra.mxu0 0
      %2476 = vmatprep.subr.bf16.mxu0 0
      %2477 = vmatpush1.bf16.msra.mxu0 0
      %2478 = vmatprep.subr.bf16.mxu0 0
      %2479 = vmatpush1.bf16.msra.mxu0 0
      %2480 = vmatprep.subr.bf16.mxu0 0
      %2481 = vmatpush1.bf16.msra.mxu0 0
      %2482 = vmatprep.subr.bf16.mxu0 0
      %2483 = vmatpush1.bf16.msra.mxu0 0
      %2484 = vmatprep.subr.bf16.mxu0 0
      %2485 = vmatpush1.bf16.msra.mxu0 0
      %2486 = vmatprep.subr.bf16.mxu0 0
      %2487 = vmatpush1.bf16.msra.mxu0 0
      %2488 = vmatprep.subr.bf16.mxu0 0
      %2489 = vmatpush1.bf16.msra.mxu0 0
      %2490 = vmatprep.subr.bf16.mxu0 0
      %2491 = vmatpush1.bf16.msra.mxu0 0
      %2492 = vmatprep.subr.bf16.mxu0 0
      %2493 = vmatpush1.bf16.msra.mxu0 0
      %2494 = vmatprep.subr.bf16.mxu0 0
      %2495 = vmatpush1.bf16.msra.mxu0 0
      %2496 = vmatprep.mubr.bf16.mxu0 0
      %2497 = vmatmul.mubr.bf16.gmra.mrb[0].mxu0 %v2406
      %v2498 = vpop.f32.mrb[0].mxu0
      %v2499 = vadd.f32 %v2365, %v2498
      %v2500 = vpop.f32.mrb[0].mxu0
      %v2501 = vadd.f32 %v2369, %v2500
      %v2502 = vpop.f32.mrb[0].mxu0
      %v2503 = vadd.f32 %v2365, %v2502
      %v2504 = vpop.f32.mrb[0].mxu0
      %v2505 = vadd.f32 %v2369, %v2504
      %2506 = vdwg.mxu0
      %v2507 = vmax.f32 %v2456, 0.0
      %v2508 = vmax.f32 %v2458, 0.0
      %v2509 = vmax.f32 %v2499, 0.0
      %v2510 = vmax.f32 %v2501, 0.0
      %v2511 = vmax.f32 %v2460, 0.0
      %v2512 = vmax.f32 %v2462, 0.0
      %v2513 = vmax.f32 %v2503, 0.0
      %v2514 = vmax.f32 %v2505, 0.0
      %v2515 = vpack.c.bf16 %v2511, %v2507
      %v2516 = vpack.c.bf16 %v2512, %v2508
      %v2517 = vpack.c.bf16 %v2513, %v2509
      %v2518 = vpack.c.bf16 %v2514, %v2510
      %v2519 = vld [vmem:[%s8] sm:$0xff]
      %v2520 = vld [vmem:[%s8 + $0x8] sm:$0xff]
      %v2521 = vld [vmem:[%s8 + $0x10] sm:$0xff]
      %v2522 = vld [vmem:[%s8 + $0x18] sm:$0xf]
      %v2523 = vld [vmem:[%s8 + $0x1c] sm:$0xff]
      %v2524 = vld [vmem:[%s8 + $0x24] sm:$0xff]
      %v2525 = vld [vmem:[%s8 + $0x2c] sm:$0xff]
      %v2526 = vld [vmem:[%s8 + $0x34] sm:$0xf]
      %v2527 = vld [vmem:[%s8 + $0x38] sm:$0xff]
      %v2528 = vld [vmem:[%s8 + $0x40] sm:$0xff]
      %v2529 = vld [vmem:[%s8 + $0x48] sm:$0xff]
      %v2530 = vld [vmem:[%s8 + $0x50] sm:$0xf]
      %v2531 = vld [vmem:[%s8 + $0x54] sm:$0xff]
      %v2532 = vld [vmem:[%s8 + $0x5c] sm:$0xff]
      %v2533 = vld [vmem:[%s8 + $0x64] sm:$0xff]
      %v2534 = vld [vmem:[%s8 + $0x6c] sm:$0xf]
      %v2535 = vld [vmem:[%s8 + $0x70] sm:$0xff]
      %v2536 = vld [vmem:[%s8 + $0x78] sm:$0xff]
      %v2537 = vld [vmem:[%s8 + $0x80] sm:$0xff]
      %v2538 = vld [vmem:[%s8 + $0x88] sm:$0xf]
      %v2539 = vld [vmem:[%s8 + $0x8c] sm:$0xff]
      %v2540 = vld [vmem:[%s8 + $0x94] sm:$0xff]
      %v2541 = vld [vmem:[%s8 + $0x9c] sm:$0xff]
      %v2542 = vld [vmem:[%s8 + $0xa4] sm:$0xf]
      %v2543 = vld [vmem:[%s8 + $0xa8] sm:$0xff]
      %v2544 = vld [vmem:[%s8 + $0xb0] sm:$0xff]
      %v2545 = vld [vmem:[%s8 + $0xb8] sm:$0xff]
      %v2546 = vld [vmem:[%s8 + $0xc0] sm:$0xf]
      %v2547 = vld [vmem:[%s8 + $0xc4] sm:$0xff]
      %v2548 = vld [vmem:[%s8 + $0xcc] sm:$0xff]
      %v2549 = vld [vmem:[%s8 + $0xd4] sm:$0xff]
      %v2550 = vld [vmem:[%s8 + $0xdc] sm:$0xf]
      %v2551 = vld [vmem:[%s8 + $0xe0] sm:$0xff]
      %v2552 = vld [vmem:[%s8 + $0xe8] sm:$0xff]
      %v2553 = vld [vmem:[%s8 + $0xf0] sm:$0xff]
      %v2554 = vld [vmem:[%s8 + $0xf8] sm:$0xf]
      %v2555 = vld [vmem:[%s8 + $0xfc] sm:$0xff]
      %v2556 = vld [vmem:[%s8 + $0x104] sm:$0xff]
      %v2557 = vld [vmem:[%s8 + $0x10c] sm:$0xff]
      %v2558 = vld [vmem:[%s8 + $0x114] sm:$0xf]
      %v2559 = vld [vmem:[%s8 + $0x118] sm:$0xff]
      %v2560 = vld [vmem:[%s8 + $0x120] sm:$0xff]
      %v2561 = vld [vmem:[%s8 + $0x128] sm:$0xff]
      %v2562 = vld [vmem:[%s8 + $0x130] sm:$0xf]
      %v2563 = vld [vmem:[%s8 + $0x134] sm:$0xff]
      %v2564 = vld [vmem:[%s8 + $0x13c] sm:$0xff]
      %v2565 = vld [vmem:[%s8 + $0x144] sm:$0xff]
      %v2566 = vld [vmem:[%s8 + $0x14c] sm:$0xf]
      %v2567 = vld [vmem:[%s8 + $0x150] sm:$0xff]
      %v2568 = vld [vmem:[%s8 + $0x158] sm:$0xff]
      %v2569 = vld [vmem:[%s8 + $0x160] sm:$0xff]
      %v2570 = vld [vmem:[%s8 + $0x168] sm:$0xf]
      %v2571 = vld [vmem:[%s8 + $0x16c] sm:$0xff]
      %v2572 = vld [vmem:[%s8 + $0x174] sm:$0xff]
      %v2573 = vld [vmem:[%s8 + $0x17c] sm:$0xff]
      %v2574 = vld [vmem:[%s8 + $0x184] sm:$0xf]
      %v2575 = vld [vmem:[%s8 + $0x188] sm:$0xff]
      %v2576 = vld [vmem:[%s8 + $0x190] sm:$0xff]
      %v2577 = vld [vmem:[%s8 + $0x198] sm:$0xff]
      %v2578 = vld [vmem:[%s8 + $0x1a0] sm:$0xf]
      %v2579 = vld [vmem:[%s8 + $0x1a4] sm:$0xff]
      %v2580 = vld [vmem:[%s8 + $0x1ac] sm:$0xff]
      %v2581 = vld [vmem:[%s8 + $0x1b4] sm:$0xff]
      %v2582 = vld [vmem:[%s8 + $0x1bc] sm:$0xf]
      %v2583 = vld [vmem:[%s8 + $0x1c0] sm:$0xff]
      %v2584 = vld [vmem:[%s8 + $0x1c8] sm:$0xff]
      %v2585 = vld [vmem:[%s8 + $0x1d0] sm:$0xff]
      %v2586 = vld [vmem:[%s8 + $0x1d8] sm:$0xf]
      %v2587 = vld [vmem:[%s8 + $0x1dc] sm:$0xff]
      %v2588 = vld [vmem:[%s8 + $0x1e4] sm:$0xff]
      %v2589 = vld [vmem:[%s8 + $0x1ec] sm:$0xff]
      %v2590 = vld [vmem:[%s8 + $0x1f4] sm:$0xf]
      %v2591 = vld [vmem:[%s8 + $0x1f8] sm:$0xff]
      %v2592 = vld [vmem:[%s8 + $0x200] sm:$0xff]
      %v2593 = vld [vmem:[%s8 + $0x208] sm:$0xff]
      %v2594 = vld [vmem:[%s8 + $0x210] sm:$0xf]
      %v2595 = vld [vmem:[%s8 + $0x214] sm:$0xff]
      %v2596 = vld [vmem:[%s8 + $0x21c] sm:$0xff]
      %v2597 = vld [vmem:[%s8 + $0x224] sm:$0xff]
      %v2598 = vld [vmem:[%s8 + $0x22c] sm:$0xf]
      %v2599 = vld [vmem:[%s8 + $0x230] sm:$0xff]
      %v2600 = vld [vmem:[%s8 + $0x238] sm:$0xff]
      %v2601 = vld [vmem:[%s8 + $0x240] sm:$0xff]
      %v2602 = vld [vmem:[%s8 + $0x248] sm:$0xf]
      %v2603 = vld [vmem:[%s8 + $0x24c] sm:$0xff]
      %v2604 = vld [vmem:[%s8 + $0x254] sm:$0xff]
      %v2605 = vld [vmem:[%s8 + $0x25c] sm:$0xff]
      %v2606 = vld [vmem:[%s8 + $0x264] sm:$0xf]
      %v2607 = vld [vmem:[%s8 + $0x268] sm:$0xff]
      %v2608 = vld [vmem:[%s8 + $0x270] sm:$0xff]
      %v2609 = vld [vmem:[%s8 + $0x278] sm:$0xff]
      %v2610 = vld [vmem:[%s8 + $0x280] sm:$0xf]
      %v2611 = vld [vmem:[%s8 + $0x284] sm:$0xff]
      %v2612 = vld [vmem:[%s8 + $0x28c] sm:$0xff]
      %v2613 = vld [vmem:[%s8 + $0x294] sm:$0xff]
      %v2614 = vld [vmem:[%s8 + $0x29c] sm:$0xf]
      %v2615 = vld [vmem:[%s8 + $0x2a0] sm:$0xff]
      %v2616 = vld [vmem:[%s8 + $0x2a8] sm:$0xff]
      %v2617 = vld [vmem:[%s8 + $0x2b0] sm:$0xff]
      %v2618 = vld [vmem:[%s8 + $0x2b8] sm:$0xf]
      %v2619 = vld [vmem:[%s8 + $0x2bc] sm:$0xff]
      %v2620 = vld [vmem:[%s8 + $0x2c4] sm:$0xff]
      %v2621 = vld [vmem:[%s8 + $0x2cc] sm:$0xff]
      %v2622 = vld [vmem:[%s8 + $0x2d4] sm:$0xf]
      %v2623 = vld [vmem:[%s8 + $0x2d8] sm:$0xff]
      %v2624 = vld [vmem:[%s8 + $0x2e0] sm:$0xff]
      %v2625 = vld [vmem:[%s8 + $0x2e8] sm:$0xff]
      %v2626 = vld [vmem:[%s8 + $0x2f0] sm:$0xf]
      %v2627 = vld [vmem:[%s8 + $0x2f4] sm:$0xff]
      %v2628 = vld [vmem:[%s8 + $0x2fc] sm:$0xff]
      %v2629 = vld [vmem:[%s8 + $0x304] sm:$0xff]
      %v2630 = vld [vmem:[%s8 + $0x30c] sm:$0xf]
      %v2631 = vld [vmem:[%s8 + $0x310] sm:$0xff]
      %v2632 = vld [vmem:[%s8 + $0x318] sm:$0xff]
      %v2633 = vld [vmem:[%s8 + $0x320] sm:$0xff]
      %v2634 = vld [vmem:[%s8 + $0x328] sm:$0xf]
      %v2635 = vld [vmem:[%s8 + $0x32c] sm:$0xff]
      %v2636 = vld [vmem:[%s8 + $0x334] sm:$0xff]
      %v2637 = vld [vmem:[%s8 + $0x33c] sm:$0xff]
      %v2638 = vld [vmem:[%s8 + $0x344] sm:$0xf]
      %v2639 = vld [vmem:[%s8 + $0x348] sm:$0xff]
      %v2640 = vld [vmem:[%s8 + $0x350] sm:$0xff]
      %v2641 = vld [vmem:[%s8 + $0x358] sm:$0xff]
      %v2642 = vld [vmem:[%s8 + $0x360] sm:$0xf]
      %v2643 = vld [vmem:[%s8 + $0x364] sm:$0xff]
      %v2644 = vld [vmem:[%s8 + $0x36c] sm:$0xff]
      %v2645 = vld [vmem:[%s8 + $0x374] sm:$0xff]
      %v2646 = vld [vmem:[%s8 + $0x37c] sm:$0xf]
      %v2647 = vld [vmem:[%s8 + $0x380] sm:$0xff]
      %v2648 = vld [vmem:[%s8 + $0x388] sm:$0xff]
      %v2649 = vld [vmem:[%s8 + $0x390] sm:$0xff]
      %v2650 = vld [vmem:[%s8 + $0x398] sm:$0xf]
      %v2651 = vld [vmem:[%s8 + $0x39c] sm:$0xff]
      %v2652 = vld [vmem:[%s8 + $0x3a4] sm:$0xff]
      %v2653 = vld [vmem:[%s8 + $0x3ac] sm:$0xff]
      %v2654 = vld [vmem:[%s8 + $0x3b4] sm:$0xf]
      %v2655 = vld [vmem:[%s8 + $0x3b8] sm:$0xff]
      %v2656 = vld [vmem:[%s8 + $0x3c0] sm:$0xff]
      %v2657 = vld [vmem:[%s8 + $0x3c8] sm:$0xff]
      %v2658 = vld [vmem:[%s8 + $0x3d0] sm:$0xf]
      %v2659 = vld [vmem:[%s8 + $0x3d4] sm:$0xff]
      %v2660 = vld [vmem:[%s8 + $0x3dc] sm:$0xff]
      %v2661 = vld [vmem:[%s8 + $0x3e4] sm:$0xff]
      %v2662 = vld [vmem:[%s8 + $0x3ec] sm:$0xf]
      %v2663 = vld [vmem:[%s8 + $0x3f0] sm:$0xff]
      %v2664 = vld [vmem:[%s8 + $0x3f8] sm:$0xff]
      %v2665 = vld [vmem:[%s8 + $0x400] sm:$0xff]
      %v2666 = vld [vmem:[%s8 + $0x408] sm:$0xf]
      %v2667 = vld [vmem:[%s8 + $0x40c] sm:$0xff]
      %v2668 = vld [vmem:[%s8 + $0x414] sm:$0xff]
      %v2669 = vld [vmem:[%s8 + $0x41c] sm:$0xff]
      %v2670 = vld [vmem:[%s8 + $0x424] sm:$0xf]
      %v2671 = vld [vmem:[%s8 + $0x428] sm:$0xff]
      %v2672 = vld [vmem:[%s8 + $0x430] sm:$0xff]
      %v2673 = vld [vmem:[%s8 + $0x438] sm:$0xff]
      %v2674 = vld [vmem:[%s8 + $0x440] sm:$0xf]
      %v2675 = vld [vmem:[%s8 + $0x444] sm:$0xff]
      %v2676 = vld [vmem:[%s8 + $0x44c] sm:$0xff]
      %v2677 = vld [vmem:[%s8 + $0x454] sm:$0xff]
      %v2678 = vld [vmem:[%s8 + $0x45c] sm:$0xf]
      %v2679 = vld [vmem:[%s8 + $0x460] sm:$0xff]
      %v2680 = vld [vmem:[%s8 + $0x468] sm:$0xff]
      %v2681 = vld [vmem:[%s8 + $0x470] sm:$0xff]
      %v2682 = vld [vmem:[%s8 + $0x478] sm:$0xf]
      %v2683 = vld [vmem:[%s8 + $0x47c] sm:$0xff]
      %v2684 = vld [vmem:[%s8 + $0x484] sm:$0xff]
      %v2685 = vld [vmem:[%s8 + $0x48c] sm:$0xff]
      %v2686 = vld [vmem:[%s8 + $0x494] sm:$0xf]
      %v2687 = vld [vmem:[%s8 + $0x498] sm:$0xff]
      %v2688 = vld [vmem:[%s8 + $0x4a0] sm:$0xff]
      %v2689 = vld [vmem:[%s8 + $0x4a8] sm:$0xff]
      %v2690 = vld [vmem:[%s8 + $0x4b0] sm:$0xf]
      %v2691 = vld [vmem:[%s8 + $0x4b4] sm:$0xff]
      %v2692 = vld [vmem:[%s8 + $0x4bc] sm:$0xff]
      %v2693 = vld [vmem:[%s8 + $0x4c4] sm:$0xff]
      %v2694 = vld [vmem:[%s8 + $0x4cc] sm:$0xf]
      %v2695 = vld [vmem:[%s8 + $0x4d0] sm:$0xff]
      %v2696 = vld [vmem:[%s8 + $0x4d8] sm:$0xff]
      %v2697 = vld [vmem:[%s8 + $0x4e0] sm:$0xff]
      %v2698 = vld [vmem:[%s8 + $0x4e8] sm:$0xf]
      %v2699 = vld [vmem:[%s8 + $0x4ec] sm:$0xff]
      %v2700 = vld [vmem:[%s8 + $0x4f4] sm:$0xff]
      %v2701 = vld [vmem:[%s8 + $0x4fc] sm:$0xff]
      %v2702 = vld [vmem:[%s8 + $0x504] sm:$0xf]
      %v2703 = vld [vmem:[%s8 + $0x508] sm:$0xff]
      %v2704 = vld [vmem:[%s8 + $0x510] sm:$0xff]
      %v2705 = vld [vmem:[%s8 + $0x518] sm:$0xff]
      %v2706 = vld [vmem:[%s8 + $0x520] sm:$0xf]
      %v2707 = vld [vmem:[%s8 + $0x524] sm:$0xff]
      %v2708 = vld [vmem:[%s8 + $0x52c] sm:$0xff]
      %v2709 = vld [vmem:[%s8 + $0x534] sm:$0xff]
      %v2710 = vld [vmem:[%s8 + $0x53c] sm:$0xf]
      %v2711 = vld [vmem:[%s8 + $0x540] sm:$0xff]
      %v2712 = vld [vmem:[%s8 + $0x548] sm:$0xff]
      %v2713 = vld [vmem:[%s8 + $0x550] sm:$0xff]
      %v2714 = vld [vmem:[%s8 + $0x558] sm:$0xf]
      %v2715 = vld [vmem:[%s8 + $0x55c] sm:$0xff]
      %v2716 = vld [vmem:[%s8 + $0x564] sm:$0xff]
      %v2717 = vld [vmem:[%s8 + $0x56c] sm:$0xff]
      %v2718 = vld [vmem:[%s8 + $0x574] sm:$0xf]
      %v2719 = vld [vmem:[%s9] sm:$0x7f]
      %v2721 = vlaneseq
      %v2722 = vshrl.u32 %v2721, 7
      %v2723 = vsub.s32 0, %v2722
      %v2724 = vrot.slane %v2719, %v2723
      %v2725 = vlaneseq
      %v2726 = vshrl.u32 %v2725, 7
      %v2727 = vsub.s32 1, %v2726
      %v2728 = vrot.slane %v2719, %v2727
      %v2729 = vlaneseq
      %v2730 = vshrl.u32 %v2729, 7
      %v2731 = vsub.s32 2, %v2730
      %v2732 = vrot.slane %v2719, %v2731
      %v2733 = vlaneseq
      %v2734 = vshrl.u32 %v2733, 7
      %v2735 = vsub.s32 3, %v2734
      %v2736 = vrot.slane %v2719, %v2735
      %v2737 = vlaneseq
      %v2738 = vshrl.u32 %v2737, 7
      %v2739 = vsub.s32 4, %v2738
      %v2740 = vrot.slane %v2719, %v2739
      %v2741 = vlaneseq
      %v2742 = vshrl.u32 %v2741, 7
      %v2743 = vsub.s32 5, %v2742
      %v2744 = vrot.slane %v2719, %v2743
      %v2745 = vlaneseq
      %v2746 = vshrl.u32 %v2745, 7
      %v2747 = vsub.s32 6, %v2746
      %v2748 = vrot.slane %v2719, %v2747
      %v2956 = vunpack.c.l.b16 %v2519
      %v2957 = vunpack.c.h.b16 %v2519
      %v2958 = vunpack.c.l.b16 %v2520
      %v2959 = vunpack.c.h.b16 %v2520
      %v2960 = vunpack.c.l.b16 %v2521
      %v2961 = vunpack.c.h.b16 %v2521
      %v2962 = vunpack.c.l.b16 %v2522
      %v2963 = vunpack.c.l.b16 %v2523
      %v2964 = vunpack.c.h.b16 %v2523
      %v2965 = vunpack.c.l.b16 %v2524
      %v2966 = vunpack.c.h.b16 %v2524
      %v2967 = vunpack.c.l.b16 %v2525
      %v2968 = vunpack.c.h.b16 %v2525
      %v2969 = vunpack.c.l.b16 %v2526
      %v2970 = vunpack.c.l.b16 %v2527
      %v2971 = vunpack.c.h.b16 %v2527
      %v2972 = vunpack.c.l.b16 %v2528
      %v2973 = vunpack.c.h.b16 %v2528
      %v2974 = vunpack.c.l.b16 %v2529
      %v2975 = vunpack.c.h.b16 %v2529
      %v2976 = vunpack.c.l.b16 %v2530
      %v2977 = vunpack.c.l.b16 %v2531
      %v2978 = vunpack.c.h.b16 %v2531
      %v2979 = vunpack.c.l.b16 %v2532
      %v2980 = vunpack.c.h.b16 %v2532
      %v2981 = vunpack.c.l.b16 %v2533
      %v2982 = vunpack.c.h.b16 %v2533
      %v2983 = vunpack.c.l.b16 %v2534
      %v2984 = vunpack.c.l.b16 %v2535
      %v2985 = vunpack.c.h.b16 %v2535
      %v2986 = vunpack.c.l.b16 %v2536
      %v2987 = vunpack.c.h.b16 %v2536
      %v2988 = vunpack.c.l.b16 %v2537
      %v2989 = vunpack.c.h.b16 %v2537
      %v2990 = vunpack.c.l.b16 %v2538
      %v2991 = vunpack.c.l.b16 %v2539
      %v2992 = vunpack.c.h.b16 %v2539
      %v2993 = vunpack.c.l.b16 %v2540
      %v2994 = vunpack.c.h.b16 %v2540
      %v2995 = vunpack.c.l.b16 %v2541
      %v2996 = vunpack.c.h.b16 %v2541
      %v2997 = vunpack.c.l.b16 %v2542
      %v2998 = vunpack.c.l.b16 %v2543
      %v2999 = vunpack.c.h.b16 %v2543
      %v3000 = vunpack.c.l.b16 %v2544
      %v3001 = vunpack.c.h.b16 %v2544
      %v3002 = vunpack.c.l.b16 %v2545
      %v3003 = vunpack.c.h.b16 %v2545
      %v3004 = vunpack.c.l.b16 %v2546
      %v3005 = vunpack.c.l.b16 %v2547
      %v3006 = vunpack.c.h.b16 %v2547
      %v3007 = vunpack.c.l.b16 %v2548
      %v3008 = vunpack.c.h.b16 %v2548
      %v3009 = vunpack.c.l.b16 %v2549
      %v3010 = vunpack.c.h.b16 %v2549
      %v3011 = vunpack.c.l.b16 %v2550
      %v3012 = vunpack.c.l.b16 %v2551
      %v3013 = vunpack.c.h.b16 %v2551
      %v3014 = vunpack.c.l.b16 %v2552
      %v3015 = vunpack.c.h.b16 %v2552
      %v3016 = vunpack.c.l.b16 %v2553
      %v3017 = vunpack.c.h.b16 %v2553
      %v3018 = vunpack.c.l.b16 %v2554
      %v3019 = vunpack.c.l.b16 %v2555
      %v3020 = vunpack.c.h.b16 %v2555
      %v3021 = vunpack.c.l.b16 %v2556
      %v3022 = vunpack.c.h.b16 %v2556
      %v3023 = vunpack.c.l.b16 %v2557
      %v3024 = vunpack.c.h.b16 %v2557
      %v3025 = vunpack.c.l.b16 %v2558
      %v3026 = vunpack.c.l.b16 %v2559
      %v3027 = vunpack.c.h.b16 %v2559
      %v3028 = vunpack.c.l.b16 %v2560
      %v3029 = vunpack.c.h.b16 %v2560
      %v3030 = vunpack.c.l.b16 %v2561
      %v3031 = vunpack.c.h.b16 %v2561
      %v3032 = vunpack.c.l.b16 %v2562
      %v3033 = vunpack.c.l.b16 %v2563
      %v3034 = vunpack.c.h.b16 %v2563
      %v3035 = vunpack.c.l.b16 %v2564
      %v3036 = vunpack.c.h.b16 %v2564
      %v3037 = vunpack.c.l.b16 %v2565
      %v3038 = vunpack.c.h.b16 %v2565
      %v3039 = vunpack.c.l.b16 %v2566
      %v3040 = vunpack.c.l.b16 %v2567
      %v3041 = vunpack.c.h.b16 %v2567
      %v3042 = vunpack.c.l.b16 %v2568
      %v3043 = vunpack.c.h.b16 %v2568
      %v3044 = vunpack.c.l.b16 %v2569
      %v3045 = vunpack.c.h.b16 %v2569
      %v3046 = vunpack.c.l.b16 %v2570
      %v3047 = vunpack.c.l.b16 %v2571
      %v3048 = vunpack.c.h.b16 %v2571
      %v3049 = vunpack.c.l.b16 %v2572
      %v3050 = vunpack.c.h.b16 %v2572
      %v3051 = vunpack.c.l.b16 %v2573
      %v3052 = vunpack.c.h.b16 %v2573
      %v3053 = vunpack.c.l.b16 %v2574
      %v3054 = vunpack.c.l.b16 %v2575
      %v3055 = vunpack.c.h.b16 %v2575
      %v3056 = vunpack.c.l.b16 %v2576
      %v3057 = vunpack.c.h.b16 %v2576
      %v3058 = vunpack.c.l.b16 %v2577
      %v3059 = vunpack.c.h.b16 %v2577
      %v3060 = vunpack.c.l.b16 %v2578
      %v3061 = vunpack.c.l.b16 %v2579
      %v3062 = vunpack.c.h.b16 %v2579
      %v3063 = vunpack.c.l.b16 %v2580
      %v3064 = vunpack.c.h.b16 %v2580
      %v3065 = vunpack.c.l.b16 %v2581
      %v3066 = vunpack.c.h.b16 %v2581
      %v3067 = vunpack.c.l.b16 %v2582
      %v3068 = vunpack.c.l.b16 %v2583
      %v3069 = vunpack.c.h.b16 %v2583
      %v3070 = vunpack.c.l.b16 %v2584
      %v3071 = vunpack.c.h.b16 %v2584
      %v3072 = vunpack.c.l.b16 %v2585
      %v3073 = vunpack.c.h.b16 %v2585
      %v3074 = vunpack.c.l.b16 %v2586
      %v3075 = vunpack.c.l.b16 %v2587
      %v3076 = vunpack.c.h.b16 %v2587
      %v3077 = vunpack.c.l.b16 %v2588
      %v3078 = vunpack.c.h.b16 %v2588
      %v3079 = vunpack.c.l.b16 %v2589
      %v3080 = vunpack.c.h.b16 %v2589
      %v3081 = vunpack.c.l.b16 %v2590
      %v3082 = vunpack.c.l.b16 %v2591
      %v3083 = vunpack.c.h.b16 %v2591
      %v3084 = vunpack.c.l.b16 %v2592
      %v3085 = vunpack.c.h.b16 %v2592
      %v3086 = vunpack.c.l.b16 %v2593
      %v3087 = vunpack.c.h.b16 %v2593
      %v3088 = vunpack.c.l.b16 %v2594
      %v3089 = vunpack.c.l.b16 %v2595
      %v3090 = vunpack.c.h.b16 %v2595
      %v3091 = vunpack.c.l.b16 %v2596
      %v3092 = vunpack.c.h.b16 %v2596
      %v3093 = vunpack.c.l.b16 %v2597
      %v3094 = vunpack.c.h.b16 %v2597
      %v3095 = vunpack.c.l.b16 %v2598
      %v3096 = vunpack.c.l.b16 %v2599
      %v3097 = vunpack.c.h.b16 %v2599
      %v3098 = vunpack.c.l.b16 %v2600
      %v3099 = vunpack.c.h.b16 %v2600
      %v3100 = vunpack.c.l.b16 %v2601
      %v3101 = vunpack.c.h.b16 %v2601
      %v3102 = vunpack.c.l.b16 %v2602
      %v3103 = vunpack.c.l.b16 %v2603
      %v3104 = vunpack.c.h.b16 %v2603
      %v3105 = vunpack.c.l.b16 %v2604
      %v3106 = vunpack.c.h.b16 %v2604
      %v3107 = vunpack.c.l.b16 %v2605
      %v3108 = vunpack.c.h.b16 %v2605
      %v3109 = vunpack.c.l.b16 %v2606
      %v3110 = vunpack.c.l.b16 %v2607
      %v3111 = vunpack.c.h.b16 %v2607
      %v3112 = vunpack.c.l.b16 %v2608
      %v3113 = vunpack.c.h.b16 %v2608
      %v3114 = vunpack.c.l.b16 %v2609
      %v3115 = vunpack.c.h.b16 %v2609
      %v3116 = vunpack.c.l.b16 %v2610
      %v3117 = vunpack.c.l.b16 %v2611
      %v3118 = vunpack.c.h.b16 %v2611
      %v3119 = vunpack.c.l.b16 %v2612
      %v3120 = vunpack.c.h.b16 %v2612
      %v3121 = vunpack.c.l.b16 %v2613
      %v3122 = vunpack.c.h.b16 %v2613
      %v3123 = vunpack.c.l.b16 %v2614
      %v3124 = vunpack.c.l.b16 %v2615
      %v3125 = vunpack.c.h.b16 %v2615
      %v3126 = vunpack.c.l.b16 %v2616
      %v3127 = vunpack.c.h.b16 %v2616
      %v3128 = vunpack.c.l.b16 %v2617
      %v3129 = vunpack.c.h.b16 %v2617
      %v3130 = vunpack.c.l.b16 %v2618
      %v3131 = vunpack.c.l.b16 %v2619
      %v3132 = vunpack.c.h.b16 %v2619
      %v3133 = vunpack.c.l.b16 %v2620
      %v3134 = vunpack.c.h.b16 %v2620
      %v3135 = vunpack.c.l.b16 %v2621
      %v3136 = vunpack.c.h.b16 %v2621
      %v3137 = vunpack.c.l.b16 %v2622
      %v3138 = vunpack.c.l.b16 %v2623
      %v3139 = vunpack.c.h.b16 %v2623
      %v3140 = vunpack.c.l.b16 %v2624
      %v3141 = vunpack.c.h.b16 %v2624
      %v3142 = vunpack.c.l.b16 %v2625
      %v3143 = vunpack.c.h.b16 %v2625
      %v3144 = vunpack.c.l.b16 %v2626
      %v3145 = vunpack.c.l.b16 %v2627
      %v3146 = vunpack.c.h.b16 %v2627
      %v3147 = vunpack.c.l.b16 %v2628
      %v3148 = vunpack.c.h.b16 %v2628
      %v3149 = vunpack.c.l.b16 %v2629
      %v3150 = vunpack.c.h.b16 %v2629
      %v3151 = vunpack.c.l.b16 %v2630
      %v3152 = vunpack.c.l.b16 %v2631
      %v3153 = vunpack.c.h.b16 %v2631
      %v3154 = vunpack.c.l.b16 %v2632
      %v3155 = vunpack.c.h.b16 %v2632
      %v3156 = vunpack.c.l.b16 %v2633
      %v3157 = vunpack.c.h.b16 %v2633
      %v3158 = vunpack.c.l.b16 %v2634
      %v3159 = vunpack.c.l.b16 %v2635
      %v3160 = vunpack.c.h.b16 %v2635
      %v3161 = vunpack.c.l.b16 %v2636
      %v3162 = vunpack.c.h.b16 %v2636
      %v3163 = vunpack.c.l.b16 %v2637
      %v3164 = vunpack.c.h.b16 %v2637
      %v3165 = vunpack.c.l.b16 %v2638
      %v3166 = vunpack.c.l.b16 %v2639
      %v3167 = vunpack.c.h.b16 %v2639
      %v3168 = vunpack.c.l.b16 %v2640
      %v3169 = vunpack.c.h.b16 %v2640
      %v3170 = vunpack.c.l.b16 %v2641
      %v3171 = vunpack.c.h.b16 %v2641
      %v3172 = vunpack.c.l.b16 %v2642
      %v3173 = vunpack.c.l.b16 %v2643
      %v3174 = vunpack.c.h.b16 %v2643
      %v3175 = vunpack.c.l.b16 %v2644
      %v3176 = vunpack.c.h.b16 %v2644
      %v3177 = vunpack.c.l.b16 %v2645
      %v3178 = vunpack.c.h.b16 %v2645
      %v3179 = vunpack.c.l.b16 %v2646
      %v3180 = vunpack.c.l.b16 %v2647
      %v3181 = vunpack.c.h.b16 %v2647
      %v3182 = vunpack.c.l.b16 %v2648
      %v3183 = vunpack.c.h.b16 %v2648
      %v3184 = vunpack.c.l.b16 %v2649
      %v3185 = vunpack.c.h.b16 %v2649
      %v3186 = vunpack.c.l.b16 %v2650
      %v3187 = vunpack.c.l.b16 %v2651
      %v3188 = vunpack.c.h.b16 %v2651
      %v3189 = vunpack.c.l.b16 %v2652
      %v3190 = vunpack.c.h.b16 %v2652
      %v3191 = vunpack.c.l.b16 %v2653
      %v3192 = vunpack.c.h.b16 %v2653
      %v3193 = vunpack.c.l.b16 %v2654
      %v3194 = vunpack.c.l.b16 %v2655
      %v3195 = vunpack.c.h.b16 %v2655
      %v3196 = vunpack.c.l.b16 %v2656
      %v3197 = vunpack.c.h.b16 %v2656
      %v3198 = vunpack.c.l.b16 %v2657
      %v3199 = vunpack.c.h.b16 %v2657
      %v3200 = vunpack.c.l.b16 %v2658
      %v3201 = vunpack.c.l.b16 %v2659
      %v3202 = vunpack.c.h.b16 %v2659
      %v3203 = vunpack.c.l.b16 %v2660
      %v3204 = vunpack.c.h.b16 %v2660
      %v3205 = vunpack.c.l.b16 %v2661
      %v3206 = vunpack.c.h.b16 %v2661
      %v3207 = vunpack.c.l.b16 %v2662
      %v3208 = vunpack.c.l.b16 %v2663
      %v3209 = vunpack.c.h.b16 %v2663
      %v3210 = vunpack.c.l.b16 %v2664
      %v3211 = vunpack.c.h.b16 %v2664
      %v3212 = vunpack.c.l.b16 %v2665
      %v3213 = vunpack.c.h.b16 %v2665
      %v3214 = vunpack.c.l.b16 %v2666
      %v3215 = vunpack.c.l.b16 %v2667
      %v3216 = vunpack.c.h.b16 %v2667
      %v3217 = vunpack.c.l.b16 %v2668
      %v3218 = vunpack.c.h.b16 %v2668
      %v3219 = vunpack.c.l.b16 %v2669
      %v3220 = vunpack.c.h.b16 %v2669
      %v3221 = vunpack.c.l.b16 %v2670
      %v3222 = vunpack.c.l.b16 %v2671
      %v3223 = vunpack.c.h.b16 %v2671
      %v3224 = vunpack.c.l.b16 %v2672
      %v3225 = vunpack.c.h.b16 %v2672
      %v3226 = vunpack.c.l.b16 %v2673
      %v3227 = vunpack.c.h.b16 %v2673
      %v3228 = vunpack.c.l.b16 %v2674
      %v3229 = vunpack.c.l.b16 %v2675
      %v3230 = vunpack.c.h.b16 %v2675
      %v3231 = vunpack.c.l.b16 %v2676
      %v3232 = vunpack.c.h.b16 %v2676
      %v3233 = vunpack.c.l.b16 %v2677
      %v3234 = vunpack.c.h.b16 %v2677
      %v3235 = vunpack.c.l.b16 %v2678
      %v3236 = vunpack.c.l.b16 %v2679
      %v3237 = vunpack.c.h.b16 %v2679
      %v3238 = vunpack.c.l.b16 %v2680
      %v3239 = vunpack.c.h.b16 %v2680
      %v3240 = vunpack.c.l.b16 %v2681
      %v3241 = vunpack.c.h.b16 %v2681
      %v3242 = vunpack.c.l.b16 %v2682
      %v3243 = vunpack.c.l.b16 %v2683
      %v3244 = vunpack.c.h.b16 %v2683
      %v3245 = vunpack.c.l.b16 %v2684
      %v3246 = vunpack.c.h.b16 %v2684
      %v3247 = vunpack.c.l.b16 %v2685
      %v3248 = vunpack.c.h.b16 %v2685
      %v3249 = vunpack.c.l.b16 %v2686
      %v3250 = vunpack.c.l.b16 %v2687
      %v3251 = vunpack.c.h.b16 %v2687
      %v3252 = vunpack.c.l.b16 %v2688
      %v3253 = vunpack.c.h.b16 %v2688
      %v3254 = vunpack.c.l.b16 %v2689
      %v3255 = vunpack.c.h.b16 %v2689
      %v3256 = vunpack.c.l.b16 %v2690
      %v3257 = vunpack.c.l.b16 %v2691
      %v3258 = vunpack.c.h.b16 %v2691
      %v3259 = vunpack.c.l.b16 %v2692
      %v3260 = vunpack.c.h.b16 %v2692
      %v3261 = vunpack.c.l.b16 %v2693
      %v3262 = vunpack.c.h.b16 %v2693
      %v3263 = vunpack.c.l.b16 %v2694
      %v3264 = vunpack.c.l.b16 %v2695
      %v3265 = vunpack.c.h.b16 %v2695
      %v3266 = vunpack.c.l.b16 %v2696
      %v3267 = vunpack.c.h.b16 %v2696
      %v3268 = vunpack.c.l.b16 %v2697
      %v3269 = vunpack.c.h.b16 %v2697
      %v3270 = vunpack.c.l.b16 %v2698
      %v3271 = vunpack.c.l.b16 %v2699
      %v3272 = vunpack.c.h.b16 %v2699
      %v3273 = vunpack.c.l.b16 %v2700
      %v3274 = vunpack.c.h.b16 %v2700
      %v3275 = vunpack.c.l.b16 %v2701
      %v3276 = vunpack.c.h.b16 %v2701
      %v3277 = vunpack.c.l.b16 %v2702
      %v3278 = vunpack.c.l.b16 %v2703
      %v3279 = vunpack.c.h.b16 %v2703
      %v3280 = vunpack.c.l.b16 %v2704
      %v3281 = vunpack.c.h.b16 %v2704
      %v3282 = vunpack.c.l.b16 %v2705
      %v3283 = vunpack.c.h.b16 %v2705
      %v3284 = vunpack.c.l.b16 %v2706
      %v3285 = vunpack.c.l.b16 %v2707
      %v3286 = vunpack.c.h.b16 %v2707
      %v3287 = vunpack.c.l.b16 %v2708
      %v3288 = vunpack.c.h.b16 %v2708
      %v3289 = vunpack.c.l.b16 %v2709
      %v3290 = vunpack.c.h.b16 %v2709
      %v3291 = vunpack.c.l.b16 %v2710
      %v3292 = vunpack.c.l.b16 %v2711
      %v3293 = vunpack.c.h.b16 %v2711
      %v3294 = vunpack.c.l.b16 %v2712
      %v3295 = vunpack.c.h.b16 %v2712
      %v3296 = vunpack.c.l.b16 %v2713
      %v3297 = vunpack.c.h.b16 %v2713
      %v3298 = vunpack.c.l.b16 %v2714
      %v3299 = vunpack.c.l.b16 %v2715
      %v3300 = vunpack.c.h.b16 %v2715
      %v3301 = vunpack.c.l.b16 %v2716
      %v3302 = vunpack.c.h.b16 %v2716
      %v3303 = vunpack.c.l.b16 %v2717
      %v3304 = vunpack.c.h.b16 %v2717
      %v3305 = vunpack.c.l.b16 %v2718
      %v3306 = vpack.c.b16 %v2963, %v2956
      %v3307 = vpack.c.b16 %v2964, %v2957
      %v3308 = vpack.c.b16 %v2965, %v2958
      %v3309 = vpack.c.b16 %v2966, %v2959
      %v3310 = vpack.c.b16 %v2967, %v2960
      %v3311 = vpack.c.b16 %v2968, %v2961
      %v3312 = vpack.c.b16 %v2969, %v2962
      %v3313 = vpack.c.b16 %v2977, %v2970
      %v3314 = vpack.c.b16 %v2978, %v2971
      %v3315 = vpack.c.b16 %v2979, %v2972
      %v3316 = vpack.c.b16 %v2980, %v2973
      %v3317 = vpack.c.b16 %v2981, %v2974
      %v3318 = vpack.c.b16 %v2982, %v2975
      %v3319 = vpack.c.b16 %v2983, %v2976
      %v3320 = vpack.c.b16 %v2991, %v2984
      %v3321 = vpack.c.b16 %v2992, %v2985
      %v3322 = vpack.c.b16 %v2993, %v2986
      %v3323 = vpack.c.b16 %v2994, %v2987
      %v3324 = vpack.c.b16 %v2995, %v2988
      %v3325 = vpack.c.b16 %v2996, %v2989
      %v3326 = vpack.c.b16 %v2997, %v2990
      %v3327 = vpack.c.b16 %v3005, %v2998
      %v3328 = vpack.c.b16 %v3006, %v2999
      %v3329 = vpack.c.b16 %v3007, %v3000
      %v3330 = vpack.c.b16 %v3008, %v3001
      %v3331 = vpack.c.b16 %v3009, %v3002
      %v3332 = vpack.c.b16 %v3010, %v3003
      %v3333 = vpack.c.b16 %v3011, %v3004
      %v3334 = vpack.c.b16 %v3019, %v3012
      %v3335 = vpack.c.b16 %v3020, %v3013
      %v3336 = vpack.c.b16 %v3021, %v3014
      %v3337 = vpack.c.b16 %v3022, %v3015
      %v3338 = vpack.c.b16 %v3023, %v3016
      %v3339 = vpack.c.b16 %v3024, %v3017
      %v3340 = vpack.c.b16 %v3025, %v3018
      %v3341 = vpack.c.b16 %v3033, %v3026
      %v3342 = vpack.c.b16 %v3034, %v3027
      %v3343 = vpack.c.b16 %v3035, %v3028
      %v3344 = vpack.c.b16 %v3036, %v3029
      %v3345 = vpack.c.b16 %v3037, %v3030
      %v3346 = vpack.c.b16 %v3038, %v3031
      %v3347 = vpack.c.b16 %v3039, %v3032
      %v3348 = vpack.c.b16 %v3047, %v3040
      %v3349 = vpack.c.b16 %v3048, %v3041
      %v3350 = vpack.c.b16 %v3049, %v3042
      %v3351 = vpack.c.b16 %v3050, %v3043
      %v3352 = vpack.c.b16 %v3051, %v3044
      %v3353 = vpack.c.b16 %v3052, %v3045
      %v3354 = vpack.c.b16 %v3053, %v3046
      %v3355 = vpack.c.b16 %v3061, %v3054
      %v3356 = vpack.c.b16 %v3062, %v3055
      %v3357 = vpack.c.b16 %v3063, %v3056
      %v3358 = vpack.c.b16 %v3064, %v3057
      %v3359 = vpack.c.b16 %v3065, %v3058
      %v3360 = vpack.c.b16 %v3066, %v3059
      %v3361 = vpack.c.b16 %v3067, %v3060
      %v3362 = vpack.c.b16 %v3075, %v3068
      %v3363 = vpack.c.b16 %v3076, %v3069
      %v3364 = vpack.c.b16 %v3077, %v3070
      %v3365 = vpack.c.b16 %v3078, %v3071
      %v3366 = vpack.c.b16 %v3079, %v3072
      %v3367 = vpack.c.b16 %v3080, %v3073
      %v3368 = vpack.c.b16 %v3081, %v3074
      %v3369 = vpack.c.b16 %v3089, %v3082
      %v3370 = vpack.c.b16 %v3090, %v3083
      %v3371 = vpack.c.b16 %v3091, %v3084
      %v3372 = vpack.c.b16 %v3092, %v3085
      %v3373 = vpack.c.b16 %v3093, %v3086
      %v3374 = vpack.c.b16 %v3094, %v3087
      %v3375 = vpack.c.b16 %v3095, %v3088
      %v3376 = vpack.c.b16 %v3103, %v3096
      %v3377 = vpack.c.b16 %v3104, %v3097
      %v3378 = vpack.c.b16 %v3105, %v3098
      %v3379 = vpack.c.b16 %v3106, %v3099
      %v3380 = vpack.c.b16 %v3107, %v3100
      %v3381 = vpack.c.b16 %v3108, %v3101
      %v3382 = vpack.c.b16 %v3109, %v3102
      %v3383 = vpack.c.b16 %v3117, %v3110
      %v3384 = vpack.c.b16 %v3118, %v3111
      %v3385 = vpack.c.b16 %v3119, %v3112
      %v3386 = vpack.c.b16 %v3120, %v3113
      %v3387 = vpack.c.b16 %v3121, %v3114
      %v3388 = vpack.c.b16 %v3122, %v3115
      %v3389 = vpack.c.b16 %v3123, %v3116
      %v3390 = vpack.c.b16 %v3131, %v3124
      %v3391 = vpack.c.b16 %v3132, %v3125
      %v3392 = vpack.c.b16 %v3133, %v3126
      %v3393 = vpack.c.b16 %v3134, %v3127
      %v3394 = vpack.c.b16 %v3135, %v3128
      %v3395 = vpack.c.b16 %v3136, %v3129
      %v3396 = vpack.c.b16 %v3137, %v3130
      %v3397 = vpack.c.b16 %v3145, %v3138
      %v3398 = vpack.c.b16 %v3146, %v3139
      %v3399 = vpack.c.b16 %v3147, %v3140
      %v3400 = vpack.c.b16 %v3148, %v3141
      %v3401 = vpack.c.b16 %v3149, %v3142
      %v3402 = vpack.c.b16 %v3150, %v3143
      %v3403 = vpack.c.b16 %v3151, %v3144
      %v3404 = vpack.c.b16 %v3159, %v3152
      %v3405 = vpack.c.b16 %v3160, %v3153
      %v3406 = vpack.c.b16 %v3161, %v3154
      %v3407 = vpack.c.b16 %v3162, %v3155
      %v3408 = vpack.c.b16 %v3163, %v3156
      %v3409 = vpack.c.b16 %v3164, %v3157
      %v3410 = vpack.c.b16 %v3165, %v3158
      %v3411 = vpack.c.b16 %v3173, %v3166
      %v3412 = vpack.c.b16 %v3174, %v3167
      %v3413 = vpack.c.b16 %v3175, %v3168
      %v3414 = vpack.c.b16 %v3176, %v3169
      %v3415 = vpack.c.b16 %v3177, %v3170
      %v3416 = vpack.c.b16 %v3178, %v3171
      %v3417 = vpack.c.b16 %v3179, %v3172
      %v3418 = vpack.c.b16 %v3187, %v3180
      %v3419 = vpack.c.b16 %v3188, %v3181
      %v3420 = vpack.c.b16 %v3189, %v3182
      %v3421 = vpack.c.b16 %v3190, %v3183
      %v3422 = vpack.c.b16 %v3191, %v3184
      %v3423 = vpack.c.b16 %v3192, %v3185
      %v3424 = vpack.c.b16 %v3193, %v3186
      %v3425 = vpack.c.b16 %v3201, %v3194
      %v3426 = vpack.c.b16 %v3202, %v3195
      %v3427 = vpack.c.b16 %v3203, %v3196
      %v3428 = vpack.c.b16 %v3204, %v3197
      %v3429 = vpack.c.b16 %v3205, %v3198
      %v3430 = vpack.c.b16 %v3206, %v3199
      %v3431 = vpack.c.b16 %v3207, %v3200
      %v3432 = vpack.c.b16 %v3215, %v3208
      %v3433 = vpack.c.b16 %v3216, %v3209
      %v3434 = vpack.c.b16 %v3217, %v3210
      %v3435 = vpack.c.b16 %v3218, %v3211
      %v3436 = vpack.c.b16 %v3219, %v3212
      %v3437 = vpack.c.b16 %v3220, %v3213
      %v3438 = vpack.c.b16 %v3221, %v3214
      %v3439 = vpack.c.b16 %v3229, %v3222
      %v3440 = vpack.c.b16 %v3230, %v3223
      %v3441 = vpack.c.b16 %v3231, %v3224
      %v3442 = vpack.c.b16 %v3232, %v3225
      %v3443 = vpack.c.b16 %v3233, %v3226
      %v3444 = vpack.c.b16 %v3234, %v3227
      %v3445 = vpack.c.b16 %v3235, %v3228
      %v3446 = vpack.c.b16 %v3243, %v3236
      %v3447 = vpack.c.b16 %v3244, %v3237
      %v3448 = vpack.c.b16 %v3245, %v3238
      %v3449 = vpack.c.b16 %v3246, %v3239
      %v3450 = vpack.c.b16 %v3247, %v3240
      %v3451 = vpack.c.b16 %v3248, %v3241
      %v3452 = vpack.c.b16 %v3249, %v3242
      %v3453 = vpack.c.b16 %v3257, %v3250
      %v3454 = vpack.c.b16 %v3258, %v3251
      %v3455 = vpack.c.b16 %v3259, %v3252
      %v3456 = vpack.c.b16 %v3260, %v3253
      %v3457 = vpack.c.b16 %v3261, %v3254
      %v3458 = vpack.c.b16 %v3262, %v3255
      %v3459 = vpack.c.b16 %v3263, %v3256
      %v3460 = vpack.c.b16 %v3271, %v3264
      %v3461 = vpack.c.b16 %v3272, %v3265
      %v3462 = vpack.c.b16 %v3273, %v3266
      %v3463 = vpack.c.b16 %v3274, %v3267
      %v3464 = vpack.c.b16 %v3275, %v3268
      %v3465 = vpack.c.b16 %v3276, %v3269
      %v3466 = vpack.c.b16 %v3277, %v3270
      %v3467 = vpack.c.b16 %v3285, %v3278
      %v3468 = vpack.c.b16 %v3286, %v3279
      %v3469 = vpack.c.b16 %v3287, %v3280
      %v3470 = vpack.c.b16 %v3288, %v3281
      %v3471 = vpack.c.b16 %v3289, %v3282
      %v3472 = vpack.c.b16 %v3290, %v3283
      %v3473 = vpack.c.b16 %v3291, %v3284
      %v3474 = vpack.c.b16 %v3299, %v3292
      %v3475 = vpack.c.b16 %v3300, %v3293
      %v3476 = vpack.c.b16 %v3301, %v3294
      %v3477 = vpack.c.b16 %v3302, %v3295
      %v3478 = vpack.c.b16 %v3303, %v3296
      %v3479 = vpack.c.b16 %v3304, %v3297
      %v3480 = vpack.c.b16 %v3305, %v3298
      %v3657 = vsel %vm1673, %v2518, 0
      %3659 = vmatprep.subr.bf16.mxu0 %v3307
      %3660 = vmatpush1.bf16.msra.mxu0 %v3306
      %3661 = vmatprep.subr.bf16.mxu0 %v3314
      %3662 = vmatpush1.bf16.msra.mxu0 %v3313
      %3663 = vmatprep.subr.bf16.mxu0 %v3321
      %3664 = vmatpush1.bf16.msra.mxu0 %v3320
      %3665 = vmatprep.subr.bf16.mxu0 %v3328
      %3666 = vmatpush1.bf16.msra.mxu0 %v3327
      %3667 = vmatprep.subr.bf16.mxu0 %v3335
      %3668 = vmatpush1.bf16.msra.mxu0 %v3334
      %3669 = vmatprep.subr.bf16.mxu0 %v3342
      %3670 = vmatpush1.bf16.msra.mxu0 %v3341
      %3671 = vmatprep.subr.bf16.mxu0 %v3349
      %3672 = vmatpush1.bf16.msra.mxu0 %v3348
      %3673 = vmatprep.subr.bf16.mxu0 %v3356
      %3674 = vmatpush1.bf16.msra.mxu0 %v3355
      %3675 = vmatprep.subr.bf16.mxu0 %v3363
      %3676 = vmatpush1.bf16.msra.mxu0 %v3362
      %3677 = vmatprep.subr.bf16.mxu0 %v3370
      %3678 = vmatpush1.bf16.msra.mxu0 %v3369
      %3679 = vmatprep.subr.bf16.mxu0 %v3377
      %3680 = vmatpush1.bf16.msra.mxu0 %v3376
      %3681 = vmatprep.subr.bf16.mxu0 %v3384
      %3682 = vmatpush1.bf16.msra.mxu0 %v3383
      %3683 = vmatprep.subr.bf16.mxu0 %v3391
      %3684 = vmatpush1.bf16.msra.mxu0 %v3390
      %3685 = vmatprep.subr.bf16.mxu0 %v3398
      %3686 = vmatpush1.bf16.msra.mxu0 %v3397
      %3687 = vmatprep.subr.bf16.mxu0 %v3405
      %3688 = vmatpush1.bf16.msra.mxu0 %v3404
      %3689 = vmatprep.subr.bf16.mxu0 %v3412
      %3690 = vmatpush1.bf16.msra.mxu0 %v3411
      %3691 = vmatprep.mubr.bf16.mxu0 %v2516
      %3692 = vmatmul.mubr.bf16.gmra.mrb[0].mxu0 %v2515
      %v3693 = vpop.f32.mrb[0].mxu0
      %v3694 = vadd.f32 %v2724, %v3693
      %v3695 = vpop.f32.mrb[0].mxu0
      %v3696 = vadd.f32 %v2728, %v3695
      %v3697 = vpop.f32.mrb[0].mxu0
      %v3698 = vadd.f32 %v2724, %v3697
      %v3699 = vpop.f32.mrb[0].mxu0
      %v3700 = vadd.f32 %v2728, %v3699
      %3701 = vdwg.mxu0
      %3702 = vmatprep.subr.bf16.mxu0 %v3419
      %3703 = vmatpush1.bf16.msra.mxu0 %v3418
      %3704 = vmatprep.subr.bf16.mxu0 %v3426
      %3705 = vmatpush1.bf16.msra.mxu0 %v3425
      %3706 = vmatprep.subr.bf16.mxu0 %v3433
      %3707 = vmatpush1.bf16.msra.mxu0 %v3432
      %3708 = vmatprep.subr.bf16.mxu0 %v3440
      %3709 = vmatpush1.bf16.msra.mxu0 %v3439
      %3710 = vmatprep.subr.bf16.mxu0 %v3447
      %3711 = vmatpush1.bf16.msra.mxu0 %v3446
      %3712 = vmatprep.subr.bf16.mxu0 %v3454
      %3713 = vmatpush1.bf16.msra.mxu0 %v3453
      %3714 = vmatprep.subr.bf16.mxu0 %v3461
      %3715 = vmatpush1.bf16.msra.mxu0 %v3460
      %3716 = vmatprep.subr.bf16.mxu0 %v3468
      %3717 = vmatpush1.bf16.msra.mxu0 %v3467
      %3718 = vmatprep.subr.bf16.mxu0 %v3475
      %3719 = vmatpush1.bf16.msra.mxu0 %v3474
      %3720 = vmatprep.subr.bf16.mxu0 0
      %3721 = vmatpush1.bf16.msra.mxu0 0
      %3722 = vmatprep.subr.bf16.mxu0 0
      %3723 = vmatpush1.bf16.msra.mxu0 0
      %3724 = vmatprep.subr.bf16.mxu0 0
      %3725 = vmatpush1.bf16.msra.mxu0 0
      %3726 = vmatprep.subr.bf16.mxu0 0
      %3727 = vmatpush1.bf16.msra.mxu0 0
      %3728 = vmatprep.subr.bf16.mxu0 0
      %3729 = vmatpush1.bf16.msra.mxu0 0
      %3730 = vmatprep.subr.bf16.mxu0 0
      %3731 = vmatpush1.bf16.msra.mxu0 0
      %3732 = vmatprep.subr.bf16.mxu0 0
      %3733 = vmatpush1.bf16.msra.mxu0 0
      %3734 = vmatprep.mubr.bf16.mxu0 %v3657
      %3735 = vmatmul.mubr.bf16.gmra.mrb[0].mxu0 %v2517
      %v3736 = vpop.f32.mrb[0].mxu0
      %v3737 = vadd.f32 %v3694, %v3736
      %v3738 = vpop.f32.mrb[0].mxu0
      %v3739 = vadd.f32 %v3696, %v3738
      %v3740 = vpop.f32.mrb[0].mxu0
      %v3741 = vadd.f32 %v3698, %v3740
      %v3742 = vpop.f32.mrb[0].mxu0
      %v3743 = vadd.f32 %v3700, %v3742
      %3744 = vdwg.mxu0
      %3745 = vmatprep.subr.bf16.mxu0 %v3309
      %3746 = vmatpush1.bf16.msra.mxu0 %v3308
      %3747 = vmatprep.subr.bf16.mxu0 %v3316
      %3748 = vmatpush1.bf16.msra.mxu0 %v3315
      %3749 = vmatprep.subr.bf16.mxu0 %v3323
      %3750 = vmatpush1.bf16.msra.mxu0 %v3322
      %3751 = vmatprep.subr.bf16.mxu0 %v3330
      %3752 = vmatpush1.bf16.msra.mxu0 %v3329
      %3753 = vmatprep.subr.bf16.mxu0 %v3337
      %3754 = vmatpush1.bf16.msra.mxu0 %v3336
      %3755 = vmatprep.subr.bf16.mxu0 %v3344
      %3756 = vmatpush1.bf16.msra.mxu0 %v3343
      %3757 = vmatprep.subr.bf16.mxu0 %v3351
      %3758 = vmatpush1.bf16.msra.mxu0 %v3350
      %3759 = vmatprep.subr.bf16.mxu0 %v3358
      %3760 = vmatpush1.bf16.msra.mxu0 %v3357
      %3761 = vmatprep.subr.bf16.mxu0 %v3365
      %3762 = vmatpush1.bf16.msra.mxu0 %v3364
      %3763 = vmatprep.subr.bf16.mxu0 %v3372
      %3764 = vmatpush1.bf16.msra.mxu0 %v3371
      %3765 = vmatprep.subr.bf16.mxu0 %v3379
      %3766 = vmatpush1.bf16.msra.mxu0 %v3378
      %3767 = vmatprep.subr.bf16.mxu0 %v3386
      %3768 = vmatpush1.bf16.msra.mxu0 %v3385
      %3769 = vmatprep.subr.bf16.mxu0 %v3393
      %3770 = vmatpush1.bf16.msra.mxu0 %v3392
      %3771 = vmatprep.subr.bf16.mxu0 %v3400
      %3772 = vmatpush1.bf16.msra.mxu0 %v3399
      %3773 = vmatprep.subr.bf16.mxu0 %v3407
      %3774 = vmatpush1.bf16.msra.mxu0 %v3406
      %3775 = vmatprep.subr.bf16.mxu0 %v3414
      %3776 = vmatpush1.bf16.msra.mxu0 %v3413
      %3777 = vmatprep.mubr.bf16.mxu0 %v2516
      %3778 = vmatmul.mubr.bf16.gmra.mrb[0].mxu0 %v2515
      %v3779 = vpop.f32.mrb[0].mxu0
      %v3780 = vadd.f32 %v2732, %v3779
      %v3781 = vpop.f32.mrb[0].mxu0
      %v3782 = vadd.f32 %v2736, %v3781
      %v3783 = vpop.f32.mrb[0].mxu0
      %v3784 = vadd.f32 %v2732, %v3783
      %v3785 = vpop.f32.mrb[0].mxu0
      %v3786 = vadd.f32 %v2736, %v3785
      %3787 = vdwg.mxu0
      %3788 = vmatprep.subr.bf16.mxu0 %v3421
      %3789 = vmatpush1.bf16.msra.mxu0 %v3420
      %3790 = vmatprep.subr.bf16.mxu0 %v3428
      %3791 = vmatpush1.bf16.msra.mxu0 %v3427
      %3792 = vmatprep.subr.bf16.mxu0 %v3435
      %3793 = vmatpush1.bf16.msra.mxu0 %v3434
      %3794 = vmatprep.subr.bf16.mxu0 %v3442
      %3795 = vmatpush1.bf16.msra.mxu0 %v3441
      %3796 = vmatprep.subr.bf16.mxu0 %v3449
      %3797 = vmatpush1.bf16.msra.mxu0 %v3448
      %3798 = vmatprep.subr.bf16.mxu0 %v3456
      %3799 = vmatpush1.bf16.msra.mxu0 %v3455
      %3800 = vmatprep.subr.bf16.mxu0 %v3463
      %3801 = vmatpush1.bf16.msra.mxu0 %v3462
      %3802 = vmatprep.subr.bf16.mxu0 %v3470
      %3803 = vmatpush1.bf16.msra.mxu0 %v3469
      %3804 = vmatprep.subr.bf16.mxu0 %v3477
      %3805 = vmatpush1.bf16.msra.mxu0 %v3476
      %3806 = vmatprep.subr.bf16.mxu0 0
      %3807 = vmatpush1.bf16.msra.mxu0 0
      %3808 = vmatprep.subr.bf16.mxu0 0
      %3809 = vmatpush1.bf16.msra.mxu0 0
      %3810 = vmatprep.subr.bf16.mxu0 0
      %3811 = vmatpush1.bf16.msra.mxu0 0
      %3812 = vmatprep.subr.bf16.mxu0 0
      %3813 = vmatpush1.bf16.msra.mxu0 0
      %3814 = vmatprep.subr.bf16.mxu0 0
      %3815 = vmatpush1.bf16.msra.mxu0 0
      %3816 = vmatprep.subr.bf16.mxu0 0
      %3817 = vmatpush1.bf16.msra.mxu0 0
      %3818 = vmatprep.subr.bf16.mxu0 0
      %3819 = vmatpush1.bf16.msra.mxu0 0
      %3820 = vmatprep.mubr.bf16.mxu0 %v3657
      %3821 = vmatmul.mubr.bf16.gmra.mrb[0].mxu0 %v2517
      %v3822 = vpop.f32.mrb[0].mxu0
      %v3823 = vadd.f32 %v3780, %v3822
      %v3824 = vpop.f32.mrb[0].mxu0
      %v3825 = vadd.f32 %v3782, %v3824
      %v3826 = vpop.f32.mrb[0].mxu0
      %v3827 = vadd.f32 %v3784, %v3826
      %v3828 = vpop.f32.mrb[0].mxu0
      %v3829 = vadd.f32 %v3786, %v3828
      %3830 = vdwg.mxu0
      %3831 = vmatprep.subr.bf16.mxu0 %v3311
      %3832 = vmatpush1.bf16.msra.mxu0 %v3310
      %3833 = vmatprep.subr.bf16.mxu0 %v3318
      %3834 = vmatpush1.bf16.msra.mxu0 %v3317
      %3835 = vmatprep.subr.bf16.mxu0 %v3325
      %3836 = vmatpush1.bf16.msra.mxu0 %v3324
      %3837 = vmatprep.subr.bf16.mxu0 %v3332
      %3838 = vmatpush1.bf16.msra.mxu0 %v3331
      %3839 = vmatprep.subr.bf16.mxu0 %v3339
      %3840 = vmatpush1.bf16.msra.mxu0 %v3338
      %3841 = vmatprep.subr.bf16.mxu0 %v3346
      %3842 = vmatpush1.bf16.msra.mxu0 %v3345
      %3843 = vmatprep.subr.bf16.mxu0 %v3353
      %3844 = vmatpush1.bf16.msra.mxu0 %v3352
      %3845 = vmatprep.subr.bf16.mxu0 %v3360
      %3846 = vmatpush1.bf16.msra.mxu0 %v3359
      %3847 = vmatprep.subr.bf16.mxu0 %v3367
      %3848 = vmatpush1.bf16.msra.mxu0 %v3366
      %3849 = vmatprep.subr.bf16.mxu0 %v3374
      %3850 = vmatpush1.bf16.msra.mxu0 %v3373
      %3851 = vmatprep.subr.bf16.mxu0 %v3381
      %3852 = vmatpush1.bf16.msra.mxu0 %v3380
      %3853 = vmatprep.subr.bf16.mxu0 %v3388
      %3854 = vmatpush1.bf16.msra.mxu0 %v3387
      %3855 = vmatprep.subr.bf16.mxu0 %v3395
      %3856 = vmatpush1.bf16.msra.mxu0 %v3394
      %3857 = vmatprep.subr.bf16.mxu0 %v3402
      %3858 = vmatpush1.bf16.msra.mxu0 %v3401
      %3859 = vmatprep.subr.bf16.mxu0 %v3409
      %3860 = vmatpush1.bf16.msra.mxu0 %v3408
      %3861 = vmatprep.subr.bf16.mxu0 %v3416
      %3862 = vmatpush1.bf16.msra.mxu0 %v3415
      %3863 = vmatprep.mubr.bf16.mxu0 %v2516
      %3864 = vmatmul.mubr.bf16.gmra.mrb[0].mxu0 %v2515
      %v3865 = vpop.f32.mrb[0].mxu0
      %v3866 = vadd.f32 %v2740, %v3865
      %v3867 = vpop.f32.mrb[0].mxu0
      %v3868 = vadd.f32 %v2744, %v3867
      %v3869 = vpop.f32.mrb[0].mxu0
      %v3870 = vadd.f32 %v2740, %v3869
      %v3871 = vpop.f32.mrb[0].mxu0
      %v3872 = vadd.f32 %v2744, %v3871
      %3873 = vdwg.mxu0
      %3874 = vmatprep.subr.bf16.mxu0 %v3423
      %3875 = vmatpush1.bf16.msra.mxu0 %v3422
      %3876 = vmatprep.subr.bf16.mxu0 %v3430
      %3877 = vmatpush1.bf16.msra.mxu0 %v3429
      %3878 = vmatprep.subr.bf16.mxu0 %v3437
      %3879 = vmatpush1.bf16.msra.mxu0 %v3436
      %3880 = vmatprep.subr.bf16.mxu0 %v3444
      %3881 = vmatpush1.bf16.msra.mxu0 %v3443
      %3882 = vmatprep.subr.bf16.mxu0 %v3451
      %3883 = vmatpush1.bf16.msra.mxu0 %v3450
      %3884 = vmatprep.subr.bf16.mxu0 %v3458
      %3885 = vmatpush1.bf16.msra.mxu0 %v3457
      %3886 = vmatprep.subr.bf16.mxu0 %v3465
      %3887 = vmatpush1.bf16.msra.mxu0 %v3464
      %3888 = vmatprep.subr.bf16.mxu0 %v3472
      %3889 = vmatpush1.bf16.msra.mxu0 %v3471
      %3890 = vmatprep.subr.bf16.mxu0 %v3479
      %3891 = vmatpush1.bf16.msra.mxu0 %v3478
      %3892 = vmatprep.subr.bf16.mxu0 0
      %3893 = vmatpush1.bf16.msra.mxu0 0
      %3894 = vmatprep.subr.bf16.mxu0 0
      %3895 = vmatpush1.bf16.msra.mxu0 0
      %3896 = vmatprep.subr.bf16.mxu0 0
      %3897 = vmatpush1.bf16.msra.mxu0 0
      %3898 = vmatprep.subr.bf16.mxu0 0
      %3899 = vmatpush1.bf16.msra.mxu0 0
      %3900 = vmatprep.subr.bf16.mxu0 0
      %3901 = vmatpush1.bf16.msra.mxu0 0
      %3902 = vmatprep.subr.bf16.mxu0 0
      %3903 = vmatpush1.bf16.msra.mxu0 0
      %3904 = vmatprep.subr.bf16.mxu0 0
      %3905 = vmatpush1.bf16.msra.mxu0 0
      %3906 = vmatprep.mubr.bf16.mxu0 %v3657
      %3907 = vmatmul.mubr.bf16.gmra.mrb[0].mxu0 %v2517
      %v3908 = vpop.f32.mrb[0].mxu0
      %v3909 = vadd.f32 %v3866, %v3908
      %v3910 = vpop.f32.mrb[0].mxu0
      %v3911 = vadd.f32 %v3868, %v3910
      %v3912 = vpop.f32.mrb[0].mxu0
      %v3913 = vadd.f32 %v3870, %v3912
      %v3914 = vpop.f32.mrb[0].mxu0
      %v3915 = vadd.f32 %v3872, %v3914
      %3916 = vdwg.mxu0
      %3917 = vmatprep.subr.bf16.mxu0 0
      %3918 = vmatpush1.bf16.msra.mxu0 %v3312
      %3919 = vmatprep.subr.bf16.mxu0 0
      %3920 = vmatpush1.bf16.msra.mxu0 %v3319
      %3921 = vmatprep.subr.bf16.mxu0 0
      %3922 = vmatpush1.bf16.msra.mxu0 %v3326
      %3923 = vmatprep.subr.bf16.mxu0 0
      %3924 = vmatpush1.bf16.msra.mxu0 %v3333
      %3925 = vmatprep.subr.bf16.mxu0 0
      %3926 = vmatpush1.bf16.msra.mxu0 %v3340
      %3927 = vmatprep.subr.bf16.mxu0 0
      %3928 = vmatpush1.bf16.msra.mxu0 %v3347
      %3929 = vmatprep.subr.bf16.mxu0 0
      %3930 = vmatpush1.bf16.msra.mxu0 %v3354
      %3931 = vmatprep.subr.bf16.mxu0 0
      %3932 = vmatpush1.bf16.msra.mxu0 %v3361
      %3933 = vmatprep.subr.bf16.mxu0 0
      %3934 = vmatpush1.bf16.msra.mxu0 %v3368
      %3935 = vmatprep.subr.bf16.mxu0 0
      %3936 = vmatpush1.bf16.msra.mxu0 %v3375
      %3937 = vmatprep.subr.bf16.mxu0 0
      %3938 = vmatpush1.bf16.msra.mxu0 %v3382
      %3939 = vmatprep.subr.bf16.mxu0 0
      %3940 = vmatpush1.bf16.msra.mxu0 %v3389
      %3941 = vmatprep.subr.bf16.mxu0 0
      %3942 = vmatpush1.bf16.msra.mxu0 %v3396
      %3943 = vmatprep.subr.bf16.mxu0 0
      %3944 = vmatpush1.bf16.msra.mxu0 %v3403
      %3945 = vmatprep.subr.bf16.mxu0 0
      %3946 = vmatpush1.bf16.msra.mxu0 %v3410
      %3947 = vmatprep.subr.bf16.mxu0 0
      %3948 = vmatpush1.bf16.msra.mxu0 %v3417
      %3949 = vmatprep.mubr.bf16.mxu0 %v2516
      %3950 = vmatmul.mubr.bf16.gmra.mrb[0].mxu0 %v2515
      %v3951 = vpop.f32.mrb[0].mxu0
      %v3952 = vadd.f32 %v2748, %v3951
      %v3953 = vpop.f32.mrb[0].mxu0
      %v3954 = vpop.f32.mrb[0].mxu0
      %v3955 = vadd.f32 %v2748, %v3954
      %v3956 = vpop.f32.mrb[0].mxu0
      %3957 = vdwg.mxu0
      %3958 = vmatprep.subr.bf16.mxu0 0
      %3959 = vmatpush1.bf16.msra.mxu0 %v3424
      %3960 = vmatprep.subr.bf16.mxu0 0
      %3961 = vmatpush1.bf16.msra.mxu0 %v3431
      %3962 = vmatprep.subr.bf16.mxu0 0
      %3963 = vmatpush1.bf16.msra.mxu0 %v3438
      %3964 = vmatprep.subr.bf16.mxu0 0
      %3965 = vmatpush1.bf16.msra.mxu0 %v3445
      %3966 = vmatprep.subr.bf16.mxu0 0
      %3967 = vmatpush1.bf16.msra.mxu0 %v3452
      %3968 = vmatprep.subr.bf16.mxu0 0
      %3969 = vmatpush1.bf16.msra.mxu0 %v3459
      %3970 = vmatprep.subr.bf16.mxu0 0
      %3971 = vmatpush1.bf16.msra.mxu0 %v3466
      %3972 = vmatprep.subr.bf16.mxu0 0
      %3973 = vmatpush1.bf16.msra.mxu0 %v3473
      %3974 = vmatprep.subr.bf16.mxu0 0
      %3975 = vmatpush1.bf16.msra.mxu0 %v3480
      %3976 = vmatprep.subr.bf16.mxu0 0
      %3977 = vmatpush1.bf16.msra.mxu0 0
      %3978 = vmatprep.subr.bf16.mxu0 0
      %3979 = vmatpush1.bf16.msra.mxu0 0
      %3980 = vmatprep.subr.bf16.mxu0 0
      %3981 = vmatpush1.bf16.msra.mxu0 0
      %3982 = vmatprep.subr.bf16.mxu0 0
      %3983 = vmatpush1.bf16.msra.mxu0 0
      %3984 = vmatprep.subr.bf16.mxu0 0
      %3985 = vmatpush1.bf16.msra.mxu0 0
      %3986 = vmatprep.subr.bf16.mxu0 0
      %3987 = vmatpush1.bf16.msra.mxu0 0
      %3988 = vmatprep.subr.bf16.mxu0 0
      %3989 = vmatpush1.bf16.msra.mxu0 0
      %3990 = vmatprep.mubr.bf16.mxu0 %v3657
      %3991 = vmatmul.mubr.bf16.gmra.mrb[0].mxu0 %v2517
      %v3992 = vpop.f32.mrb[0].mxu0
      %v3993 = vadd.f32 %v3952, %v3992
      %v3994 = vpop.f32.mrb[0].mxu0
      %v3995 = vpop.f32.mrb[0].mxu0
      %v3996 = vadd.f32 %v3955, %v3995
      %v3997 = vpop.f32.mrb[0].mxu0
      %3998 = vdwg.mxu0
      %v3999 = vxor.u32 %v3737, 2147483648
      %v4000 = vxor.u32 %v3739, 2147483648
      %v4001 = vxor.u32 %v3823, 2147483648
      %v4002 = vxor.u32 %v3825, 2147483648
      %v4003 = vxor.u32 %v3909, 2147483648
      %v4004 = vxor.u32 %v3911, 2147483648
      %v4005 = vxor.u32 %v3993, 2147483648
      %v4006 = vxor.u32 %v3741, 2147483648
      %v4007 = vxor.u32 %v3743, 2147483648
      %v4008 = vxor.u32 %v3827, 2147483648
      %v4009 = vxor.u32 %v3829, 2147483648
      %v4010 = vxor.u32 %v3913, 2147483648
      %v4011 = vxor.u32 %v3915, 2147483648
      %v4012 = vxor.u32 %v3996, 2147483648
      %v4013 = vmul.f32 %v3999, 1.442695
      %v4014 = vpow.pop %v4013
      %v4015 = vmul.f32 %v4000, 1.442695
      %v4016 = vpow.pop %v4015
      %v4017 = vmul.f32 %v4001, 1.442695
      %v4018 = vpow.pop %v4017
      %v4019 = vmul.f32 %v4002, 1.442695
      %v4020 = vpow.pop %v4019
      %v4021 = vmul.f32 %v4003, 1.442695
      %v4022 = vpow.pop %v4021
      %v4023 = vmul.f32 %v4004, 1.442695
      %v4024 = vpow.pop %v4023
      %v4025 = vmul.f32 %v4005, 1.442695
      %v4026 = vpow.pop %v4025
      %v4027 = vmul.f32 %v4006, 1.442695
      %v4028 = vpow.pop %v4027
      %v4029 = vmul.f32 %v4007, 1.442695
      %v4030 = vpow.pop %v4029
      %v4031 = vmul.f32 %v4008, 1.442695
      %v4032 = vpow.pop %v4031
      %v4033 = vmul.f32 %v4009, 1.442695
      %v4034 = vpow.pop %v4033
      %v4035 = vmul.f32 %v4010, 1.442695
      %v4036 = vpow.pop %v4035
      %v4037 = vmul.f32 %v4011, 1.442695
      %v4038 = vpow.pop %v4037
      %v4039 = vmul.f32 %v4012, 1.442695
      %v4040 = vpow.pop %v4039
      %v4041 = vadd.f32 %v4014, 1.0
      %v4042 = vadd.f32 %v4016, 1.0
      %v4043 = vadd.f32 %v4018, 1.0
      %v4044 = vadd.f32 %v4020, 1.0
      %v4045 = vadd.f32 %v4022, 1.0
      %v4046 = vadd.f32 %v4024, 1.0
      %v4047 = vadd.f32 %v4026, 1.0
      %v4048 = vadd.f32 %v4028, 1.0
      %v4049 = vadd.f32 %v4030, 1.0
      %v4050 = vadd.f32 %v4032, 1.0
      %v4051 = vadd.f32 %v4034, 1.0
      %v4052 = vadd.f32 %v4036, 1.0
      %v4053 = vadd.f32 %v4038, 1.0
      %v4054 = vadd.f32 %v4040, 1.0
      %v4055 = vrcp.pop %v4041
      %v4056 = vmul.f32 1.0, %v4055
      %v4057 = vrcp.pop %v4042
      %v4058 = vmul.f32 1.0, %v4057
      %v4059 = vrcp.pop %v4043
      %v4060 = vmul.f32 1.0, %v4059
      %v4061 = vrcp.pop %v4044
      %v4062 = vmul.f32 1.0, %v4061
      %v4063 = vrcp.pop %v4045
      %v4064 = vmul.f32 1.0, %v4063
      %v4065 = vrcp.pop %v4046
      %v4066 = vmul.f32 1.0, %v4065
      %v4067 = vrcp.pop %v4047
      %v4068 = vmul.f32 1.0, %v4067
      %v4069 = vrcp.pop %v4048
      %v4070 = vmul.f32 1.0, %v4069
      %v4071 = vrcp.pop %v4049
      %v4072 = vmul.f32 1.0, %v4071
      %v4073 = vrcp.pop %v4050
      %v4074 = vmul.f32 1.0, %v4073
      %v4075 = vrcp.pop %v4051
      %v4076 = vmul.f32 1.0, %v4075
      %v4077 = vrcp.pop %v4052
      %v4078 = vmul.f32 1.0, %v4077
      %v4079 = vrcp.pop %v4053
      %v4080 = vmul.f32 1.0, %v4079
      %v4081 = vrcp.pop %v4054
      %v4082 = vmul.f32 1.0, %v4081
      %4083 = vst [vmem:[%s423] sm:$0xff] %v4056
      %4084 = vst [vmem:[%s423 + $0x8] sm:$0xff] %v4058
      %4085 = vst [vmem:[%s423 + $0x10] sm:$0xff] %v4060
      %4086 = vst [vmem:[%s423 + $0x18] sm:$0xff] %v4062
      %4087 = vst [vmem:[%s423 + $0x20] sm:$0xff] %v4064
      %4088 = vst [vmem:[%s423 + $0x28] sm:$0xff] %v4066
      %4089 = vst.msk [vmem:[%s423 + $0x30] sm:$0xff] %vm1673, %v4068
      %4090 = vst [vmem:[%s423 + $0x38] sm:$0xff] %v4070
      %4091 = vst [vmem:[%s423 + $0x40] sm:$0xff] %v4072
      %4092 = vst [vmem:[%s423 + $0x48] sm:$0xff] %v4074
      %4093 = vst [vmem:[%s423 + $0x50] sm:$0xff] %v4076
      %4094 = vst [vmem:[%s423 + $0x58] sm:$0xff] %v4078
      %4095 = vst [vmem:[%s423 + $0x60] sm:$0xff] %v4080
      %4096 = vst.msk [vmem:[%s423 + $0x68] sm:$0xff] %vm1673, %v4082
      %4097 = vst [vmem:[%s429] sm:$0xff] %v2319
      %4098 = vst [vmem:[%s429 + $0x8] sm:$0xff] %v2322
      %s4099 = smul.u32 2, %s23
      %p4100 = scmp.lt.s32.totalorder %s4099, 5
      %s4101 = scalar_select %p4100, %s4099, 5
      %s4102 = smul.addr %s4101, 7
      %s4103 = smul.addr %s4102, 8
      %s4104 = scalar_lea.vmem %s10, %s4103
      %s4105 = smul.u32 2, %s23
      %p4106 = scmp.lt.s32.totalorder %s4105, 5
      %s4107 = scalar_select %p4106, %s4105, 5
      %s4108 = smul.addr %s4107, 8
      %s4109 = scalar_lea.vmem %s11, %s4108
      // Predicated region
      $region61: #{vae_forward.1} parent=59 // pred_check
        %p4110 = pneg %p261
      $region62: #{vae_forward.1} parent=59 // pred_check_branch
        %4112 = sbr.rel (%p4110) target = $region64
      $region63: #{vae_forward.1} parent=59 // pred_region
        %s4113 = smul.u32 2, %s23
      $region64: #{vae_forward.1} parent=59 // pred_fallthru
        _
      // Predicated region
      $region65: #{vae_forward.1} parent=59 // pred_check
        %p4114 = pneg %p287
      $region66: #{vae_forward.1} parent=59 // pred_check_branch
        %4116 = sbr.rel (%p4114) target = $region68
      $region67: #{vae_forward.1} parent=59 // pred_region
        %s4117 = smul.u32 2, %s23
      $region68: #{vae_forward.1} parent=59 // pred_fallthru
        _
    $region60: #{vae_forward.1} parent=5 // pred_fallthru
      _
    %p4118 = scmp.le.s32.totalorder 2, %s18
    // Predicated region
    $region69: #{vae_forward.1} parent=5 // pred_check
      %p4119 = pneg %p4118
    $region70: #{vae_forward.1} parent=5 // pred_check_branch
      %4121 = sbr.rel (%p4119) target = $region72
    $region71: #{vae_forward.1} parent=5 // pred_region
      %s4122 = ssub.s32 %s18, 2
      // Predicated region
      $region73: #{vae_forward.1} parent=71 // pred_check
        %p4123 = pneg %p267
      $region74: #{vae_forward.1} parent=71 // pred_check_branch
        %4125 = sbr.rel (%p4123) target = $region76
      $region75: #{vae_forward.1} parent=71 // pred_region
        %s4126 = smul.u32 2, %s24
        %p4127 = scmp.lt.s32.totalorder %s4126, 5
        %s4128 = scalar_select %p4127, %s4126, 5
        %s4129 = smul.addr %s4128, 7
        %s4130 = smul.addr %s4129, 8
        %s4131 = scalar_lea.vmem %s10, %s4130
      $region76: #{vae_forward.1} parent=71 // pred_fallthru
        _
      // Predicated region
      $region77: #{vae_forward.1} parent=71 // pred_check
        %p4132 = pneg %p293
      $region78: #{vae_forward.1} parent=71 // pred_check_branch
        %4134 = sbr.rel (%p4132) target = $region80
      $region79: #{vae_forward.1} parent=71 // pred_region
        %s4135 = smul.u32 2, %s24
        %p4136 = scmp.lt.s32.totalorder %s4135, 5
        %s4137 = scalar_select %p4136, %s4135, 5
        %s4138 = smul.addr %s4137, 8
        %s4139 = scalar_lea.vmem %s11, %s4138
      $region80: #{vae_forward.1} parent=71 // pred_fallthru
        _
    $region72: #{vae_forward.1} parent=5 // pred_fallthru
      _
  $region6: #{vae_forward.1} parent=0 // loop_footer
    %s22 = sadd.s32 1, %s18
  $region7: #{vae_forward.1} parent=0 // loop_footer_branch
    %17 = sbr.rel target = $region3
  $region8: #{vae_forward.1} parent=0 // loop_exit
    _

</llo_original>
